<compile_context>
chip_gen: v7x
topology: tpu7x:2x2x1
jax: 0.10.0
libtpu: 0.0.40
codegen_flags: <defaults>
</compile_context>

<pallas_src>
import functools

import jax
import jax.numpy as jnp
from jax import lax
from jax.experimental import pallas as pl
from jax.experimental.pallas import tpu as pltpu


# ---------------------------------------------------------------------------
# Pass 1: per-tap first / second moments of the zero-padded input.
# ---------------------------------------------------------------------------
def bn_tap_stats_kernel(x_ref, out_ref, *, length, ksize, time_block):
    """x_ref: (L+2*pad, row_tile) f32; out_ref: (K + K*(K+1)//2, row_tile).

    Row k of the output accumulates sum_t x[t+k]; rows K.. accumulate
    sum_t x[t+k]*x[t+k'] for k <= k'.  Lane-wise partial sums are reduced to
    scalars in the wrapper (so zero-padded rows contribute exactly zero).
    """
    n_pairs = ksize * (ksize + 1) // 2

    @pl.when(pl.program_id(0) == 0)
    def _init():
        out_ref[...] = jnp.zeros_like(out_ref)

    r = x_ref.shape[1]
    acc1 = [jnp.zeros((1, r), jnp.float32) for _ in range(ksize)]
    acc2 = [jnp.zeros((1, r), jnp.float32) for _ in range(n_pairs)]

    # Static time blocking bounds the live vregs for long sequences.
    for t0 in range(0, length, time_block):
        tb = min(time_block, length - t0)
        taps = [x_ref[t0 + k:t0 + k + tb, :] for k in range(ksize)]
        for k in range(ksize):
            acc1[k] = acc1[k] + jnp.sum(taps[k], axis=0, keepdims=True)
        p = 0
        for k in range(ksize):
            for kp in range(k, ksize):
                acc2[p] = acc2[p] + jnp.sum(taps[k] * taps[kp], axis=0,
                                            keepdims=True)
                p += 1

    for k in range(ksize):
        out_ref[k:k + 1, :] += acc1[k]
    for p in range(n_pairs):
        out_ref[ksize + p:ksize + p + 1, :] += acc2[p]


# ---------------------------------------------------------------------------
# Pass 2: fused conv+BN+encoder-spike, GRU gates and recurrent snn.Leaky.
# ---------------------------------------------------------------------------
def snn_gru_kernel(x_ref, a_ref, benc_ref, wg_ref, brzn_ref, bhhn_ref,
                   out_ref, *, hidden, length, tc, ksize,
                   num_steps, beta, threshold):
    """Row tile worth of the full recurrent forward.

    x_ref   : (L+2*pad, row_tile) f32    zero-padded inputs, rows on lanes
    a_ref   : (tc*H, tc+2*pad)    f32    banded conv (BN folded) weights
    benc_ref: (tc*H, row_tile)    f32    folded conv bias, tiled over t
    wg_ref  : (3H, H)             bf16   fused r/z/n gate weights (matmul LHS)
    brzn_ref: (3H, row_tile)      f32    gate biases (b_ih + b_hh for r/z)
    bhhn_ref: (H, row_tile)       f32    hh-bias of the n gate (gated by r)
    out_ref : (num_steps, H, row_tile)   last-timestep spikes
    """
    f32 = jnp.float32
    h = hidden
    pad = ksize // 2
    win = tc + 2 * pad
    r_tile = x_ref.shape[1]
    n_chunks = length // tc

    def process_chunk(c, mem, spk, emit):
        t0 = c * tc
        x_win = x_ref[pl.ds(t0, win), :]                       # (win, R)
        # Banded conv matmul: rows are (t, h) pairs -> row tile stays on lanes.
        enc = jnp.dot(a_ref[...], x_win,
                      preferred_element_type=f32) + benc_ref[...]
        # Encoder snn.Leaky after reset: mem = enc, spk = (enc - thr > 0).
        spk_enc = (enc > threshold).astype(jnp.bfloat16)       # (tc*H, R)

        for t in range(tc):                                    # tc is small
            s_t = spk_enc[t * h:(t + 1) * h, :]                # (H, R) bf16
            # One fused bf16 MXU matmul for all three gates of this timestep.
            y = jnp.dot(wg_ref[...], s_t,
                        preferred_element_type=f32) + brzn_ref[...]
            rg = (y[0:h, :] >= 0.0).astype(f32)                # ATan fwd
            zg = (y[h:2 * h, :] >= 0.0).astype(f32)
            ng = (y[2 * h:3 * h, :] + rg * bhhn_ref[...] >= 0.0).astype(f32)
            cur = (1.0 - zg) * ng                              # h_prev == 0

            for s in range(num_steps):                         # static unroll
                mem = beta * mem + cur - spk * threshold
                spk = (mem > threshold).astype(f32)
                if emit and t == tc - 1:
                    # Stream the epilogue stores (only the module's last
                    # timestep produces the returned spikes).
                    out_ref[s] = spk
        return mem, spk

    mem0 = jnp.zeros((h, r_tile), f32)
    spk0 = jnp.zeros((h, r_tile), f32)

    # All chunks except the last just advance the membrane / spike state.
    mem, spk = lax.fori_loop(
        0, n_chunks - 1,
        lambda c, ms: process_chunk(c, ms[0], ms[1], emit=False),
        (mem0, spk0))
    # Last chunk also writes the output.
    process_chunk(n_chunks - 1, mem, spk, emit=True)


# ---------------------------------------------------------------------------
# Wrapper
# ---------------------------------------------------------------------------
def itssnngru2d_forward(x, params, *, hidden, num_steps, ksize=3,
                        beta=0.99, threshold=1.0, bn_eps=1e-5):
    """x: (bs, length, c_num) float32.  Returns (spks, spks) like the module."""
    f32 = jnp.float32
    bs, length, c_num = x.shape
    h = hidden
    k = ksize
    pad = k // 2
    n_rows = bs * c_num
    l_pad = length + 2 * pad

    # Time chunk (divides length; small so the banded conv waste stays tiny).
    tc = max(d for d in range(1, min(length, 8) + 1) if length % d == 0)
    win = tc + 2 * pad

    # Row tiling: lane-dense (multiple of 128) tiles when the row count allows,
    # >= 2 tiles so v7x's two TensorCores both get work; small inputs use a
    # single full-width tile.
    if n_rows % 128 == 0 and n_rows >= 256:
        row_tile = 256 if (n_rows % 256 == 0 and n_rows >= 512) else 128
        nr_pad = n_rows
    elif n_rows > 256:
        row_tile = 128
        nr_pad = ((n_rows + 127) // 128) * 128   # zero rows, discarded later
    else:
        row_tile = n_rows
        nr_pad = n_rows
    n_tiles = nr_pad // row_tile

    # Time-major, rows-on-lanes layout: x_t[t, b*c_num + c] = x[b, t, c].
    x_t = jnp.transpose(x.astype(f32), (1, 0, 2)).reshape(length, n_rows)
    x_pad = jnp.pad(x_t, ((pad, pad), (0, nr_pad - n_rows)))    # (l_pad, nr_pad)

    x_spec = pl.BlockSpec((l_pad, row_tile), lambda i: (0, i))

    # ---- Pass 1: tap moments -> training-mode BatchNorm statistics ---------
    n_pairs = k * (k + 1) // 2
    stat_rows = k + n_pairs
    stats = pl.pallas_call(
        functools.partial(bn_tap_stats_kernel, length=length, ksize=k,
                          time_block=min(length, 128)),
        out_shape=jax.ShapeDtypeStruct((stat_rows, row_tile), f32),
        grid=(n_tiles,),
        in_specs=[x_spec],
        out_specs=pl.BlockSpec((stat_rows, row_tile), lambda i: (0, 0)),
        compiler_params=pltpu.CompilerParams(
            dimension_semantics=("arbitrary",)),
    )(x_pad)

    count = float(n_rows * length)     # padded (zero) rows do not contribute
    mu = jnp.sum(stats[:k], axis=1) / count                      # (K,)
    pair = jnp.sum(stats[k:], axis=1) / count                    # (n_pairs,)
    m2 = jnp.zeros((k, k), f32)
    p = 0
    for a in range(k):
        for b in range(a, k):
            m2 = m2.at[a, b].set(pair[p])
            m2 = m2.at[b, a].set(pair[p])
            p += 1
    cov = m2 - jnp.outer(mu, mu)

    conv_w = params["conv_w"].reshape(h, k).astype(f32)
    conv_b = params["conv_b"].reshape(h).astype(f32)
    gamma = params["bn_gamma"].reshape(h).astype(f32)
    beta_bn = params["bn_beta"].reshape(h).astype(f32)

    mean_c = conv_w @ mu + conv_b                                # (H,)
    var_c = jnp.maximum(jnp.einsum("hk,kl,hl->h", conv_w, cov, conv_w), 0.0)
    scale = gamma * lax.rsqrt(var_c + bn_eps)
    w_eff = conv_w * scale[:, None]                              # fold BN
    b_eff = (conv_b - mean_c) * scale + beta_bn

    # Banded conv matrix: A[t*H + hh, t + kk] = w_eff[hh, kk].
    a_mat = jnp.zeros((tc * h, win), f32)
    for t in range(tc):
        a_mat = a_mat.at[t * h:(t + 1) * h, t:t + k].set(w_eff)
    b_enc = jnp.broadcast_to(jnp.tile(b_eff, (tc,))[:, None], (tc * h, row_tile))

    # Fused gate params (torch linear: y = x @ W^T + b  ->  here y^T = W @ x^T).
    w_ih = params["w_ih"].astype(f32)                            # (3H, H)
    b_ih = params["b_ih"].astype(f32)
    b_hh = params["b_hh"].astype(f32)
    wg = w_ih.astype(jnp.bfloat16)                               # bf16 MXU
    b_rzn = jnp.concatenate([b_ih[:2 * h] + b_hh[:2 * h], b_ih[2 * h:]])
    b_rzn = jnp.broadcast_to(b_rzn[:, None], (3 * h, row_tile))
    b_hhn = jnp.broadcast_to(b_hh[2 * h:][:, None], (h, row_tile))

    # VMEM budget (kept well inside v7x's 64 MiB; default scoped limit is 32 MiB).
    vmem_est = 4 * (2 * l_pad * row_tile + 2 * num_steps * h * row_tile
                    + tc * h * win + 3 * tc * h * row_tile
                    + 4 * h * row_tile) + 2 * 3 * h * h
    vmem_limit = int(min(max(2 * vmem_est, 32 * 1024 * 1024), 48 * 1024 * 1024))

    n_chunks = length // tc
    flops = (2 * n_tiles * n_chunks * (tc * h) * win * row_tile        # conv
             + 2 * n_tiles * length * 3 * h * h * row_tile             # gates
             + 4 * n_tiles * length * num_steps * h * row_tile)        # LIF
    bytes_accessed = 4 * (l_pad * nr_pad + num_steps * h * nr_pad
                          + tc * h * (win + row_tile)
                          + 4 * h * row_tile) + 2 * 3 * h * h

    out = pl.pallas_call(
        functools.partial(snn_gru_kernel, hidden=h, length=length, tc=tc,
                          ksize=k, num_steps=num_steps, beta=beta,
                          threshold=threshold),
        out_shape=jax.ShapeDtypeStruct((num_steps, h, nr_pad), f32),
        grid=(n_tiles,),
        in_specs=[
            x_spec,
            pl.BlockSpec((tc * h, win), lambda i: (0, 0)),
            pl.BlockSpec((tc * h, row_tile), lambda i: (0, 0)),
            pl.BlockSpec((3 * h, h), lambda i: (0, 0)),
            pl.BlockSpec((3 * h, row_tile), lambda i: (0, 0)),
            pl.BlockSpec((h, row_tile), lambda i: (0, 0)),
        ],
        out_specs=pl.BlockSpec((num_steps, h, row_tile), lambda i: (0, 0, i)),
        compiler_params=pltpu.CompilerParams(
            dimension_semantics=("parallel",),
            vmem_limit_bytes=vmem_limit),
        cost_estimate=pl.CostEstimate(flops=int(flops), transcendentals=0,
                                      bytes_accessed=int(bytes_accessed)),
    )(x_pad, a_mat, b_enc, wg, b_rzn, b_hhn)

    # (S, H, N) -> (N, H, S) == torch.stack(dim=-1), then the module reshapes.
    # TODO(synk): this transpose keeps torch's exact h*S+s feature ordering and
    # costs one extra HBM pass over the (small) output.
    spks = jnp.transpose(out[:, :, :n_rows], (2, 1, 0)).reshape(
        bs, c_num, h * num_steps)
    return spks, spks


def init_params(key, hidden, ksize=3):
    hh, h3 = hidden, 3 * hidden
    k1, k2, k3, k4, k5, k6 = jax.random.split(key, 6)
    return {
        "conv_w": jax.random.normal(k1, (hh, 1, 1, ksize), jnp.float32) * 0.5,
        "conv_b": jax.random.normal(k2, (hh,), jnp.float32) * 0.1,
        "bn_gamma": jnp.ones((hh,), jnp.float32),   # BatchNorm2d default init
        "bn_beta": jnp.zeros((hh,), jnp.float32),
        "w_ih": jax.random.normal(k3, (h3, hh), jnp.float32) / jnp.sqrt(hh),
        "b_ih": jax.random.normal(k4, (h3,), jnp.float32) * 0.1,
        # W_hh only multiplies a zero hidden state in this forward; unused.
        "w_hh": jax.random.normal(k5, (h3, hh), jnp.float32) / jnp.sqrt(hh),
        "b_hh": jax.random.normal(k6, (h3,), jnp.float32) * 0.1,
    }


if __name__ == "__main__":
    bs, length, c_num = 2, 8, 4
    hidden, num_steps = 32, 4

    key = jax.random.PRNGKey(0)
    kx, kp = jax.random.split(key)
    x = jax.random.normal(kx, (bs, length, c_num), jnp.float32)
    params = init_params(kp, hidden)

    fwd = jax.jit(functools.partial(itssnngru2d_forward,
                                    hidden=hidden, num_steps=num_steps))
    spks, spks2 = fwd(x, params)
    jax.block_until_ready((spks, spks2))
    assert spks.shape == (bs, c_num, hidden * num_steps)
    assert bool(jnp.all((spks == 0.0) | (spks == 1.0)))
    print("KERNEL_OK")
</pallas_src>

<mosaic_0001>
module attributes {stable_mosaic.version = 11 : i64} {
  func.func @bn_tap_stats_kernel(%arg0: i32, %arg1: memref<10x8xf32, #tpu.memory_space<vmem>>, %arg2: memref<9x8xf32, #tpu.memory_space<vmem>>) attributes {dimension_semantics = [#tpu.dimension_semantics<arbitrary>], iteration_bounds = array<i64: 1>, scalar_prefetch = 0 : i64, scratch_operands = 0 : i64, tpu.core_type = #tpu.core_type<tc>, window_params = [{transform_indices = @transform_0, window_bounds = array<i64: 10, 8>}, {pipeline_mode = #tpu.pipeline_mode<synchronous>, transform_indices = @transform_1, window_bounds = array<i64: 9, 8>}]} {
    %c0_i32 = arith.constant 0 : i32
    %0 = arith.cmpi eq, %arg0, %c0_i32 : i32
    %1 = arith.extui %0 : i1 to i32
    %c0_i32_0 = arith.constant 0 : i32
    %2 = arith.cmpi ne, %1, %c0_i32_0 : i32
    scf.if %2 {
      %cst_51 = arith.constant 0.000000e+00 : f32
      %75 = vector.broadcast %cst_51 : f32 to vector<9x8xf32>
      %c0_52 = arith.constant 0 : index
      %c0_53 = arith.constant 0 : index
      %76 = vector.load %arg2[%c0_52, %c0_53] : memref<9x8xf32, #tpu.memory_space<vmem>>, vector<9x8xf32>
      tpu.vector_store %arg2[%c0_52, %c0_53], %75 {strides = array<i32>} : memref<9x8xf32, #tpu.memory_space<vmem>>, vector<9x8xf32>,
    } else {
    }
    %cst = arith.constant 0.000000e+00 : f32
    %3 = vector.broadcast %cst : f32 to vector<1x8xf32>
    %cst_1 = arith.constant 0.000000e+00 : f32
    %4 = vector.broadcast %cst_1 : f32 to vector<1x8xf32>
    %cst_2 = arith.constant 0.000000e+00 : f32
    %5 = vector.broadcast %cst_2 : f32 to vector<1x8xf32>
    %cst_3 = arith.constant 0.000000e+00 : f32
    %6 = vector.broadcast %cst_3 : f32 to vector<1x8xf32>
    %cst_4 = arith.constant 0.000000e+00 : f32
    %7 = vector.broadcast %cst_4 : f32 to vector<1x8xf32>
    %cst_5 = arith.constant 0.000000e+00 : f32
    %8 = vector.broadcast %cst_5 : f32 to vector<1x8xf32>
    %cst_6 = arith.constant 0.000000e+00 : f32
    %9 = vector.broadcast %cst_6 : f32 to vector<1x8xf32>
    %cst_7 = arith.constant 0.000000e+00 : f32
    %10 = vector.broadcast %cst_7 : f32 to vector<1x8xf32>
    %cst_8 = arith.constant 0.000000e+00 : f32
    %11 = vector.broadcast %cst_8 : f32 to vector<1x8xf32>
    %c0 = arith.constant 0 : index
    %c0_9 = arith.constant 0 : index
    %12 = vector.load %arg1[%c0, %c0_9] : memref<10x8xf32, #tpu.memory_space<vmem>>, vector<8x8xf32>
    %c1 = arith.constant 1 : index
    %c0_10 = arith.constant 0 : index
    %13 = vector.load %arg1[%c1, %c0_10] : memref<10x8xf32, #tpu.memory_space<vmem>>, vector<8x8xf32>
    %c2 = arith.constant 2 : index
    %c0_11 = arith.constant 0 : index
    %14 = vector.load %arg1[%c2, %c0_11] : memref<10x8xf32, #tpu.memory_space<vmem>>, vector<8x8xf32>
    %cst_12 = arith.constant dense<0.000000e+00> : vector<8xf32>
    %15 = vector.multi_reduction <add>, %12, %cst_12 [0] : vector<8x8xf32> to vector<8xf32>
    %16 = vector.shape_cast %15 : vector<8xf32> to vector<1x8xf32>
    %17 = arith.addf %3, %16 : vector<1x8xf32>
    %cst_13 = arith.constant dense<0.000000e+00> : vector<8xf32>
    %18 = vector.multi_reduction <add>, %13, %cst_13 [0] : vector<8x8xf32> to vector<8xf32>
    %19 = vector.shape_cast %18 : vector<8xf32> to vector<1x8xf32>
    %20 = arith.addf %4, %19 : vector<1x8xf32>
    %cst_14 = arith.constant dense<0.000000e+00> : vector<8xf32>
    %21 = vector.multi_reduction <add>, %14, %cst_14 [0] : vector<8x8xf32> to vector<8xf32>
    %22 = vector.shape_cast %21 : vector<8xf32> to vector<1x8xf32>
    %23 = arith.addf %5, %22 : vector<1x8xf32>
    %24 = arith.mulf %12, %12 : vector<8x8xf32>
    %cst_15 = arith.constant dense<0.000000e+00> : vector<8xf32>
    %25 = vector.multi_reduction <add>, %24, %cst_15 [0] : vector<8x8xf32> to vector<8xf32>
    %26 = vector.shape_cast %25 : vector<8xf32> to vector<1x8xf32>
    %27 = arith.addf %6, %26 : vector<1x8xf32>
    %28 = arith.mulf %12, %13 : vector<8x8xf32>
    %cst_16 = arith.constant dense<0.000000e+00> : vector<8xf32>
    %29 = vector.multi_reduction <add>, %28, %cst_16 [0] : vector<8x8xf32> to vector<8xf32>
    %30 = vector.shape_cast %29 : vector<8xf32> to vector<1x8xf32>
    %31 = arith.addf %7, %30 : vector<1x8xf32>
    %32 = arith.mulf %12, %14 : vector<8x8xf32>
    %cst_17 = arith.constant dense<0.000000e+00> : vector<8xf32>
    %33 = vector.multi_reduction <add>, %32, %cst_17 [0] : vector<8x8xf32> to vector<8xf32>
    %34 = vector.shape_cast %33 : vector<8xf32> to vector<1x8xf32>
    %35 = arith.addf %8, %34 : vector<1x8xf32>
    %36 = arith.mulf %13, %13 : vector<8x8xf32>
    %cst_18 = arith.constant dense<0.000000e+00> : vector<8xf32>
    %37 = vector.multi_reduction <add>, %36, %cst_18 [0] : vector<8x8xf32> to vector<8xf32>
    %38 = vector.shape_cast %37 : vector<8xf32> to vector<1x8xf32>
    %39 = arith.addf %9, %38 : vector<1x8xf32>
    %40 = arith.mulf %13, %14 : vector<8x8xf32>
    %cst_19 = arith.constant dense<0.000000e+00> : vector<8xf32>
    %41 = vector.multi_reduction <add>, %40, %cst_19 [0] : vector<8x8xf32> to vector<8xf32>
    %42 = vector.shape_cast %41 : vector<8xf32> to vector<1x8xf32>
    %43 = arith.addf %10, %42 : vector<1x8xf32>
    %44 = arith.mulf %14, %14 : vector<8x8xf32>
    %cst_20 = arith.constant dense<0.000000e+00> : vector<8xf32>
    %45 = vector.multi_reduction <add>, %44, %cst_20 [0] : vector<8x8xf32> to vector<8xf32>
    %46 = vector.shape_cast %45 : vector<8xf32> to vector<1x8xf32>
    %47 = arith.addf %11, %46 : vector<1x8xf32>
    %c0_21 = arith.constant 0 : index
    %c0_22 = arith.constant 0 : index
    %48 = vector.load %arg2[%c0_21, %c0_22] : memref<9x8xf32, #tpu.memory_space<vmem>>, vector<1x8xf32>
    %49 = arith.addf %48, %17 : vector<1x8xf32>
    %c0_23 = arith.constant 0 : index
    %c0_24 = arith.constant 0 : index
    %50 = vector.load %arg2[%c0_23, %c0_24] : memref<9x8xf32, #tpu.memory_space<vmem>>, vector<1x8xf32>
    tpu.vector_store %arg2[%c0_23, %c0_24], %49 {strides = array<i32>} : memref<9x8xf32, #tpu.memory_space<vmem>>, vector<1x8xf32>,
    %c1_25 = arith.constant 1 : index
    %c0_26 = arith.constant 0 : index
    %51 = vector.load %arg2[%c1_25, %c0_26] : memref<9x8xf32, #tpu.memory_space<vmem>>, vector<1x8xf32>
    %52 = arith.addf %51, %20 : vector<1x8xf32>
    %c1_27 = arith.constant 1 : index
    %c0_28 = arith.constant 0 : index
    %53 = vector.load %arg2[%c1_27, %c0_28] : memref<9x8xf32, #tpu.memory_space<vmem>>, vector<1x8xf32>
    tpu.vector_store %arg2[%c1_27, %c0_28], %52 {strides = array<i32>} : memref<9x8xf32, #tpu.memory_space<vmem>>, vector<1x8xf32>,
    %c2_29 = arith.constant 2 : index
    %c0_30 = arith.constant 0 : index
    %54 = vector.load %arg2[%c2_29, %c0_30] : memref<9x8xf32, #tpu.memory_space<vmem>>, vector<1x8xf32>
    %55 = arith.addf %54, %23 : vector<1x8xf32>
    %c2_31 = arith.constant 2 : index
    %c0_32 = arith.constant 0 : index
    %56 = vector.load %arg2[%c2_31, %c0_32] : memref<9x8xf32, #tpu.memory_space<vmem>>, vector<1x8xf32>
    tpu.vector_store %arg2[%c2_31, %c0_32], %55 {strides = array<i32>} : memref<9x8xf32, #tpu.memory_space<vmem>>, vector<1x8xf32>,
    %c3 = arith.constant 3 : index
    %c0_33 = arith.constant 0 : index
    %57 = vector.load %arg2[%c3, %c0_33] : memref<9x8xf32, #tpu.memory_space<vmem>>, vector<1x8xf32>
    %58 = arith.addf %57, %27 : vector<1x8xf32>
    %c3_34 = arith.constant 3 : index
    %c0_35 = arith.constant 0 : index
    %59 = vector.load %arg2[%c3_34, %c0_35] : memref<9x8xf32, #tpu.memory_space<vmem>>, vector<1x8xf32>
    tpu.vector_store %arg2[%c3_34, %c0_35], %58 {strides = array<i32>} : memref<9x8xf32, #tpu.memory_space<vmem>>, vector<1x8xf32>,
    %c4 = arith.constant 4 : index
    %c0_36 = arith.constant 0 : index
    %60 = vector.load %arg2[%c4, %c0_36] : memref<9x8xf32, #tpu.memory_space<vmem>>, vector<1x8xf32>
    %61 = arith.addf %60, %31 : vector<1x8xf32>
    %c4_37 = arith.constant 4 : index
    %c0_38 = arith.constant 0 : index
    %62 = vector.load %arg2[%c4_37, %c0_38] : memref<9x8xf32, #tpu.memory_space<vmem>>, vector<1x8xf32>
    tpu.vector_store %arg2[%c4_37, %c0_38], %61 {strides = array<i32>} : memref<9x8xf32, #tpu.memory_space<vmem>>, vector<1x8xf32>,
    %c5 = arith.constant 5 : index
    %c0_39 = arith.constant 0 : index
    %63 = vector.load %arg2[%c5, %c0_39] : memref<9x8xf32, #tpu.memory_space<vmem>>, vector<1x8xf32>
    %64 = arith.addf %63, %35 : vector<1x8xf32>
    %c5_40 = arith.constant 5 : index
    %c0_41 = arith.constant 0 : index
    %65 = vector.load %arg2[%c5_40, %c0_41] : memref<9x8xf32, #tpu.memory_space<vmem>>, vector<1x8xf32>
    tpu.vector_store %arg2[%c5_40, %c0_41], %64 {strides = array<i32>} : memref<9x8xf32, #tpu.memory_space<vmem>>, vector<1x8xf32>,
    %c6 = arith.constant 6 : index
    %c0_42 = arith.constant 0 : index
    %66 = vector.load %arg2[%c6, %c0_42] : memref<9x8xf32, #tpu.memory_space<vmem>>, vector<1x8xf32>
    %67 = arith.addf %66, %39 : vector<1x8xf32>
    %c6_43 = arith.constant 6 : index
    %c0_44 = arith.constant 0 : index
    %68 = vector.load %arg2[%c6_43, %c0_44] : memref<9x8xf32, #tpu.memory_space<vmem>>, vector<1x8xf32>
    tpu.vector_store %arg2[%c6_43, %c0_44], %67 {strides = array<i32>} : memref<9x8xf32, #tpu.memory_space<vmem>>, vector<1x8xf32>,
    %c7 = arith.constant 7 : index
    %c0_45 = arith.constant 0 : index
    %69 = vector.load %arg2[%c7, %c0_45] : memref<9x8xf32, #tpu.memory_space<vmem>>, vector<1x8xf32>
    %70 = arith.addf %69, %43 : vector<1x8xf32>
    %c7_46 = arith.constant 7 : index
    %c0_47 = arith.constant 0 : index
    %71 = vector.load %arg2[%c7_46, %c0_47] : memref<9x8xf32, #tpu.memory_space<vmem>>, vector<1x8xf32>
    tpu.vector_store %arg2[%c7_46, %c0_47], %70 {strides = array<i32>} : memref<9x8xf32, #tpu.memory_space<vmem>>, vector<1x8xf32>,
    %c8 = arith.constant 8 : index
    %c0_48 = arith.constant 0 : index
    %72 = vector.load %arg2[%c8, %c0_48] : memref<9x8xf32, #tpu.memory_space<vmem>>, vector<1x8xf32>
    %73 = arith.addf %72, %47 : vector<1x8xf32>
    %c8_49 = arith.constant 8 : index
    %c0_50 = arith.constant 0 : index
    %74 = vector.load %arg2[%c8_49, %c0_50] : memref<9x8xf32, #tpu.memory_space<vmem>>, vector<1x8xf32>
    tpu.vector_store %arg2[%c8_49, %c0_50], %73 {strides = array<i32>} : memref<9x8xf32, #tpu.memory_space<vmem>>, vector<1x8xf32>,
    return
  }
  func.func @transform_0(%arg0: i32) -> (i32, i32) {
    %c0_i32 = arith.constant 0 : i32
    %c0_i32_0 = arith.constant 0 : i32
    return %c0_i32, %arg0 : i32, i32
  }
  func.func @transform_1(%arg0: i32) -> (i32, i32) {
    %c0_i32 = arith.constant 0 : i32
    %c0_i32_0 = arith.constant 0 : i32
    %c0_i32_1 = arith.constant 0 : i32
    return %c0_i32, %c0_i32_0 : i32, i32
  }
}

module attributes {stable_mosaic.version = 11 : i64} {
  func.func @snn_gru_kernel(%arg0: i32, %arg1: memref<10x8xf32, #tpu.memory_space<vmem>>, %arg2: memref<256x10xf32, #tpu.memory_space<vmem>>, %arg3: memref<256x8xf32, #tpu.memory_space<vmem>>, %arg4: memref<96x32xbf16, #tpu.memory_space<vmem>>, %arg5: memref<96x8xf32, #tpu.memory_space<vmem>>, %arg6: memref<32x8xf32, #tpu.memory_space<vmem>>, %arg7: memref<4x32x8xf32, #tpu.memory_space<vmem>>) attributes {dimension_semantics = [#tpu.dimension_semantics<parallel>], iteration_bounds = array<i64: 1>, scalar_prefetch = 0 : i64, scratch_operands = 0 : i64, tpu.core_type = #tpu.core_type<tc>, window_params = [{transform_indices = @transform_0, window_bounds = array<i64: 10, 8>}, {pipeline_mode = #tpu.pipeline_mode<synchronous>, transform_indices = @transform_1, window_bounds = array<i64: 256, 10>}, {pipeline_mode = #tpu.pipeline_mode<synchronous>, transform_indices = @transform_2, window_bounds = array<i64: 256, 8>}, {pipeline_mode = #tpu.pipeline_mode<synchronous>, transform_indices = @transform_3, window_bounds = array<i64: 96, 32>}, {pipeline_mode = #tpu.pipeline_mode<synchronous>, transform_indices = @transform_4, window_bounds = array<i64: 96, 8>}, {pipeline_mode = #tpu.pipeline_mode<synchronous>, transform_indices = @transform_5, window_bounds = array<i64: 32, 8>}, {transform_indices = @transform_6, window_bounds = array<i64: 4, 32, 8>}]} {
    %cst = arith.constant 0.000000e+00 : f32
    %0 = vector.broadcast %cst : f32 to vector<32x8xf32>
    %cst_0 = arith.constant 0.000000e+00 : f32
    %1 = vector.broadcast %cst_0 : f32 to vector<32x8xf32>
    %c0_i32 = arith.constant 0 : i32
    %c0_i32_1 = arith.constant 0 : i32
    %2 = arith.addi %c0_i32, %c0_i32_1 : i32
    %c1_i32 = arith.constant 1 : i32
    %3:2 = scf.for %arg8 = %c0_i32 to %2 step %c1_i32 iter_args(%arg9 = %0, %arg10 = %1) -> (vector<32x8xf32>, vector<32x8xf32>)  : i32 {
      %c8_i32 = arith.constant 8 : i32
      %554 = arith.muli %arg8, %c8_i32 : i32
      %555 = arith.index_cast %554 : i32 to index
      %c0_203 = arith.constant 0 : index
      %556 = vector.load %arg1[%555, %c0_203] : memref<10x8xf32, #tpu.memory_space<vmem>>, vector<10x8xf32>
      %c0_204 = arith.constant 0 : index
      %c0_205 = arith.constant 0 : index
      %557 = vector.load %arg2[%c0_204, %c0_205] : memref<256x10xf32, #tpu.memory_space<vmem>>, vector<256x10xf32>
      %cst_206 = arith.constant dense<0.000000e+00> : vector<256x8xf32>
      %558 = tpu.matmul %557, %556, %cst_206 {dimension_numbers = #tpu.dot_dimension_numbers<[1], [0], [0], [1], [0, 0, 1, 1], [], []>} : vector<256x10xf32>, vector<10x8xf32>, vector<256x8xf32> -> vector<256x8xf32>
      %c0_207 = arith.constant 0 : index
      %c0_208 = arith.constant 0 : index
      %559 = vector.load %arg3[%c0_207, %c0_208] : memref<256x8xf32, #tpu.memory_space<vmem>>, vector<256x8xf32>
      %560 = arith.addf %558, %559 : vector<256x8xf32>
      %cst_209 = arith.constant 1.000000e+00 : f32
      %561 = vector.broadcast %cst_209 : f32 to vector<256x8xf32>
      %562 = arith.cmpf ogt, %560, %561 : vector<256x8xf32>
      %563 = arith.extui %562 : vector<256x8xi1> to vector<256x8xi32>
      %564 = arith.sitofp %563 : vector<256x8xi32> to vector<256x8xf32>
      %565 = arith.truncf %564 : vector<256x8xf32> to vector<256x8xbf16>
      %566 = vector.extract_strided_slice %565 {offsets = [0, 0], sizes = [32, 8], strides = [1, 1]} : vector<256x8xbf16> to vector<32x8xbf16>
      %c0_210 = arith.constant 0 : index
      %c0_211 = arith.constant 0 : index
      %567 = vector.load %arg4[%c0_210, %c0_211] : memref<96x32xbf16, #tpu.memory_space<vmem>>, vector<96x32xbf16>
      %cst_212 = arith.constant dense<0.000000e+00> : vector<96x8xf32>
      %568 = tpu.matmul %567, %566, %cst_212 {dimension_numbers = #tpu.dot_dimension_numbers<[1], [0], [0], [1], [0, 0, 1, 1], [], []>} : vector<96x32xbf16>, vector<32x8xbf16>, vector<96x8xf32> -> vector<96x8xf32>
      %c0_213 = arith.constant 0 : index
      %c0_214 = arith.constant 0 : index
      %569 = vector.load %arg5[%c0_213, %c0_214] : memref<96x8xf32, #tpu.memory_space<vmem>>, vector<96x8xf32>
      %570 = arith.addf %568, %569 : vector<96x8xf32>
      %571 = vector.extract_strided_slice %570 {offsets = [0, 0], sizes = [32, 8], strides = [1, 1]} : vector<96x8xf32> to vector<32x8xf32>
      %cst_215 = arith.constant 0.000000e+00 : f32
      %572 = vector.broadcast %cst_215 : f32 to vector<32x8xf32>
      %573 = arith.cmpf oge, %571, %572 : vector<32x8xf32>
      %574 = arith.extui %573 : vector<32x8xi1> to vector<32x8xi32>
      %575 = arith.sitofp %574 : vector<32x8xi32> to vector<32x8xf32>
      %576 = vector.extract_strided_slice %570 {offsets = [32, 0], sizes = [32, 8], strides = [1, 1]} : vector<96x8xf32> to vector<32x8xf32>
      %cst_216 = arith.constant 0.000000e+00 : f32
      %577 = vector.broadcast %cst_216 : f32 to vector<32x8xf32>
      %578 = arith.cmpf oge, %576, %577 : vector<32x8xf32>
      %579 = arith.extui %578 : vector<32x8xi1> to vector<32x8xi32>
      %580 = arith.sitofp %579 : vector<32x8xi32> to vector<32x8xf32>
      %581 = vector.extract_strided_slice %570 {offsets = [64, 0], sizes = [32, 8], strides = [1, 1]} : vector<96x8xf32> to vector<32x8xf32>
      %c0_217 = arith.constant 0 : index
      %c0_218 = arith.constant 0 : index
      %582 = vector.load %arg6[%c0_217, %c0_218] : memref<32x8xf32, #tpu.memory_space<vmem>>, vector<32x8xf32>
      %583 = arith.mulf %575, %582 : vector<32x8xf32>
      %584 = arith.addf %581, %583 : vector<32x8xf32>
      %cst_219 = arith.constant 0.000000e+00 : f32
      %585 = vector.broadcast %cst_219 : f32 to vector<32x8xf32>
      %586 = arith.cmpf oge, %584, %585 : vector<32x8xf32>
      %587 = arith.extui %586 : vector<32x8xi1> to vector<32x8xi32>
      %588 = arith.sitofp %587 : vector<32x8xi32> to vector<32x8xf32>
      %cst_220 = arith.constant 1.000000e+00 : f32
      %589 = vector.broadcast %cst_220 : f32 to vector<32x8xf32>
      %590 = arith.subf %589, %580 : vector<32x8xf32>
      %591 = arith.mulf %590, %588 : vector<32x8xf32>
      %cst_221 = arith.constant 9.900000e-01 : f32
      %592 = vector.broadcast %cst_221 : f32 to vector<32x8xf32>
      %593 = arith.mulf %592, %arg9 : vector<32x8xf32>
      %594 = arith.addf %593, %591 : vector<32x8xf32>
      %cst_222 = arith.constant 1.000000e+00 : f32
      %595 = vector.broadcast %cst_222 : f32 to vector<32x8xf32>
      %596 = arith.mulf %arg10, %595 : vector<32x8xf32>
      %597 = arith.subf %594, %596 : vector<32x8xf32>
      %cst_223 = arith.constant 1.000000e+00 : f32
      %598 = vector.broadcast %cst_223 : f32 to vector<32x8xf32>
      %599 = arith.cmpf ogt, %597, %598 : vector<32x8xf32>
      %600 = arith.extui %599 : vector<32x8xi1> to vector<32x8xi32>
      %601 = arith.sitofp %600 : vector<32x8xi32> to vector<32x8xf32>
      %cst_224 = arith.constant 9.900000e-01 : f32
      %602 = vector.broadcast %cst_224 : f32 to vector<32x8xf32>
      %603 = arith.mulf %602, %597 : vector<32x8xf32>
      %604 = arith.addf %603, %591 : vector<32x8xf32>
      %cst_225 = arith.constant 1.000000e+00 : f32
      %605 = vector.broadcast %cst_225 : f32 to vector<32x8xf32>
      %606 = arith.mulf %601, %605 : vector<32x8xf32>
      %607 = arith.subf %604, %606 : vector<32x8xf32>
      %cst_226 = arith.constant 1.000000e+00 : f32
      %608 = vector.broadcast %cst_226 : f32 to vector<32x8xf32>
      %609 = arith.cmpf ogt, %607, %608 : vector<32x8xf32>
      %610 = arith.extui %609 : vector<32x8xi1> to vector<32x8xi32>
      %611 = arith.sitofp %610 : vector<32x8xi32> to vector<32x8xf32>
      %cst_227 = arith.constant 9.900000e-01 : f32
      %612 = vector.broadcast %cst_227 : f32 to vector<32x8xf32>
      %613 = arith.mulf %612, %607 : vector<32x8xf32>
      %614 = arith.addf %613, %591 : vector<32x8xf32>
      %cst_228 = arith.constant 1.000000e+00 : f32
      %615 = vector.broadcast %cst_228 : f32 to vector<32x8xf32>
      %616 = arith.mulf %611, %615 : vector<32x8xf32>
      %617 = arith.subf %614, %616 : vector<32x8xf32>
      %cst_229 = arith.constant 1.000000e+00 : f32
      %618 = vector.broadcast %cst_229 : f32 to vector<32x8xf32>
      %619 = arith.cmpf ogt, %617, %618 : vector<32x8xf32>
      %620 = arith.extui %619 : vector<32x8xi1> to vector<32x8xi32>
      %621 = arith.sitofp %620 : vector<32x8xi32> to vector<32x8xf32>
      %cst_230 = arith.constant 9.900000e-01 : f32
      %622 = vector.broadcast %cst_230 : f32 to vector<32x8xf32>
      %623 = arith.mulf %622, %617 : vector<32x8xf32>
      %624 = arith.addf %623, %591 : vector<32x8xf32>
      %cst_231 = arith.constant 1.000000e+00 : f32
      %625 = vector.broadcast %cst_231 : f32 to vector<32x8xf32>
      %626 = arith.mulf %621, %625 : vector<32x8xf32>
      %627 = arith.subf %624, %626 : vector<32x8xf32>
      %cst_232 = arith.constant 1.000000e+00 : f32
      %628 = vector.broadcast %cst_232 : f32 to vector<32x8xf32>
      %629 = arith.cmpf ogt, %627, %628 : vector<32x8xf32>
      %630 = arith.extui %629 : vector<32x8xi1> to vector<32x8xi32>
      %631 = arith.sitofp %630 : vector<32x8xi32> to vector<32x8xf32>
      %632 = vector.extract_strided_slice %565 {offsets = [32, 0], sizes = [32, 8], strides = [1, 1]} : vector<256x8xbf16> to vector<32x8xbf16>
      %c0_233 = arith.constant 0 : index
      %c0_234 = arith.constant 0 : index
      %633 = vector.load %arg4[%c0_233, %c0_234] : memref<96x32xbf16, #tpu.memory_space<vmem>>, vector<96x32xbf16>
      %cst_235 = arith.constant dense<0.000000e+00> : vector<96x8xf32>
      %634 = tpu.matmul %633, %632, %cst_235 {dimension_numbers = #tpu.dot_dimension_numbers<[1], [0], [0], [1], [0, 0, 1, 1], [], []>} : vector<96x32xbf16>, vector<32x8xbf16>, vector<96x8xf32> -> vector<96x8xf32>
      %c0_236 = arith.constant 0 : index
      %c0_237 = arith.constant 0 : index
      %635 = vector.load %arg5[%c0_236, %c0_237] : memref<96x8xf32, #tpu.memory_space<vmem>>, vector<96x8xf32>
      %636 = arith.addf %634, %635 : vector<96x8xf32>
      %637 = vector.extract_strided_slice %636 {offsets = [0, 0], sizes = [32, 8], strides = [1, 1]} : vector<96x8xf32> to vector<32x8xf32>
      %cst_238 = arith.constant 0.000000e+00 : f32
      %638 = vector.broadcast %cst_238 : f32 to vector<32x8xf32>
      %639 = arith.cmpf oge, %637, %638 : vector<32x8xf32>
      %640 = arith.extui %639 : vector<32x8xi1> to vector<32x8xi32>
      %641 = arith.sitofp %640 : vector<32x8xi32> to vector<32x8xf32>
      %642 = vector.extract_strided_slice %636 {offsets = [32, 0], sizes = [32, 8], strides = [1, 1]} : vector<96x8xf32> to vector<32x8xf32>
      %cst_239 = arith.constant 0.000000e+00 : f32
      %643 = vector.broadcast %cst_239 : f32 to vector<32x8xf32>
      %644 = arith.cmpf oge, %642, %643 : vector<32x8xf32>
      %645 = arith.extui %644 : vector<32x8xi1> to vector<32x8xi32>
      %646 = arith.sitofp %645 : vector<32x8xi32> to vector<32x8xf32>
      %647 = vector.extract_strided_slice %636 {offsets = [64, 0], sizes = [32, 8], strides = [1, 1]} : vector<96x8xf32> to vector<32x8xf32>
      %c0_240 = arith.constant 0 : index
      %c0_241 = arith.constant 0 : index
      %648 = vector.load %arg6[%c0_240, %c0_241] : memref<32x8xf32, #tpu.memory_space<vmem>>, vector<32x8xf32>
      %649 = arith.mulf %641, %648 : vector<32x8xf32>
      %650 = arith.addf %647, %649 : vector<32x8xf32>
      %cst_242 = arith.constant 0.000000e+00 : f32
      %651 = vector.broadcast %cst_242 : f32 to vector<32x8xf32>
      %652 = arith.cmpf oge, %650, %651 : vector<32x8xf32>
      %653 = arith.extui %652 : vector<32x8xi1> to vector<32x8xi32>
      %654 = arith.sitofp %653 : vector<32x8xi32> to vector<32x8xf32>
      %cst_243 = arith.constant 1.000000e+00 : f32
      %655 = vector.broadcast %cst_243 : f32 to vector<32x8xf32>
      %656 = arith.subf %655, %646 : vector<32x8xf32>
      %657 = arith.mulf %656, %654 : vector<32x8xf32>
      %cst_244 = arith.constant 9.900000e-01 : f32
      %658 = vector.broadcast %cst_244 : f32 to vector<32x8xf32>
      %659 = arith.mulf %658, %627 : vector<32x8xf32>
      %660 = arith.addf %659, %657 : vector<32x8xf32>
      %cst_245 = arith.constant 1.000000e+00 : f32
      %661 = vector.broadcast %cst_245 : f32 to vector<32x8xf32>
      %662 = arith.mulf %631, %661 : vector<32x8xf32>
      %663 = arith.subf %660, %662 : vector<32x8xf32>
      %cst_246 = arith.constant 1.000000e+00 : f32
      %664 = vector.broadcast %cst_246 : f32 to vector<32x8xf32>
      %665 = arith.cmpf ogt, %663, %664 : vector<32x8xf32>
      %666 = arith.extui %665 : vector<32x8xi1> to vector<32x8xi32>
      %667 = arith.sitofp %666 : vector<32x8xi32> to vector<32x8xf32>
      %cst_247 = arith.constant 9.900000e-01 : f32
      %668 = vector.broadcast %cst_247 : f32 to vector<32x8xf32>
      %669 = arith.mulf %668, %663 : vector<32x8xf32>
      %670 = arith.addf %669, %657 : vector<32x8xf32>
      %cst_248 = arith.constant 1.000000e+00 : f32
      %671 = vector.broadcast %cst_248 : f32 to vector<32x8xf32>
      %672 = arith.mulf %667, %671 : vector<32x8xf32>
      %673 = arith.subf %670, %672 : vector<32x8xf32>
      %cst_249 = arith.constant 1.000000e+00 : f32
      %674 = vector.broadcast %cst_249 : f32 to vector<32x8xf32>
      %675 = arith.cmpf ogt, %673, %674 : vector<32x8xf32>
      %676 = arith.extui %675 : vector<32x8xi1> to vector<32x8xi32>
      %677 = arith.sitofp %676 : vector<32x8xi32> to vector<32x8xf32>
      %cst_250 = arith.constant 9.900000e-01 : f32
      %678 = vector.broadcast %cst_250 : f32 to vector<32x8xf32>
      %679 = arith.mulf %678, %673 : vector<32x8xf32>
      %680 = arith.addf %679, %657 : vector<32x8xf32>
      %cst_251 = arith.constant 1.000000e+00 : f32
      %681 = vector.broadcast %cst_251 : f32 to vector<32x8xf32>
      %682 = arith.mulf %677, %681 : vector<32x8xf32>
      %683 = arith.subf %680, %682 : vector<32x8xf32>
      %cst_252 = arith.constant 1.000000e+00 : f32
      %684 = vector.broadcast %cst_252 : f32 to vector<32x8xf32>
      %685 = arith.cmpf ogt, %683, %684 : vector<32x8xf32>
      %686 = arith.extui %685 : vector<32x8xi1> to vector<32x8xi32>
      %687 = arith.sitofp %686 : vector<32x8xi32> to vector<32x8xf32>
      %cst_253 = arith.constant 9.900000e-01 : f32
      %688 = vector.broadcast %cst_253 : f32 to vector<32x8xf32>
      %689 = arith.mulf %688, %683 : vector<32x8xf32>
      %690 = arith.addf %689, %657 : vector<32x8xf32>
      %cst_254 = arith.constant 1.000000e+00 : f32
      %691 = vector.broadcast %cst_254 : f32 to vector<32x8xf32>
      %692 = arith.mulf %687, %691 : vector<32x8xf32>
      %693 = arith.subf %690, %692 : vector<32x8xf32>
      %cst_255 = arith.constant 1.000000e+00 : f32
      %694 = vector.broadcast %cst_255 : f32 to vector<32x8xf32>
      %695 = arith.cmpf ogt, %693, %694 : vector<32x8xf32>
      %696 = arith.extui %695 : vector<32x8xi1> to vector<32x8xi32>
      %697 = arith.sitofp %696 : vector<32x8xi32> to vector<32x8xf32>
      %698 = vector.extract_strided_slice %565 {offsets = [64, 0], sizes = [32, 8], strides = [1, 1]} : vector<256x8xbf16> to vector<32x8xbf16>
      %c0_256 = arith.constant 0 : index
      %c0_257 = arith.constant 0 : index
      %699 = vector.load %arg4[%c0_256, %c0_257] : memref<96x32xbf16, #tpu.memory_space<vmem>>, vector<96x32xbf16>
      %cst_258 = arith.constant dense<0.000000e+00> : vector<96x8xf32>
      %700 = tpu.matmul %699, %698, %cst_258 {dimension_numbers = #tpu.dot_dimension_numbers<[1], [0], [0], [1], [0, 0, 1, 1], [], []>} : vector<96x32xbf16>, vector<32x8xbf16>, vector<96x8xf32> -> vector<96x8xf32>
      %c0_259 = arith.constant 0 : index
      %c0_260 = arith.constant 0 : index
      %701 = vector.load %arg5[%c0_259, %c0_260] : memref<96x8xf32, #tpu.memory_space<vmem>>, vector<96x8xf32>
      %702 = arith.addf %700, %701 : vector<96x8xf32>
      %703 = vector.extract_strided_slice %702 {offsets = [0, 0], sizes = [32, 8], strides = [1, 1]} : vector<96x8xf32> to vector<32x8xf32>
      %cst_261 = arith.constant 0.000000e+00 : f32
      %704 = vector.broadcast %cst_261 : f32 to vector<32x8xf32>
      %705 = arith.cmpf oge, %703, %704 : vector<32x8xf32>
      %706 = arith.extui %705 : vector<32x8xi1> to vector<32x8xi32>
      %707 = arith.sitofp %706 : vector<32x8xi32> to vector<32x8xf32>
      %708 = vector.extract_strided_slice %702 {offsets = [32, 0], sizes = [32, 8], strides = [1, 1]} : vector<96x8xf32> to vector<32x8xf32>
      %cst_262 = arith.constant 0.000000e+00 : f32
      %709 = vector.broadcast %cst_262 : f32 to vector<32x8xf32>
      %710 = arith.cmpf oge, %708, %709 : vector<32x8xf32>
      %711 = arith.extui %710 : vector<32x8xi1> to vector<32x8xi32>
      %712 = arith.sitofp %711 : vector<32x8xi32> to vector<32x8xf32>
      %713 = vector.extract_strided_slice %702 {offsets = [64, 0], sizes = [32, 8], strides = [1, 1]} : vector<96x8xf32> to vector<32x8xf32>
      %c0_263 = arith.constant 0 : index
      %c0_264 = arith.constant 0 : index
      %714 = vector.load %arg6[%c0_263, %c0_264] : memref<32x8xf32, #tpu.memory_space<vmem>>, vector<32x8xf32>
      %715 = arith.mulf %707, %714 : vector<32x8xf32>
      %716 = arith.addf %713, %715 : vector<32x8xf32>
      %cst_265 = arith.constant 0.000000e+00 : f32
      %717 = vector.broadcast %cst_265 : f32 to vector<32x8xf32>
      %718 = arith.cmpf oge, %716, %717 : vector<32x8xf32>
      %719 = arith.extui %718 : vector<32x8xi1> to vector<32x8xi32>
      %720 = arith.sitofp %719 : vector<32x8xi32> to vector<32x8xf32>
      %cst_266 = arith.constant 1.000000e+00 : f32
      %721 = vector.broadcast %cst_266 : f32 to vector<32x8xf32>
      %722 = arith.subf %721, %712 : vector<32x8xf32>
      %723 = arith.mulf %722, %720 : vector<32x8xf32>
      %cst_267 = arith.constant 9.900000e-01 : f32
      %724 = vector.broadcast %cst_267 : f32 to vector<32x8xf32>
      %725 = arith.mulf %724, %693 : vector<32x8xf32>
      %726 = arith.addf %725, %723 : vector<32x8xf32>
      %cst_268 = arith.constant 1.000000e+00 : f32
      %727 = vector.broadcast %cst_268 : f32 to vector<32x8xf32>
      %728 = arith.mulf %697, %727 : vector<32x8xf32>
      %729 = arith.subf %726, %728 : vector<32x8xf32>
      %cst_269 = arith.constant 1.000000e+00 : f32
      %730 = vector.broadcast %cst_269 : f32 to vector<32x8xf32>
      %731 = arith.cmpf ogt, %729, %730 : vector<32x8xf32>
      %732 = arith.extui %731 : vector<32x8xi1> to vector<32x8xi32>
      %733 = arith.sitofp %732 : vector<32x8xi32> to vector<32x8xf32>
      %cst_270 = arith.constant 9.900000e-01 : f32
      %734 = vector.broadcast %cst_270 : f32 to vector<32x8xf32>
      %735 = arith.mulf %734, %729 : vector<32x8xf32>
      %736 = arith.addf %735, %723 : vector<32x8xf32>
      %cst_271 = arith.constant 1.000000e+00 : f32
      %737 = vector.broadcast %cst_271 : f32 to vector<32x8xf32>
      %738 = arith.mulf %733, %737 : vector<32x8xf32>
      %739 = arith.subf %736, %738 : vector<32x8xf32>
      %cst_272 = arith.constant 1.000000e+00 : f32
      %740 = vector.broadcast %cst_272 : f32 to vector<32x8xf32>
      %741 = arith.cmpf ogt, %739, %740 : vector<32x8xf32>
      %742 = arith.extui %741 : vector<32x8xi1> to vector<32x8xi32>
      %743 = arith.sitofp %742 : vector<32x8xi32> to vector<32x8xf32>
      %cst_273 = arith.constant 9.900000e-01 : f32
      %744 = vector.broadcast %cst_273 : f32 to vector<32x8xf32>
      %745 = arith.mulf %744, %739 : vector<32x8xf32>
      %746 = arith.addf %745, %723 : vector<32x8xf32>
      %cst_274 = arith.constant 1.000000e+00 : f32
      %747 = vector.broadcast %cst_274 : f32 to vector<32x8xf32>
      %748 = arith.mulf %743, %747 : vector<32x8xf32>
      %749 = arith.subf %746, %748 : vector<32x8xf32>
      %cst_275 = arith.constant 1.000000e+00 : f32
      %750 = vector.broadcast %cst_275 : f32 to vector<32x8xf32>
      %751 = arith.cmpf ogt, %749, %750 : vector<32x8xf32>
      %752 = arith.extui %751 : vector<32x8xi1> to vector<32x8xi32>
      %753 = arith.sitofp %752 : vector<32x8xi32> to vector<32x8xf32>
      %cst_276 = arith.constant 9.900000e-01 : f32
      %754 = vector.broadcast %cst_276 : f32 to vector<32x8xf32>
      %755 = arith.mulf %754, %749 : vector<32x8xf32>
      %756 = arith.addf %755, %723 : vector<32x8xf32>
      %cst_277 = arith.constant 1.000000e+00 : f32
      %757 = vector.broadcast %cst_277 : f32 to vector<32x8xf32>
      %758 = arith.mulf %753, %757 : vector<32x8xf32>
      %759 = arith.subf %756, %758 : vector<32x8xf32>
      %cst_278 = arith.constant 1.000000e+00 : f32
      %760 = vector.broadcast %cst_278 : f32 to vector<32x8xf32>
      %761 = arith.cmpf ogt, %759, %760 : vector<32x8xf32>
      %762 = arith.extui %761 : vector<32x8xi1> to vector<32x8xi32>
      %763 = arith.sitofp %762 : vector<32x8xi32> to vector<32x8xf32>
      %764 = vector.extract_strided_slice %565 {offsets = [96, 0], sizes = [32, 8], strides = [1, 1]} : vector<256x8xbf16> to vector<32x8xbf16>
      %c0_279 = arith.constant 0 : index
      %c0_280 = arith.constant 0 : index
      %765 = vector.load %arg4[%c0_279, %c0_280] : memref<96x32xbf16, #tpu.memory_space<vmem>>, vector<96x32xbf16>
      %cst_281 = arith.constant dense<0.000000e+00> : vector<96x8xf32>
      %766 = tpu.matmul %765, %764, %cst_281 {dimension_numbers = #tpu.dot_dimension_numbers<[1], [0], [0], [1], [0, 0, 1, 1], [], []>} : vector<96x32xbf16>, vector<32x8xbf16>, vector<96x8xf32> -> vector<96x8xf32>
      %c0_282 = arith.constant 0 : index
      %c0_283 = arith.constant 0 : index
      %767 = vector.load %arg5[%c0_282, %c0_283] : memref<96x8xf32, #tpu.memory_space<vmem>>, vector<96x8xf32>
      %768 = arith.addf %766, %767 : vector<96x8xf32>
      %769 = vector.extract_strided_slice %768 {offsets = [0, 0], sizes = [32, 8], strides = [1, 1]} : vector<96x8xf32> to vector<32x8xf32>
      %cst_284 = arith.constant 0.000000e+00 : f32
      %770 = vector.broadcast %cst_284 : f32 to vector<32x8xf32>
      %771 = arith.cmpf oge, %769, %770 : vector<32x8xf32>
      %772 = arith.extui %771 : vector<32x8xi1> to vector<32x8xi32>
      %773 = arith.sitofp %772 : vector<32x8xi32> to vector<32x8xf32>
      %774 = vector.extract_strided_slice %768 {offsets = [32, 0], sizes = [32, 8], strides = [1, 1]} : vector<96x8xf32> to vector<32x8xf32>
      %cst_285 = arith.constant 0.000000e+00 : f32
      %775 = vector.broadcast %cst_285 : f32 to vector<32x8xf32>
      %776 = arith.cmpf oge, %774, %775 : vector<32x8xf32>
      %777 = arith.extui %776 : vector<32x8xi1> to vector<32x8xi32>
      %778 = arith.sitofp %777 : vector<32x8xi32> to vector<32x8xf32>
      %779 = vector.extract_strided_slice %768 {offsets = [64, 0], sizes = [32, 8], strides = [1, 1]} : vector<96x8xf32> to vector<32x8xf32>
      %c0_286 = arith.constant 0 : index
      %c0_287 = arith.constant 0 : index
      %780 = vector.load %arg6[%c0_286, %c0_287] : memref<32x8xf32, #tpu.memory_space<vmem>>, vector<32x8xf32>
      %781 = arith.mulf %773, %780 : vector<32x8xf32>
      %782 = arith.addf %779, %781 : vector<32x8xf32>
      %cst_288 = arith.constant 0.000000e+00 : f32
      %783 = vector.broadcast %cst_288 : f32 to vector<32x8xf32>
      %784 = arith.cmpf oge, %782, %783 : vector<32x8xf32>
      %785 = arith.extui %784 : vector<32x8xi1> to vector<32x8xi32>
      %786 = arith.sitofp %785 : vector<32x8xi32> to vector<32x8xf32>
      %cst_289 = arith.constant 1.000000e+00 : f32
      %787 = vector.broadcast %cst_289 : f32 to vector<32x8xf32>
      %788 = arith.subf %787, %778 : vector<32x8xf32>
      %789 = arith.mulf %788, %786 : vector<32x8xf32>
      %cst_290 = arith.constant 9.900000e-01 : f32
      %790 = vector.broadcast %cst_290 : f32 to vector<32x8xf32>
      %791 = arith.mulf %790, %759 : vector<32x8xf32>
      %792 = arith.addf %791, %789 : vector<32x8xf32>
      %cst_291 = arith.constant 1.000000e+00 : f32
      %793 = vector.broadcast %cst_291 : f32 to vector<32x8xf32>
      %794 = arith.mulf %763, %793 : vector<32x8xf32>
      %795 = arith.subf %792, %794 : vector<32x8xf32>
      %cst_292 = arith.constant 1.000000e+00 : f32
      %796 = vector.broadcast %cst_292 : f32 to vector<32x8xf32>
      %797 = arith.cmpf ogt, %795, %796 : vector<32x8xf32>
      %798 = arith.extui %797 : vector<32x8xi1> to vector<32x8xi32>
      %799 = arith.sitofp %798 : vector<32x8xi32> to vector<32x8xf32>
      %cst_293 = arith.constant 9.900000e-01 : f32
      %800 = vector.broadcast %cst_293 : f32 to vector<32x8xf32>
      %801 = arith.mulf %800, %795 : vector<32x8xf32>
      %802 = arith.addf %801, %789 : vector<32x8xf32>
      %cst_294 = arith.constant 1.000000e+00 : f32
      %803 = vector.broadcast %cst_294 : f32 to vector<32x8xf32>
      %804 = arith.mulf %799, %803 : vector<32x8xf32>
      %805 = arith.subf %802, %804 : vector<32x8xf32>
      %cst_295 = arith.constant 1.000000e+00 : f32
      %806 = vector.broadcast %cst_295 : f32 to vector<32x8xf32>
      %807 = arith.cmpf ogt, %805, %806 : vector<32x8xf32>
      %808 = arith.extui %807 : vector<32x8xi1> to vector<32x8xi32>
      %809 = arith.sitofp %808 : vector<32x8xi32> to vector<32x8xf32>
      %cst_296 = arith.constant 9.900000e-01 : f32
      %810 = vector.broadcast %cst_296 : f32 to vector<32x8xf32>
      %811 = arith.mulf %810, %805 : vector<32x8xf32>
      %812 = arith.addf %811, %789 : vector<32x8xf32>
      %cst_297 = arith.constant 1.000000e+00 : f32
      %813 = vector.broadcast %cst_297 : f32 to vector<32x8xf32>
      %814 = arith.mulf %809, %813 : vector<32x8xf32>
      %815 = arith.subf %812, %814 : vector<32x8xf32>
      %cst_298 = arith.constant 1.000000e+00 : f32
      %816 = vector.broadcast %cst_298 : f32 to vector<32x8xf32>
      %817 = arith.cmpf ogt, %815, %816 : vector<32x8xf32>
      %818 = arith.extui %817 : vector<32x8xi1> to vector<32x8xi32>
      %819 = arith.sitofp %818 : vector<32x8xi32> to vector<32x8xf32>
      %cst_299 = arith.constant 9.900000e-01 : f32
      %820 = vector.broadcast %cst_299 : f32 to vector<32x8xf32>
      %821 = arith.mulf %820, %815 : vector<32x8xf32>
      %822 = arith.addf %821, %789 : vector<32x8xf32>
      %cst_300 = arith.constant 1.000000e+00 : f32
      %823 = vector.broadcast %cst_300 : f32 to vector<32x8xf32>
      %824 = arith.mulf %819, %823 : vector<32x8xf32>
      %825 = arith.subf %822, %824 : vector<32x8xf32>
      %cst_301 = arith.constant 1.000000e+00 : f32
      %826 = vector.broadcast %cst_301 : f32 to vector<32x8xf32>
      %827 = arith.cmpf ogt, %825, %826 : vector<32x8xf32>
      %828 = arith.extui %827 : vector<32x8xi1> to vector<32x8xi32>
      %829 = arith.sitofp %828 : vector<32x8xi32> to vector<32x8xf32>
      %830 = vector.extract_strided_slice %565 {offsets = [128, 0], sizes = [32, 8], strides = [1, 1]} : vector<256x8xbf16> to vector<32x8xbf16>
      %c0_302 = arith.constant 0 : index
      %c0_303 = arith.constant 0 : index
      %831 = vector.load %arg4[%c0_302, %c0_303] : memref<96x32xbf16, #tpu.memory_space<vmem>>, vector<96x32xbf16>
      %cst_304 = arith.constant dense<0.000000e+00> : vector<96x8xf32>
      %832 = tpu.matmul %831, %830, %cst_304 {dimension_numbers = #tpu.dot_dimension_numbers<[1], [0], [0], [1], [0, 0, 1, 1], [], []>} : vector<96x32xbf16>, vector<32x8xbf16>, vector<96x8xf32> -> vector<96x8xf32>
      %c0_305 = arith.constant 0 : index
      %c0_306 = arith.constant 0 : index
      %833 = vector.load %arg5[%c0_305, %c0_306] : memref<96x8xf32, #tpu.memory_space<vmem>>, vector<96x8xf32>
      %834 = arith.addf %832, %833 : vector<96x8xf32>
      %835 = vector.extract_strided_slice %834 {offsets = [0, 0], sizes = [32, 8], strides = [1, 1]} : vector<96x8xf32> to vector<32x8xf32>
      %cst_307 = arith.constant 0.000000e+00 : f32
      %836 = vector.broadcast %cst_307 : f32 to vector<32x8xf32>
      %837 = arith.cmpf oge, %835, %836 : vector<32x8xf32>
      %838 = arith.extui %837 : vector<32x8xi1> to vector<32x8xi32>
      %839 = arith.sitofp %838 : vector<32x8xi32> to vector<32x8xf32>
      %840 = vector.extract_strided_slice %834 {offsets = [32, 0], sizes = [32, 8], strides = [1, 1]} : vector<96x8xf32> to vector<32x8xf32>
      %cst_308 = arith.constant 0.000000e+00 : f32
      %841 = vector.broadcast %cst_308 : f32 to vector<32x8xf32>
      %842 = arith.cmpf oge, %840, %841 : vector<32x8xf32>
      %843 = arith.extui %842 : vector<32x8xi1> to vector<32x8xi32>
      %844 = arith.sitofp %843 : vector<32x8xi32> to vector<32x8xf32>
      %845 = vector.extract_strided_slice %834 {offsets = [64, 0], sizes = [32, 8], strides = [1, 1]} : vector<96x8xf32> to vector<32x8xf32>
      %c0_309 = arith.constant 0 : index
      %c0_310 = arith.constant 0 : index
      %846 = vector.load %arg6[%c0_309, %c0_310] : memref<32x8xf32, #tpu.memory_space<vmem>>, vector<32x8xf32>
      %847 = arith.mulf %839, %846 : vector<32x8xf32>
      %848 = arith.addf %845, %847 : vector<32x8xf32>
      %cst_311 = arith.constant 0.000000e+00 : f32
      %849 = vector.broadcast %cst_311 : f32 to vector<32x8xf32>
      %850 = arith.cmpf oge, %848, %849 : vector<32x8xf32>
      %851 = arith.extui %850 : vector<32x8xi1> to vector<32x8xi32>
      %852 = arith.sitofp %851 : vector<32x8xi32> to vector<32x8xf32>
      %cst_312 = arith.constant 1.000000e+00 : f32
      %853 = vector.broadcast %cst_312 : f32 to vector<32x8xf32>
      %854 = arith.subf %853, %844 : vector<32x8xf32>
      %855 = arith.mulf %854, %852 : vector<32x8xf32>
      %cst_313 = arith.constant 9.900000e-01 : f32
      %856 = vector.broadcast %cst_313 : f32 to vector<32x8xf32>
      %857 = arith.mulf %856, %825 : vector<32x8xf32>
      %858 = arith.addf %857, %855 : vector<32x8xf32>
      %cst_314 = arith.constant 1.000000e+00 : f32
      %859 = vector.broadcast %cst_314 : f32 to vector<32x8xf32>
      %860 = arith.mulf %829, %859 : vector<32x8xf32>
      %861 = arith.subf %858, %860 : vector<32x8xf32>
      %cst_315 = arith.constant 1.000000e+00 : f32
      %862 = vector.broadcast %cst_315 : f32 to vector<32x8xf32>
      %863 = arith.cmpf ogt, %861, %862 : vector<32x8xf32>
      %864 = arith.extui %863 : vector<32x8xi1> to vector<32x8xi32>
      %865 = arith.sitofp %864 : vector<32x8xi32> to vector<32x8xf32>
      %cst_316 = arith.constant 9.900000e-01 : f32
      %866 = vector.broadcast %cst_316 : f32 to vector<32x8xf32>
      %867 = arith.mulf %866, %861 : vector<32x8xf32>
      %868 = arith.addf %867, %855 : vector<32x8xf32>
      %cst_317 = arith.constant 1.000000e+00 : f32
      %869 = vector.broadcast %cst_317 : f32 to vector<32x8xf32>
      %870 = arith.mulf %865, %869 : vector<32x8xf32>
      %871 = arith.subf %868, %870 : vector<32x8xf32>
      %cst_318 = arith.constant 1.000000e+00 : f32
      %872 = vector.broadcast %cst_318 : f32 to vector<32x8xf32>
      %873 = arith.cmpf ogt, %871, %872 : vector<32x8xf32>
      %874 = arith.extui %873 : vector<32x8xi1> to vector<32x8xi32>
      %875 = arith.sitofp %874 : vector<32x8xi32> to vector<32x8xf32>
      %cst_319 = arith.constant 9.900000e-01 : f32
      %876 = vector.broadcast %cst_319 : f32 to vector<32x8xf32>
      %877 = arith.mulf %876, %871 : vector<32x8xf32>
      %878 = arith.addf %877, %855 : vector<32x8xf32>
      %cst_320 = arith.constant 1.000000e+00 : f32
      %879 = vector.broadcast %cst_320 : f32 to vector<32x8xf32>
      %880 = arith.mulf %875, %879 : vector<32x8xf32>
      %881 = arith.subf %878, %880 : vector<32x8xf32>
      %cst_321 = arith.constant 1.000000e+00 : f32
      %882 = vector.broadcast %cst_321 : f32 to vector<32x8xf32>
      %883 = arith.cmpf ogt, %881, %882 : vector<32x8xf32>
      %884 = arith.extui %883 : vector<32x8xi1> to vector<32x8xi32>
      %885 = arith.sitofp %884 : vector<32x8xi32> to vector<32x8xf32>
      %cst_322 = arith.constant 9.900000e-01 : f32
      %886 = vector.broadcast %cst_322 : f32 to vector<32x8xf32>
      %887 = arith.mulf %886, %881 : vector<32x8xf32>
      %888 = arith.addf %887, %855 : vector<32x8xf32>
      %cst_323 = arith.constant 1.000000e+00 : f32
      %889 = vector.broadcast %cst_323 : f32 to vector<32x8xf32>
      %890 = arith.mulf %885, %889 : vector<32x8xf32>
      %891 = arith.subf %888, %890 : vector<32x8xf32>
      %cst_324 = arith.constant 1.000000e+00 : f32
      %892 = vector.broadcast %cst_324 : f32 to vector<32x8xf32>
      %893 = arith.cmpf ogt, %891, %892 : vector<32x8xf32>
      %894 = arith.extui %893 : vector<32x8xi1> to vector<32x8xi32>
      %895 = arith.sitofp %894 : vector<32x8xi32> to vector<32x8xf32>
      %896 = vector.extract_strided_slice %565 {offsets = [160, 0], sizes = [32, 8], strides = [1, 1]} : vector<256x8xbf16> to vector<32x8xbf16>
      %c0_325 = arith.constant 0 : index
      %c0_326 = arith.constant 0 : index
      %897 = vector.load %arg4[%c0_325, %c0_326] : memref<96x32xbf16, #tpu.memory_space<vmem>>, vector<96x32xbf16>
      %cst_327 = arith.constant dense<0.000000e+00> : vector<96x8xf32>
      %898 = tpu.matmul %897, %896, %cst_327 {dimension_numbers = #tpu.dot_dimension_numbers<[1], [0], [0], [1], [0, 0, 1, 1], [], []>} : vector<96x32xbf16>, vector<32x8xbf16>, vector<96x8xf32> -> vector<96x8xf32>
      %c0_328 = arith.constant 0 : index
      %c0_329 = arith.constant 0 : index
      %899 = vector.load %arg5[%c0_328, %c0_329] : memref<96x8xf32, #tpu.memory_space<vmem>>, vector<96x8xf32>
      %900 = arith.addf %898, %899 : vector<96x8xf32>
      %901 = vector.extract_strided_slice %900 {offsets = [0, 0], sizes = [32, 8], strides = [1, 1]} : vector<96x8xf32> to vector<32x8xf32>
      %cst_330 = arith.constant 0.000000e+00 : f32
      %902 = vector.broadcast %cst_330 : f32 to vector<32x8xf32>
      %903 = arith.cmpf oge, %901, %902 : vector<32x8xf32>
      %904 = arith.extui %903 : vector<32x8xi1> to vector<32x8xi32>
      %905 = arith.sitofp %904 : vector<32x8xi32> to vector<32x8xf32>
      %906 = vector.extract_strided_slice %900 {offsets = [32, 0], sizes = [32, 8], strides = [1, 1]} : vector<96x8xf32> to vector<32x8xf32>
      %cst_331 = arith.constant 0.000000e+00 : f32
      %907 = vector.broadcast %cst_331 : f32 to vector<32x8xf32>
      %908 = arith.cmpf oge, %906, %907 : vector<32x8xf32>
      %909 = arith.extui %908 : vector<32x8xi1> to vector<32x8xi32>
      %910 = arith.sitofp %909 : vector<32x8xi32> to vector<32x8xf32>
      %911 = vector.extract_strided_slice %900 {offsets = [64, 0], sizes = [32, 8], strides = [1, 1]} : vector<96x8xf32> to vector<32x8xf32>
      %c0_332 = arith.constant 0 : index
      %c0_333 = arith.constant 0 : index
      %912 = vector.load %arg6[%c0_332, %c0_333] : memref<32x8xf32, #tpu.memory_space<vmem>>, vector<32x8xf32>
      %913 = arith.mulf %905, %912 : vector<32x8xf32>
      %914 = arith.addf %911, %913 : vector<32x8xf32>
      %cst_334 = arith.constant 0.000000e+00 : f32
      %915 = vector.broadcast %cst_334 : f32 to vector<32x8xf32>
      %916 = arith.cmpf oge, %914, %915 : vector<32x8xf32>
      %917 = arith.extui %916 : vector<32x8xi1> to vector<32x8xi32>
      %918 = arith.sitofp %917 : vector<32x8xi32> to vector<32x8xf32>
      %cst_335 = arith.constant 1.000000e+00 : f32
      %919 = vector.broadcast %cst_335 : f32 to vector<32x8xf32>
      %920 = arith.subf %919, %910 : vector<32x8xf32>
      %921 = arith.mulf %920, %918 : vector<32x8xf32>
      %cst_336 = arith.constant 9.900000e-01 : f32
      %922 = vector.broadcast %cst_336 : f32 to vector<32x8xf32>
      %923 = arith.mulf %922, %891 : vector<32x8xf32>
      %924 = arith.addf %923, %921 : vector<32x8xf32>
      %cst_337 = arith.constant 1.000000e+00 : f32
      %925 = vector.broadcast %cst_337 : f32 to vector<32x8xf32>
      %926 = arith.mulf %895, %925 : vector<32x8xf32>
      %927 = arith.subf %924, %926 : vector<32x8xf32>
      %cst_338 = arith.constant 1.000000e+00 : f32
      %928 = vector.broadcast %cst_338 : f32 to vector<32x8xf32>
      %929 = arith.cmpf ogt, %927, %928 : vector<32x8xf32>
      %930 = arith.extui %929 : vector<32x8xi1> to vector<32x8xi32>
      %931 = arith.sitofp %930 : vector<32x8xi32> to vector<32x8xf32>
      %cst_339 = arith.constant 9.900000e-01 : f32
      %932 = vector.broadcast %cst_339 : f32 to vector<32x8xf32>
      %933 = arith.mulf %932, %927 : vector<32x8xf32>
      %934 = arith.addf %933, %921 : vector<32x8xf32>
      %cst_340 = arith.constant 1.000000e+00 : f32
      %935 = vector.broadcast %cst_340 : f32 to vector<32x8xf32>
      %936 = arith.mulf %931, %935 : vector<32x8xf32>
      %937 = arith.subf %934, %936 : vector<32x8xf32>
      %cst_341 = arith.constant 1.000000e+00 : f32
      %938 = vector.broadcast %cst_341 : f32 to vector<32x8xf32>
      %939 = arith.cmpf ogt, %937, %938 : vector<32x8xf32>
      %940 = arith.extui %939 : vector<32x8xi1> to vector<32x8xi32>
      %941 = arith.sitofp %940 : vector<32x8xi32> to vector<32x8xf32>
      %cst_342 = arith.constant 9.900000e-01 : f32
      %942 = vector.broadcast %cst_342 : f32 to vector<32x8xf32>
      %943 = arith.mulf %942, %937 : vector<32x8xf32>
      %944 = arith.addf %943, %921 : vector<32x8xf32>
      %cst_343 = arith.constant 1.000000e+00 : f32
      %945 = vector.broadcast %cst_343 : f32 to vector<32x8xf32>
      %946 = arith.mulf %941, %945 : vector<32x8xf32>
      %947 = arith.subf %944, %946 : vector<32x8xf32>
      %cst_344 = arith.constant 1.000000e+00 : f32
      %948 = vector.broadcast %cst_344 : f32 to vector<32x8xf32>
      %949 = arith.cmpf ogt, %947, %948 : vector<32x8xf32>
      %950 = arith.extui %949 : vector<32x8xi1> to vector<32x8xi32>
      %951 = arith.sitofp %950 : vector<32x8xi32> to vector<32x8xf32>
      %cst_345 = arith.constant 9.900000e-01 : f32
      %952 = vector.broadcast %cst_345 : f32 to vector<32x8xf32>
      %953 = arith.mulf %952, %947 : vector<32x8xf32>
      %954 = arith.addf %953, %921 : vector<32x8xf32>
      %cst_346 = arith.constant 1.000000e+00 : f32
      %955 = vector.broadcast %cst_346 : f32 to vector<32x8xf32>
      %956 = arith.mulf %951, %955 : vector<32x8xf32>
      %957 = arith.subf %954, %956 : vector<32x8xf32>
      %cst_347 = arith.constant 1.000000e+00 : f32
      %958 = vector.broadcast %cst_347 : f32 to vector<32x8xf32>
      %959 = arith.cmpf ogt, %957, %958 : vector<32x8xf32>
      %960 = arith.extui %959 : vector<32x8xi1> to vector<32x8xi32>
      %961 = arith.sitofp %960 : vector<32x8xi32> to vector<32x8xf32>
      %962 = vector.extract_strided_slice %565 {offsets = [192, 0], sizes = [32, 8], strides = [1, 1]} : vector<256x8xbf16> to vector<32x8xbf16>
      %c0_348 = arith.constant 0 : index
      %c0_349 = arith.constant 0 : index
      %963 = vector.load %arg4[%c0_348, %c0_349] : memref<96x32xbf16, #tpu.memory_space<vmem>>, vector<96x32xbf16>
      %cst_350 = arith.constant dense<0.000000e+00> : vector<96x8xf32>
      %964 = tpu.matmul %963, %962, %cst_350 {dimension_numbers = #tpu.dot_dimension_numbers<[1], [0], [0], [1], [0, 0, 1, 1], [], []>} : vector<96x32xbf16>, vector<32x8xbf16>, vector<96x8xf32> -> vector<96x8xf32>
      %c0_351 = arith.constant 0 : index
      %c0_352 = arith.constant 0 : index
      %965 = vector.load %arg5[%c0_351, %c0_352] : memref<96x8xf32, #tpu.memory_space<vmem>>, vector<96x8xf32>
      %966 = arith.addf %964, %965 : vector<96x8xf32>
      %967 = vector.extract_strided_slice %966 {offsets = [0, 0], sizes = [32, 8], strides = [1, 1]} : vector<96x8xf32> to vector<32x8xf32>
      %cst_353 = arith.constant 0.000000e+00 : f32
      %968 = vector.broadcast %cst_353 : f32 to vector<32x8xf32>
      %969 = arith.cmpf oge, %967, %968 : vector<32x8xf32>
      %970 = arith.extui %969 : vector<32x8xi1> to vector<32x8xi32>
      %971 = arith.sitofp %970 : vector<32x8xi32> to vector<32x8xf32>
      %972 = vector.extract_strided_slice %966 {offsets = [32, 0], sizes = [32, 8], strides = [1, 1]} : vector<96x8xf32> to vector<32x8xf32>
      %cst_354 = arith.constant 0.000000e+00 : f32
      %973 = vector.broadcast %cst_354 : f32 to vector<32x8xf32>
      %974 = arith.cmpf oge, %972, %973 : vector<32x8xf32>
      %975 = arith.extui %974 : vector<32x8xi1> to vector<32x8xi32>
      %976 = arith.sitofp %975 : vector<32x8xi32> to vector<32x8xf32>
      %977 = vector.extract_strided_slice %966 {offsets = [64, 0], sizes = [32, 8], strides = [1, 1]} : vector<96x8xf32> to vector<32x8xf32>
      %c0_355 = arith.constant 0 : index
      %c0_356 = arith.constant 0 : index
      %978 = vector.load %arg6[%c0_355, %c0_356] : memref<32x8xf32, #tpu.memory_space<vmem>>, vector<32x8xf32>
      %979 = arith.mulf %971, %978 : vector<32x8xf32>
      %980 = arith.addf %977, %979 : vector<32x8xf32>
      %cst_357 = arith.constant 0.000000e+00 : f32
      %981 = vector.broadcast %cst_357 : f32 to vector<32x8xf32>
      %982 = arith.cmpf oge, %980, %981 : vector<32x8xf32>
      %983 = arith.extui %982 : vector<32x8xi1> to vector<32x8xi32>
      %984 = arith.sitofp %983 : vector<32x8xi32> to vector<32x8xf32>
      %cst_358 = arith.constant 1.000000e+00 : f32
      %985 = vector.broadcast %cst_358 : f32 to vector<32x8xf32>
      %986 = arith.subf %985, %976 : vector<32x8xf32>
      %987 = arith.mulf %986, %984 : vector<32x8xf32>
      %cst_359 = arith.constant 9.900000e-01 : f32
      %988 = vector.broadcast %cst_359 : f32 to vector<32x8xf32>
      %989 = arith.mulf %988, %957 : vector<32x8xf32>
      %990 = arith.addf %989, %987 : vector<32x8xf32>
      %cst_360 = arith.constant 1.000000e+00 : f32
      %991 = vector.broadcast %cst_360 : f32 to vector<32x8xf32>
      %992 = arith.mulf %961, %991 : vector<32x8xf32>
      %993 = arith.subf %990, %992 : vector<32x8xf32>
      %cst_361 = arith.constant 1.000000e+00 : f32
      %994 = vector.broadcast %cst_361 : f32 to vector<32x8xf32>
      %995 = arith.cmpf ogt, %993, %994 : vector<32x8xf32>
      %996 = arith.extui %995 : vector<32x8xi1> to vector<32x8xi32>
      %997 = arith.sitofp %996 : vector<32x8xi32> to vector<32x8xf32>
      %cst_362 = arith.constant 9.900000e-01 : f32
      %998 = vector.broadcast %cst_362 : f32 to vector<32x8xf32>
      %999 = arith.mulf %998, %993 : vector<32x8xf32>
      %1000 = arith.addf %999, %987 : vector<32x8xf32>
      %cst_363 = arith.constant 1.000000e+00 : f32
      %1001 = vector.broadcast %cst_363 : f32 to vector<32x8xf32>
      %1002 = arith.mulf %997, %1001 : vector<32x8xf32>
      %1003 = arith.subf %1000, %1002 : vector<32x8xf32>
      %cst_364 = arith.constant 1.000000e+00 : f32
      %1004 = vector.broadcast %cst_364 : f32 to vector<32x8xf32>
      %1005 = arith.cmpf ogt, %1003, %1004 : vector<32x8xf32>
      %1006 = arith.extui %1005 : vector<32x8xi1> to vector<32x8xi32>
      %1007 = arith.sitofp %1006 : vector<32x8xi32> to vector<32x8xf32>
      %cst_365 = arith.constant 9.900000e-01 : f32
      %1008 = vector.broadcast %cst_365 : f32 to vector<32x8xf32>
      %1009 = arith.mulf %1008, %1003 : vector<32x8xf32>
      %1010 = arith.addf %1009, %987 : vector<32x8xf32>
      %cst_366 = arith.constant 1.000000e+00 : f32
      %1011 = vector.broadcast %cst_366 : f32 to vector<32x8xf32>
      %1012 = arith.mulf %1007, %1011 : vector<32x8xf32>
      %1013 = arith.subf %1010, %1012 : vector<32x8xf32>
      %cst_367 = arith.constant 1.000000e+00 : f32
      %1014 = vector.broadcast %cst_367 : f32 to vector<32x8xf32>
      %1015 = arith.cmpf ogt, %1013, %1014 : vector<32x8xf32>
      %1016 = arith.extui %1015 : vector<32x8xi1> to vector<32x8xi32>
      %1017 = arith.sitofp %1016 : vector<32x8xi32> to vector<32x8xf32>
      %cst_368 = arith.constant 9.900000e-01 : f32
      %1018 = vector.broadcast %cst_368 : f32 to vector<32x8xf32>
      %1019 = arith.mulf %1018, %1013 : vector<32x8xf32>
      %1020 = arith.addf %1019, %987 : vector<32x8xf32>
      %cst_369 = arith.constant 1.000000e+00 : f32
      %1021 = vector.broadcast %cst_369 : f32 to vector<32x8xf32>
      %1022 = arith.mulf %1017, %1021 : vector<32x8xf32>
      %1023 = arith.subf %1020, %1022 : vector<32x8xf32>
      %cst_370 = arith.constant 1.000000e+00 : f32
      %1024 = vector.broadcast %cst_370 : f32 to vector<32x8xf32>
      %1025 = arith.cmpf ogt, %1023, %1024 : vector<32x8xf32>
      %1026 = arith.extui %1025 : vector<32x8xi1> to vector<32x8xi32>
      %1027 = arith.sitofp %1026 : vector<32x8xi32> to vector<32x8xf32>
      %1028 = vector.extract_strided_slice %565 {offsets = [224, 0], sizes = [32, 8], strides = [1, 1]} : vector<256x8xbf16> to vector<32x8xbf16>
      %c0_371 = arith.constant 0 : index
      %c0_372 = arith.constant 0 : index
      %1029 = vector.load %arg4[%c0_371, %c0_372] : memref<96x32xbf16, #tpu.memory_space<vmem>>, vector<96x32xbf16>
      %cst_373 = arith.constant dense<0.000000e+00> : vector<96x8xf32>
      %1030 = tpu.matmul %1029, %1028, %cst_373 {dimension_numbers = #tpu.dot_dimension_numbers<[1], [0], [0], [1], [0, 0, 1, 1], [], []>} : vector<96x32xbf16>, vector<32x8xbf16>, vector<96x8xf32> -> vector<96x8xf32>
      %c0_374 = arith.constant 0 : index
      %c0_375 = arith.constant 0 : index
      %1031 = vector.load %arg5[%c0_374, %c0_375] : memref<96x8xf32, #tpu.memory_space<vmem>>, vector<96x8xf32>
      %1032 = arith.addf %1030, %1031 : vector<96x8xf32>
      %1033 = vector.extract_strided_slice %1032 {offsets = [0, 0], sizes = [32, 8], strides = [1, 1]} : vector<96x8xf32> to vector<32x8xf32>
      %cst_376 = arith.constant 0.000000e+00 : f32
      %1034 = vector.broadcast %cst_376 : f32 to vector<32x8xf32>
      %1035 = arith.cmpf oge, %1033, %1034 : vector<32x8xf32>
      %1036 = arith.extui %1035 : vector<32x8xi1> to vector<32x8xi32>
      %1037 = arith.sitofp %1036 : vector<32x8xi32> to vector<32x8xf32>
      %1038 = vector.extract_strided_slice %1032 {offsets = [32, 0], sizes = [32, 8], strides = [1, 1]} : vector<96x8xf32> to vector<32x8xf32>
      %cst_377 = arith.constant 0.000000e+00 : f32
      %1039 = vector.broadcast %cst_377 : f32 to vector<32x8xf32>
      %1040 = arith.cmpf oge, %1038, %1039 : vector<32x8xf32>
      %1041 = arith.extui %1040 : vector<32x8xi1> to vector<32x8xi32>
      %1042 = arith.sitofp %1041 : vector<32x8xi32> to vector<32x8xf32>
      %1043 = vector.extract_strided_slice %1032 {offsets = [64, 0], sizes = [32, 8], strides = [1, 1]} : vector<96x8xf32> to vector<32x8xf32>
      %c0_378 = arith.constant 0 : index
      %c0_379 = arith.constant 0 : index
      %1044 = vector.load %arg6[%c0_378, %c0_379] : memref<32x8xf32, #tpu.memory_space<vmem>>, vector<32x8xf32>
      %1045 = arith.mulf %1037, %1044 : vector<32x8xf32>
      %1046 = arith.addf %1043, %1045 : vector<32x8xf32>
      %cst_380 = arith.constant 0.000000e+00 : f32
      %1047 = vector.broadcast %cst_380 : f32 to vector<32x8xf32>
      %1048 = arith.cmpf oge, %1046, %1047 : vector<32x8xf32>
      %1049 = arith.extui %1048 : vector<32x8xi1> to vector<32x8xi32>
      %1050 = arith.sitofp %1049 : vector<32x8xi32> to vector<32x8xf32>
      %cst_381 = arith.constant 1.000000e+00 : f32
      %1051 = vector.broadcast %cst_381 : f32 to vector<32x8xf32>
      %1052 = arith.subf %1051, %1042 : vector<32x8xf32>
      %1053 = arith.mulf %1052, %1050 : vector<32x8xf32>
      %cst_382 = arith.constant 9.900000e-01 : f32
      %1054 = vector.broadcast %cst_382 : f32 to vector<32x8xf32>
      %1055 = arith.mulf %1054, %1023 : vector<32x8xf32>
      %1056 = arith.addf %1055, %1053 : vector<32x8xf32>
      %cst_383 = arith.constant 1.000000e+00 : f32
      %1057 = vector.broadcast %cst_383 : f32 to vector<32x8xf32>
      %1058 = arith.mulf %1027, %1057 : vector<32x8xf32>
      %1059 = arith.subf %1056, %1058 : vector<32x8xf32>
      %cst_384 = arith.constant 1.000000e+00 : f32
      %1060 = vector.broadcast %cst_384 : f32 to vector<32x8xf32>
      %1061 = arith.cmpf ogt, %1059, %1060 : vector<32x8xf32>
      %1062 = arith.extui %1061 : vector<32x8xi1> to vector<32x8xi32>
      %1063 = arith.sitofp %1062 : vector<32x8xi32> to vector<32x8xf32>
      %cst_385 = arith.constant 9.900000e-01 : f32
      %1064 = vector.broadcast %cst_385 : f32 to vector<32x8xf32>
      %1065 = arith.mulf %1064, %1059 : vector<32x8xf32>
      %1066 = arith.addf %1065, %1053 : vector<32x8xf32>
      %cst_386 = arith.constant 1.000000e+00 : f32
      %1067 = vector.broadcast %cst_386 : f32 to vector<32x8xf32>
      %1068 = arith.mulf %1063, %1067 : vector<32x8xf32>
      %1069 = arith.subf %1066, %1068 : vector<32x8xf32>
      %cst_387 = arith.constant 1.000000e+00 : f32
      %1070 = vector.broadcast %cst_387 : f32 to vector<32x8xf32>
      %1071 = arith.cmpf ogt, %1069, %1070 : vector<32x8xf32>
      %1072 = arith.extui %1071 : vector<32x8xi1> to vector<32x8xi32>
      %1073 = arith.sitofp %1072 : vector<32x8xi32> to vector<32x8xf32>
      %cst_388 = arith.constant 9.900000e-01 : f32
      %1074 = vector.broadcast %cst_388 : f32 to vector<32x8xf32>
      %1075 = arith.mulf %1074, %1069 : vector<32x8xf32>
      %1076 = arith.addf %1075, %1053 : vector<32x8xf32>
      %cst_389 = arith.constant 1.000000e+00 : f32
      %1077 = vector.broadcast %cst_389 : f32 to vector<32x8xf32>
      %1078 = arith.mulf %1073, %1077 : vector<32x8xf32>
      %1079 = arith.subf %1076, %1078 : vector<32x8xf32>
      %cst_390 = arith.constant 1.000000e+00 : f32
      %1080 = vector.broadcast %cst_390 : f32 to vector<32x8xf32>
      %1081 = arith.cmpf ogt, %1079, %1080 : vector<32x8xf32>
      %1082 = arith.extui %1081 : vector<32x8xi1> to vector<32x8xi32>
      %1083 = arith.sitofp %1082 : vector<32x8xi32> to vector<32x8xf32>
      %cst_391 = arith.constant 9.900000e-01 : f32
      %1084 = vector.broadcast %cst_391 : f32 to vector<32x8xf32>
      %1085 = arith.mulf %1084, %1079 : vector<32x8xf32>
      %1086 = arith.addf %1085, %1053 : vector<32x8xf32>
      %cst_392 = arith.constant 1.000000e+00 : f32
      %1087 = vector.broadcast %cst_392 : f32 to vector<32x8xf32>
      %1088 = arith.mulf %1083, %1087 : vector<32x8xf32>
      %1089 = arith.subf %1086, %1088 : vector<32x8xf32>
      %cst_393 = arith.constant 1.000000e+00 : f32
      %1090 = vector.broadcast %cst_393 : f32 to vector<32x8xf32>
      %1091 = arith.cmpf ogt, %1089, %1090 : vector<32x8xf32>
      %1092 = arith.extui %1091 : vector<32x8xi1> to vector<32x8xi32>
      %1093 = arith.sitofp %1092 : vector<32x8xi32> to vector<32x8xf32>
      scf.yield %1089, %1093 : vector<32x8xf32>, vector<32x8xf32>
    }
    %c0_i32_2 = arith.constant 0 : i32
    %c0 = arith.constant 0 : index
    %c0_3 = arith.constant 0 : index
    %4 = vector.load %arg1[%c0, %c0_3] : memref<10x8xf32, #tpu.memory_space<vmem>>, vector<10x8xf32>
    %c0_4 = arith.constant 0 : index
    %c0_5 = arith.constant 0 : index
    %5 = vector.load %arg2[%c0_4, %c0_5] : memref<256x10xf32, #tpu.memory_space<vmem>>, vector<256x10xf32>
    %cst_6 = arith.constant dense<0.000000e+00> : vector<256x8xf32>
    %6 = tpu.matmul %5, %4, %cst_6 {dimension_numbers = #tpu.dot_dimension_numbers<[1], [0], [0], [1], [0, 0, 1, 1], [], []>} : vector<256x10xf32>, vector<10x8xf32>, vector<256x8xf32> -> vector<256x8xf32>
    %c0_7 = arith.constant 0 : index
    %c0_8 = arith.constant 0 : index
    %7 = vector.load %arg3[%c0_7, %c0_8] : memref<256x8xf32, #tpu.memory_space<vmem>>, vector<256x8xf32>
    %8 = arith.addf %6, %7 : vector<256x8xf32>
    %cst_9 = arith.constant 1.000000e+00 : f32
    %9 = vector.broadcast %cst_9 : f32 to vector<256x8xf32>
    %10 = arith.cmpf ogt, %8, %9 : vector<256x8xf32>
    %11 = arith.extui %10 : vector<256x8xi1> to vector<256x8xi32>
    %12 = arith.sitofp %11 : vector<256x8xi32> to vector<256x8xf32>
    %13 = arith.truncf %12 : vector<256x8xf32> to vector<256x8xbf16>
    %14 = vector.extract_strided_slice %13 {offsets = [0, 0], sizes = [32, 8], strides = [1, 1]} : vector<256x8xbf16> to vector<32x8xbf16>
    %c0_10 = arith.constant 0 : index
    %c0_11 = arith.constant 0 : index
    %15 = vector.load %arg4[%c0_10, %c0_11] : memref<96x32xbf16, #tpu.memory_space<vmem>>, vector<96x32xbf16>
    %cst_12 = arith.constant dense<0.000000e+00> : vector<96x8xf32>
    %16 = tpu.matmul %15, %14, %cst_12 {dimension_numbers = #tpu.dot_dimension_numbers<[1], [0], [0], [1], [0, 0, 1, 1], [], []>} : vector<96x32xbf16>, vector<32x8xbf16>, vector<96x8xf32> -> vector<96x8xf32>
    %c0_13 = arith.constant 0 : index
    %c0_14 = arith.constant 0 : index
    %17 = vector.load %arg5[%c0_13, %c0_14] : memref<96x8xf32, #tpu.memory_space<vmem>>, vector<96x8xf32>
    %18 = arith.addf %16, %17 : vector<96x8xf32>
    %19 = vector.extract_strided_slice %18 {offsets = [0, 0], sizes = [32, 8], strides = [1, 1]} : vector<96x8xf32> to vector<32x8xf32>
    %cst_15 = arith.constant 0.000000e+00 : f32
    %20 = vector.broadcast %cst_15 : f32 to vector<32x8xf32>
    %21 = arith.cmpf oge, %19, %20 : vector<32x8xf32>
    %22 = arith.extui %21 : vector<32x8xi1> to vector<32x8xi32>
    %23 = arith.sitofp %22 : vector<32x8xi32> to vector<32x8xf32>
    %24 = vector.extract_strided_slice %18 {offsets = [32, 0], sizes = [32, 8], strides = [1, 1]} : vector<96x8xf32> to vector<32x8xf32>
    %cst_16 = arith.constant 0.000000e+00 : f32
    %25 = vector.broadcast %cst_16 : f32 to vector<32x8xf32>
    %26 = arith.cmpf oge, %24, %25 : vector<32x8xf32>
    %27 = arith.extui %26 : vector<32x8xi1> to vector<32x8xi32>
    %28 = arith.sitofp %27 : vector<32x8xi32> to vector<32x8xf32>
    %29 = vector.extract_strided_slice %18 {offsets = [64, 0], sizes = [32, 8], strides = [1, 1]} : vector<96x8xf32> to vector<32x8xf32>
    %c0_17 = arith.constant 0 : index
    %c0_18 = arith.constant 0 : index
    %30 = vector.load %arg6[%c0_17, %c0_18] : memref<32x8xf32, #tpu.memory_space<vmem>>, vector<32x8xf32>
    %31 = arith.mulf %23, %30 : vector<32x8xf32>
    %32 = arith.addf %29, %31 : vector<32x8xf32>
    %cst_19 = arith.constant 0.000000e+00 : f32
    %33 = vector.broadcast %cst_19 : f32 to vector<32x8xf32>
    %34 = arith.cmpf oge, %32, %33 : vector<32x8xf32>
    %35 = arith.extui %34 : vector<32x8xi1> to vector<32x8xi32>
    %36 = arith.sitofp %35 : vector<32x8xi32> to vector<32x8xf32>
    %cst_20 = arith.constant 1.000000e+00 : f32
    %37 = vector.broadcast %cst_20 : f32 to vector<32x8xf32>
    %38 = arith.subf %37, %28 : vector<32x8xf32>
    %39 = arith.mulf %38, %36 : vector<32x8xf32>
    %cst_21 = arith.constant 9.900000e-01 : f32
    %40 = vector.broadcast %cst_21 : f32 to vector<32x8xf32>
    %41 = arith.mulf %40, %3#0 : vector<32x8xf32>
    %42 = arith.addf %41, %39 : vector<32x8xf32>
    %cst_22 = arith.constant 1.000000e+00 : f32
    %43 = vector.broadcast %cst_22 : f32 to vector<32x8xf32>
    %44 = arith.mulf %3#1, %43 : vector<32x8xf32>
    %45 = arith.subf %42, %44 : vector<32x8xf32>
    %cst_23 = arith.constant 1.000000e+00 : f32
    %46 = vector.broadcast %cst_23 : f32 to vector<32x8xf32>
    %47 = arith.cmpf ogt, %45, %46 : vector<32x8xf32>
    %48 = arith.extui %47 : vector<32x8xi1> to vector<32x8xi32>
    %49 = arith.sitofp %48 : vector<32x8xi32> to vector<32x8xf32>
    %cst_24 = arith.constant 9.900000e-01 : f32
    %50 = vector.broadcast %cst_24 : f32 to vector<32x8xf32>
    %51 = arith.mulf %50, %45 : vector<32x8xf32>
    %52 = arith.addf %51, %39 : vector<32x8xf32>
    %cst_25 = arith.constant 1.000000e+00 : f32
    %53 = vector.broadcast %cst_25 : f32 to vector<32x8xf32>
    %54 = arith.mulf %49, %53 : vector<32x8xf32>
    %55 = arith.subf %52, %54 : vector<32x8xf32>
    %cst_26 = arith.constant 1.000000e+00 : f32
    %56 = vector.broadcast %cst_26 : f32 to vector<32x8xf32>
    %57 = arith.cmpf ogt, %55, %56 : vector<32x8xf32>
    %58 = arith.extui %57 : vector<32x8xi1> to vector<32x8xi32>
    %59 = arith.sitofp %58 : vector<32x8xi32> to vector<32x8xf32>
    %cst_27 = arith.constant 9.900000e-01 : f32
    %60 = vector.broadcast %cst_27 : f32 to vector<32x8xf32>
    %61 = arith.mulf %60, %55 : vector<32x8xf32>
    %62 = arith.addf %61, %39 : vector<32x8xf32>
    %cst_28 = arith.constant 1.000000e+00 : f32
    %63 = vector.broadcast %cst_28 : f32 to vector<32x8xf32>
    %64 = arith.mulf %59, %63 : vector<32x8xf32>
    %65 = arith.subf %62, %64 : vector<32x8xf32>
    %cst_29 = arith.constant 1.000000e+00 : f32
    %66 = vector.broadcast %cst_29 : f32 to vector<32x8xf32>
    %67 = arith.cmpf ogt, %65, %66 : vector<32x8xf32>
    %68 = arith.extui %67 : vector<32x8xi1> to vector<32x8xi32>
    %69 = arith.sitofp %68 : vector<32x8xi32> to vector<32x8xf32>
    %cst_30 = arith.constant 9.900000e-01 : f32
    %70 = vector.broadcast %cst_30 : f32 to vector<32x8xf32>
    %71 = arith.mulf %70, %65 : vector<32x8xf32>
    %72 = arith.addf %71, %39 : vector<32x8xf32>
    %cst_31 = arith.constant 1.000000e+00 : f32
    %73 = vector.broadcast %cst_31 : f32 to vector<32x8xf32>
    %74 = arith.mulf %69, %73 : vector<32x8xf32>
    %75 = arith.subf %72, %74 : vector<32x8xf32>
    %cst_32 = arith.constant 1.000000e+00 : f32
    %76 = vector.broadcast %cst_32 : f32 to vector<32x8xf32>
    %77 = arith.cmpf ogt, %75, %76 : vector<32x8xf32>
    %78 = arith.extui %77 : vector<32x8xi1> to vector<32x8xi32>
    %79 = arith.sitofp %78 : vector<32x8xi32> to vector<32x8xf32>
    %80 = vector.extract_strided_slice %13 {offsets = [32, 0], sizes = [32, 8], strides = [1, 1]} : vector<256x8xbf16> to vector<32x8xbf16>
    %c0_33 = arith.constant 0 : index
    %c0_34 = arith.constant 0 : index
    %81 = vector.load %arg4[%c0_33, %c0_34] : memref<96x32xbf16, #tpu.memory_space<vmem>>, vector<96x32xbf16>
    %cst_35 = arith.constant dense<0.000000e+00> : vector<96x8xf32>
    %82 = tpu.matmul %81, %80, %cst_35 {dimension_numbers = #tpu.dot_dimension_numbers<[1], [0], [0], [1], [0, 0, 1, 1], [], []>} : vector<96x32xbf16>, vector<32x8xbf16>, vector<96x8xf32> -> vector<96x8xf32>
    %c0_36 = arith.constant 0 : index
    %c0_37 = arith.constant 0 : index
    %83 = vector.load %arg5[%c0_36, %c0_37] : memref<96x8xf32, #tpu.memory_space<vmem>>, vector<96x8xf32>
    %84 = arith.addf %82, %83 : vector<96x8xf32>
    %85 = vector.extract_strided_slice %84 {offsets = [0, 0], sizes = [32, 8], strides = [1, 1]} : vector<96x8xf32> to vector<32x8xf32>
    %cst_38 = arith.constant 0.000000e+00 : f32
    %86 = vector.broadcast %cst_38 : f32 to vector<32x8xf32>
    %87 = arith.cmpf oge, %85, %86 : vector<32x8xf32>
    %88 = arith.extui %87 : vector<32x8xi1> to vector<32x8xi32>
    %89 = arith.sitofp %88 : vector<32x8xi32> to vector<32x8xf32>
    %90 = vector.extract_strided_slice %84 {offsets = [32, 0], sizes = [32, 8], strides = [1, 1]} : vector<96x8xf32> to vector<32x8xf32>
    %cst_39 = arith.constant 0.000000e+00 : f32
    %91 = vector.broadcast %cst_39 : f32 to vector<32x8xf32>
    %92 = arith.cmpf oge, %90, %91 : vector<32x8xf32>
    %93 = arith.extui %92 : vector<32x8xi1> to vector<32x8xi32>
    %94 = arith.sitofp %93 : vector<32x8xi32> to vector<32x8xf32>
    %95 = vector.extract_strided_slice %84 {offsets = [64, 0], sizes = [32, 8], strides = [1, 1]} : vector<96x8xf32> to vector<32x8xf32>
    %c0_40 = arith.constant 0 : index
    %c0_41 = arith.constant 0 : index
    %96 = vector.load %arg6[%c0_40, %c0_41] : memref<32x8xf32, #tpu.memory_space<vmem>>, vector<32x8xf32>
    %97 = arith.mulf %89, %96 : vector<32x8xf32>
    %98 = arith.addf %95, %97 : vector<32x8xf32>
    %cst_42 = arith.constant 0.000000e+00 : f32
    %99 = vector.broadcast %cst_42 : f32 to vector<32x8xf32>
    %100 = arith.cmpf oge, %98, %99 : vector<32x8xf32>
    %101 = arith.extui %100 : vector<32x8xi1> to vector<32x8xi32>
    %102 = arith.sitofp %101 : vector<32x8xi32> to vector<32x8xf32>
    %cst_43 = arith.constant 1.000000e+00 : f32
    %103 = vector.broadcast %cst_43 : f32 to vector<32x8xf32>
    %104 = arith.subf %103, %94 : vector<32x8xf32>
    %105 = arith.mulf %104, %102 : vector<32x8xf32>
    %cst_44 = arith.constant 9.900000e-01 : f32
    %106 = vector.broadcast %cst_44 : f32 to vector<32x8xf32>
    %107 = arith.mulf %106, %75 : vector<32x8xf32>
    %108 = arith.addf %107, %105 : vector<32x8xf32>
    %cst_45 = arith.constant 1.000000e+00 : f32
    %109 = vector.broadcast %cst_45 : f32 to vector<32x8xf32>
    %110 = arith.mulf %79, %109 : vector<32x8xf32>
    %111 = arith.subf %108, %110 : vector<32x8xf32>
    %cst_46 = arith.constant 1.000000e+00 : f32
    %112 = vector.broadcast %cst_46 : f32 to vector<32x8xf32>
    %113 = arith.cmpf ogt, %111, %112 : vector<32x8xf32>
    %114 = arith.extui %113 : vector<32x8xi1> to vector<32x8xi32>
    %115 = arith.sitofp %114 : vector<32x8xi32> to vector<32x8xf32>
    %cst_47 = arith.constant 9.900000e-01 : f32
    %116 = vector.broadcast %cst_47 : f32 to vector<32x8xf32>
    %117 = arith.mulf %116, %111 : vector<32x8xf32>
    %118 = arith.addf %117, %105 : vector<32x8xf32>
    %cst_48 = arith.constant 1.000000e+00 : f32
    %119 = vector.broadcast %cst_48 : f32 to vector<32x8xf32>
    %120 = arith.mulf %115, %119 : vector<32x8xf32>
    %121 = arith.subf %118, %120 : vector<32x8xf32>
    %cst_49 = arith.constant 1.000000e+00 : f32
    %122 = vector.broadcast %cst_49 : f32 to vector<32x8xf32>
    %123 = arith.cmpf ogt, %121, %122 : vector<32x8xf32>
    %124 = arith.extui %123 : vector<32x8xi1> to vector<32x8xi32>
    %125 = arith.sitofp %124 : vector<32x8xi32> to vector<32x8xf32>
    %cst_50 = arith.constant 9.900000e-01 : f32
    %126 = vector.broadcast %cst_50 : f32 to vector<32x8xf32>
    %127 = arith.mulf %126, %121 : vector<32x8xf32>
    %128 = arith.addf %127, %105 : vector<32x8xf32>
    %cst_51 = arith.constant 1.000000e+00 : f32
    %129 = vector.broadcast %cst_51 : f32 to vector<32x8xf32>
    %130 = arith.mulf %125, %129 : vector<32x8xf32>
    %131 = arith.subf %128, %130 : vector<32x8xf32>
    %cst_52 = arith.constant 1.000000e+00 : f32
    %132 = vector.broadcast %cst_52 : f32 to vector<32x8xf32>
    %133 = arith.cmpf ogt, %131, %132 : vector<32x8xf32>
    %134 = arith.extui %133 : vector<32x8xi1> to vector<32x8xi32>
    %135 = arith.sitofp %134 : vector<32x8xi32> to vector<32x8xf32>
    %cst_53 = arith.constant 9.900000e-01 : f32
    %136 = vector.broadcast %cst_53 : f32 to vector<32x8xf32>
    %137 = arith.mulf %136, %131 : vector<32x8xf32>
    %138 = arith.addf %137, %105 : vector<32x8xf32>
    %cst_54 = arith.constant 1.000000e+00 : f32
    %139 = vector.broadcast %cst_54 : f32 to vector<32x8xf32>
    %140 = arith.mulf %135, %139 : vector<32x8xf32>
    %141 = arith.subf %138, %140 : vector<32x8xf32>
    %cst_55 = arith.constant 1.000000e+00 : f32
    %142 = vector.broadcast %cst_55 : f32 to vector<32x8xf32>
    %143 = arith.cmpf ogt, %141, %142 : vector<32x8xf32>
    %144 = arith.extui %143 : vector<32x8xi1> to vector<32x8xi32>
    %145 = arith.sitofp %144 : vector<32x8xi32> to vector<32x8xf32>
    %146 = vector.extract_strided_slice %13 {offsets = [64, 0], sizes = [32, 8], strides = [1, 1]} : vector<256x8xbf16> to vector<32x8xbf16>
    %c0_56 = arith.constant 0 : index
    %c0_57 = arith.constant 0 : index
    %147 = vector.load %arg4[%c0_56, %c0_57] : memref<96x32xbf16, #tpu.memory_space<vmem>>, vector<96x32xbf16>
    %cst_58 = arith.constant dense<0.000000e+00> : vector<96x8xf32>
    %148 = tpu.matmul %147, %146, %cst_58 {dimension_numbers = #tpu.dot_dimension_numbers<[1], [0], [0], [1], [0, 0, 1, 1], [], []>} : vector<96x32xbf16>, vector<32x8xbf16>, vector<96x8xf32> -> vector<96x8xf32>
    %c0_59 = arith.constant 0 : index
    %c0_60 = arith.constant 0 : index
    %149 = vector.load %arg5[%c0_59, %c0_60] : memref<96x8xf32, #tpu.memory_space<vmem>>, vector<96x8xf32>
    %150 = arith.addf %148, %149 : vector<96x8xf32>
    %151 = vector.extract_strided_slice %150 {offsets = [0, 0], sizes = [32, 8], strides = [1, 1]} : vector<96x8xf32> to vector<32x8xf32>
    %cst_61 = arith.constant 0.000000e+00 : f32
    %152 = vector.broadcast %cst_61 : f32 to vector<32x8xf32>
    %153 = arith.cmpf oge, %151, %152 : vector<32x8xf32>
    %154 = arith.extui %153 : vector<32x8xi1> to vector<32x8xi32>
    %155 = arith.sitofp %154 : vector<32x8xi32> to vector<32x8xf32>
    %156 = vector.extract_strided_slice %150 {offsets = [32, 0], sizes = [32, 8], strides = [1, 1]} : vector<96x8xf32> to vector<32x8xf32>
    %cst_62 = arith.constant 0.000000e+00 : f32
    %157 = vector.broadcast %cst_62 : f32 to vector<32x8xf32>
    %158 = arith.cmpf oge, %156, %157 : vector<32x8xf32>
    %159 = arith.extui %158 : vector<32x8xi1> to vector<32x8xi32>
    %160 = arith.sitofp %159 : vector<32x8xi32> to vector<32x8xf32>
    %161 = vector.extract_strided_slice %150 {offsets = [64, 0], sizes = [32, 8], strides = [1, 1]} : vector<96x8xf32> to vector<32x8xf32>
    %c0_63 = arith.constant 0 : index
    %c0_64 = arith.constant 0 : index
    %162 = vector.load %arg6[%c0_63, %c0_64] : memref<32x8xf32, #tpu.memory_space<vmem>>, vector<32x8xf32>
    %163 = arith.mulf %155, %162 : vector<32x8xf32>
    %164 = arith.addf %161, %163 : vector<32x8xf32>
    %cst_65 = arith.constant 0.000000e+00 : f32
    %165 = vector.broadcast %cst_65 : f32 to vector<32x8xf32>
    %166 = arith.cmpf oge, %164, %165 : vector<32x8xf32>
    %167 = arith.extui %166 : vector<32x8xi1> to vector<32x8xi32>
    %168 = arith.sitofp %167 : vector<32x8xi32> to vector<32x8xf32>
    %cst_66 = arith.constant 1.000000e+00 : f32
    %169 = vector.broadcast %cst_66 : f32 to vector<32x8xf32>
    %170 = arith.subf %169, %160 : vector<32x8xf32>
    %171 = arith.mulf %170, %168 : vector<32x8xf32>
    %cst_67 = arith.constant 9.900000e-01 : f32
    %172 = vector.broadcast %cst_67 : f32 to vector<32x8xf32>
    %173 = arith.mulf %172, %141 : vector<32x8xf32>
    %174 = arith.addf %173, %171 : vector<32x8xf32>
    %cst_68 = arith.constant 1.000000e+00 : f32
    %175 = vector.broadcast %cst_68 : f32 to vector<32x8xf32>
    %176 = arith.mulf %145, %175 : vector<32x8xf32>
    %177 = arith.subf %174, %176 : vector<32x8xf32>
    %cst_69 = arith.constant 1.000000e+00 : f32
    %178 = vector.broadcast %cst_69 : f32 to vector<32x8xf32>
    %179 = arith.cmpf ogt, %177, %178 : vector<32x8xf32>
    %180 = arith.extui %179 : vector<32x8xi1> to vector<32x8xi32>
    %181 = arith.sitofp %180 : vector<32x8xi32> to vector<32x8xf32>
    %cst_70 = arith.constant 9.900000e-01 : f32
    %182 = vector.broadcast %cst_70 : f32 to vector<32x8xf32>
    %183 = arith.mulf %182, %177 : vector<32x8xf32>
    %184 = arith.addf %183, %171 : vector<32x8xf32>
    %cst_71 = arith.constant 1.000000e+00 : f32
    %185 = vector.broadcast %cst_71 : f32 to vector<32x8xf32>
    %186 = arith.mulf %181, %185 : vector<32x8xf32>
    %187 = arith.subf %184, %186 : vector<32x8xf32>
    %cst_72 = arith.constant 1.000000e+00 : f32
    %188 = vector.broadcast %cst_72 : f32 to vector<32x8xf32>
    %189 = arith.cmpf ogt, %187, %188 : vector<32x8xf32>
    %190 = arith.extui %189 : vector<32x8xi1> to vector<32x8xi32>
    %191 = arith.sitofp %190 : vector<32x8xi32> to vector<32x8xf32>
    %cst_73 = arith.constant 9.900000e-01 : f32
    %192 = vector.broadcast %cst_73 : f32 to vector<32x8xf32>
    %193 = arith.mulf %192, %187 : vector<32x8xf32>
    %194 = arith.addf %193, %171 : vector<32x8xf32>
    %cst_74 = arith.constant 1.000000e+00 : f32
    %195 = vector.broadcast %cst_74 : f32 to vector<32x8xf32>
    %196 = arith.mulf %191, %195 : vector<32x8xf32>
    %197 = arith.subf %194, %196 : vector<32x8xf32>
    %cst_75 = arith.constant 1.000000e+00 : f32
    %198 = vector.broadcast %cst_75 : f32 to vector<32x8xf32>
    %199 = arith.cmpf ogt, %197, %198 : vector<32x8xf32>
    %200 = arith.extui %199 : vector<32x8xi1> to vector<32x8xi32>
    %201 = arith.sitofp %200 : vector<32x8xi32> to vector<32x8xf32>
    %cst_76 = arith.constant 9.900000e-01 : f32
    %202 = vector.broadcast %cst_76 : f32 to vector<32x8xf32>
    %203 = arith.mulf %202, %197 : vector<32x8xf32>
    %204 = arith.addf %203, %171 : vector<32x8xf32>
    %cst_77 = arith.constant 1.000000e+00 : f32
    %205 = vector.broadcast %cst_77 : f32 to vector<32x8xf32>
    %206 = arith.mulf %201, %205 : vector<32x8xf32>
    %207 = arith.subf %204, %206 : vector<32x8xf32>
    %cst_78 = arith.constant 1.000000e+00 : f32
    %208 = vector.broadcast %cst_78 : f32 to vector<32x8xf32>
    %209 = arith.cmpf ogt, %207, %208 : vector<32x8xf32>
    %210 = arith.extui %209 : vector<32x8xi1> to vector<32x8xi32>
    %211 = arith.sitofp %210 : vector<32x8xi32> to vector<32x8xf32>
    %212 = vector.extract_strided_slice %13 {offsets = [96, 0], sizes = [32, 8], strides = [1, 1]} : vector<256x8xbf16> to vector<32x8xbf16>
    %c0_79 = arith.constant 0 : index
    %c0_80 = arith.constant 0 : index
    %213 = vector.load %arg4[%c0_79, %c0_80] : memref<96x32xbf16, #tpu.memory_space<vmem>>, vector<96x32xbf16>
    %cst_81 = arith.constant dense<0.000000e+00> : vector<96x8xf32>
    %214 = tpu.matmul %213, %212, %cst_81 {dimension_numbers = #tpu.dot_dimension_numbers<[1], [0], [0], [1], [0, 0, 1, 1], [], []>} : vector<96x32xbf16>, vector<32x8xbf16>, vector<96x8xf32> -> vector<96x8xf32>
    %c0_82 = arith.constant 0 : index
    %c0_83 = arith.constant 0 : index
    %215 = vector.load %arg5[%c0_82, %c0_83] : memref<96x8xf32, #tpu.memory_space<vmem>>, vector<96x8xf32>
    %216 = arith.addf %214, %215 : vector<96x8xf32>
    %217 = vector.extract_strided_slice %216 {offsets = [0, 0], sizes = [32, 8], strides = [1, 1]} : vector<96x8xf32> to vector<32x8xf32>
    %cst_84 = arith.constant 0.000000e+00 : f32
    %218 = vector.broadcast %cst_84 : f32 to vector<32x8xf32>
    %219 = arith.cmpf oge, %217, %218 : vector<32x8xf32>
    %220 = arith.extui %219 : vector<32x8xi1> to vector<32x8xi32>
    %221 = arith.sitofp %220 : vector<32x8xi32> to vector<32x8xf32>
    %222 = vector.extract_strided_slice %216 {offsets = [32, 0], sizes = [32, 8], strides = [1, 1]} : vector<96x8xf32> to vector<32x8xf32>
    %cst_85 = arith.constant 0.000000e+00 : f32
    %223 = vector.broadcast %cst_85 : f32 to vector<32x8xf32>
    %224 = arith.cmpf oge, %222, %223 : vector<32x8xf32>
    %225 = arith.extui %224 : vector<32x8xi1> to vector<32x8xi32>
    %226 = arith.sitofp %225 : vector<32x8xi32> to vector<32x8xf32>
    %227 = vector.extract_strided_slice %216 {offsets = [64, 0], sizes = [32, 8], strides = [1, 1]} : vector<96x8xf32> to vector<32x8xf32>
    %c0_86 = arith.constant 0 : index
    %c0_87 = arith.constant 0 : index
    %228 = vector.load %arg6[%c0_86, %c0_87] : memref<32x8xf32, #tpu.memory_space<vmem>>, vector<32x8xf32>
    %229 = arith.mulf %221, %228 : vector<32x8xf32>
    %230 = arith.addf %227, %229 : vector<32x8xf32>
    %cst_88 = arith.constant 0.000000e+00 : f32
    %231 = vector.broadcast %cst_88 : f32 to vector<32x8xf32>
    %232 = arith.cmpf oge, %230, %231 : vector<32x8xf32>
    %233 = arith.extui %232 : vector<32x8xi1> to vector<32x8xi32>
    %234 = arith.sitofp %233 : vector<32x8xi32> to vector<32x8xf32>
    %cst_89 = arith.constant 1.000000e+00 : f32
    %235 = vector.broadcast %cst_89 : f32 to vector<32x8xf32>
    %236 = arith.subf %235, %226 : vector<32x8xf32>
    %237 = arith.mulf %236, %234 : vector<32x8xf32>
    %cst_90 = arith.constant 9.900000e-01 : f32
    %238 = vector.broadcast %cst_90 : f32 to vector<32x8xf32>
    %239 = arith.mulf %238, %207 : vector<32x8xf32>
    %240 = arith.addf %239, %237 : vector<32x8xf32>
    %cst_91 = arith.constant 1.000000e+00 : f32
    %241 = vector.broadcast %cst_91 : f32 to vector<32x8xf32>
    %242 = arith.mulf %211, %241 : vector<32x8xf32>
    %243 = arith.subf %240, %242 : vector<32x8xf32>
    %cst_92 = arith.constant 1.000000e+00 : f32
    %244 = vector.broadcast %cst_92 : f32 to vector<32x8xf32>
    %245 = arith.cmpf ogt, %243, %244 : vector<32x8xf32>
    %246 = arith.extui %245 : vector<32x8xi1> to vector<32x8xi32>
    %247 = arith.sitofp %246 : vector<32x8xi32> to vector<32x8xf32>
    %cst_93 = arith.constant 9.900000e-01 : f32
    %248 = vector.broadcast %cst_93 : f32 to vector<32x8xf32>
    %249 = arith.mulf %248, %243 : vector<32x8xf32>
    %250 = arith.addf %249, %237 : vector<32x8xf32>
    %cst_94 = arith.constant 1.000000e+00 : f32
    %251 = vector.broadcast %cst_94 : f32 to vector<32x8xf32>
    %252 = arith.mulf %247, %251 : vector<32x8xf32>
    %253 = arith.subf %250, %252 : vector<32x8xf32>
    %cst_95 = arith.constant 1.000000e+00 : f32
    %254 = vector.broadcast %cst_95 : f32 to vector<32x8xf32>
    %255 = arith.cmpf ogt, %253, %254 : vector<32x8xf32>
    %256 = arith.extui %255 : vector<32x8xi1> to vector<32x8xi32>
    %257 = arith.sitofp %256 : vector<32x8xi32> to vector<32x8xf32>
    %cst_96 = arith.constant 9.900000e-01 : f32
    %258 = vector.broadcast %cst_96 : f32 to vector<32x8xf32>
    %259 = arith.mulf %258, %253 : vector<32x8xf32>
    %260 = arith.addf %259, %237 : vector<32x8xf32>
    %cst_97 = arith.constant 1.000000e+00 : f32
    %261 = vector.broadcast %cst_97 : f32 to vector<32x8xf32>
    %262 = arith.mulf %257, %261 : vector<32x8xf32>
    %263 = arith.subf %260, %262 : vector<32x8xf32>
    %cst_98 = arith.constant 1.000000e+00 : f32
    %264 = vector.broadcast %cst_98 : f32 to vector<32x8xf32>
    %265 = arith.cmpf ogt, %263, %264 : vector<32x8xf32>
    %266 = arith.extui %265 : vector<32x8xi1> to vector<32x8xi32>
    %267 = arith.sitofp %266 : vector<32x8xi32> to vector<32x8xf32>
    %cst_99 = arith.constant 9.900000e-01 : f32
    %268 = vector.broadcast %cst_99 : f32 to vector<32x8xf32>
    %269 = arith.mulf %268, %263 : vector<32x8xf32>
    %270 = arith.addf %269, %237 : vector<32x8xf32>
    %cst_100 = arith.constant 1.000000e+00 : f32
    %271 = vector.broadcast %cst_100 : f32 to vector<32x8xf32>
    %272 = arith.mulf %267, %271 : vector<32x8xf32>
    %273 = arith.subf %270, %272 : vector<32x8xf32>
    %cst_101 = arith.constant 1.000000e+00 : f32
    %274 = vector.broadcast %cst_101 : f32 to vector<32x8xf32>
    %275 = arith.cmpf ogt, %273, %274 : vector<32x8xf32>
    %276 = arith.extui %275 : vector<32x8xi1> to vector<32x8xi32>
    %277 = arith.sitofp %276 : vector<32x8xi32> to vector<32x8xf32>
    %278 = vector.extract_strided_slice %13 {offsets = [128, 0], sizes = [32, 8], strides = [1, 1]} : vector<256x8xbf16> to vector<32x8xbf16>
    %c0_102 = arith.constant 0 : index
    %c0_103 = arith.constant 0 : index
    %279 = vector.load %arg4[%c0_102, %c0_103] : memref<96x32xbf16, #tpu.memory_space<vmem>>, vector<96x32xbf16>
    %cst_104 = arith.constant dense<0.000000e+00> : vector<96x8xf32>
    %280 = tpu.matmul %279, %278, %cst_104 {dimension_numbers = #tpu.dot_dimension_numbers<[1], [0], [0], [1], [0, 0, 1, 1], [], []>} : vector<96x32xbf16>, vector<32x8xbf16>, vector<96x8xf32> -> vector<96x8xf32>
    %c0_105 = arith.constant 0 : index
    %c0_106 = arith.constant 0 : index
    %281 = vector.load %arg5[%c0_105, %c0_106] : memref<96x8xf32, #tpu.memory_space<vmem>>, vector<96x8xf32>
    %282 = arith.addf %280, %281 : vector<96x8xf32>
    %283 = vector.extract_strided_slice %282 {offsets = [0, 0], sizes = [32, 8], strides = [1, 1]} : vector<96x8xf32> to vector<32x8xf32>
    %cst_107 = arith.constant 0.000000e+00 : f32
    %284 = vector.broadcast %cst_107 : f32 to vector<32x8xf32>
    %285 = arith.cmpf oge, %283, %284 : vector<32x8xf32>
    %286 = arith.extui %285 : vector<32x8xi1> to vector<32x8xi32>
    %287 = arith.sitofp %286 : vector<32x8xi32> to vector<32x8xf32>
    %288 = vector.extract_strided_slice %282 {offsets = [32, 0], sizes = [32, 8], strides = [1, 1]} : vector<96x8xf32> to vector<32x8xf32>
    %cst_108 = arith.constant 0.000000e+00 : f32
    %289 = vector.broadcast %cst_108 : f32 to vector<32x8xf32>
    %290 = arith.cmpf oge, %288, %289 : vector<32x8xf32>
    %291 = arith.extui %290 : vector<32x8xi1> to vector<32x8xi32>
    %292 = arith.sitofp %291 : vector<32x8xi32> to vector<32x8xf32>
    %293 = vector.extract_strided_slice %282 {offsets = [64, 0], sizes = [32, 8], strides = [1, 1]} : vector<96x8xf32> to vector<32x8xf32>
    %c0_109 = arith.constant 0 : index
    %c0_110 = arith.constant 0 : index
    %294 = vector.load %arg6[%c0_109, %c0_110] : memref<32x8xf32, #tpu.memory_space<vmem>>, vector<32x8xf32>
    %295 = arith.mulf %287, %294 : vector<32x8xf32>
    %296 = arith.addf %293, %295 : vector<32x8xf32>
    %cst_111 = arith.constant 0.000000e+00 : f32
    %297 = vector.broadcast %cst_111 : f32 to vector<32x8xf32>
    %298 = arith.cmpf oge, %296, %297 : vector<32x8xf32>
    %299 = arith.extui %298 : vector<32x8xi1> to vector<32x8xi32>
    %300 = arith.sitofp %299 : vector<32x8xi32> to vector<32x8xf32>
    %cst_112 = arith.constant 1.000000e+00 : f32
    %301 = vector.broadcast %cst_112 : f32 to vector<32x8xf32>
    %302 = arith.subf %301, %292 : vector<32x8xf32>
    %303 = arith.mulf %302, %300 : vector<32x8xf32>
    %cst_113 = arith.constant 9.900000e-01 : f32
    %304 = vector.broadcast %cst_113 : f32 to vector<32x8xf32>
    %305 = arith.mulf %304, %273 : vector<32x8xf32>
    %306 = arith.addf %305, %303 : vector<32x8xf32>
    %cst_114 = arith.constant 1.000000e+00 : f32
    %307 = vector.broadcast %cst_114 : f32 to vector<32x8xf32>
    %308 = arith.mulf %277, %307 : vector<32x8xf32>
    %309 = arith.subf %306, %308 : vector<32x8xf32>
    %cst_115 = arith.constant 1.000000e+00 : f32
    %310 = vector.broadcast %cst_115 : f32 to vector<32x8xf32>
    %311 = arith.cmpf ogt, %309, %310 : vector<32x8xf32>
    %312 = arith.extui %311 : vector<32x8xi1> to vector<32x8xi32>
    %313 = arith.sitofp %312 : vector<32x8xi32> to vector<32x8xf32>
    %cst_116 = arith.constant 9.900000e-01 : f32
    %314 = vector.broadcast %cst_116 : f32 to vector<32x8xf32>
    %315 = arith.mulf %314, %309 : vector<32x8xf32>
    %316 = arith.addf %315, %303 : vector<32x8xf32>
    %cst_117 = arith.constant 1.000000e+00 : f32
    %317 = vector.broadcast %cst_117 : f32 to vector<32x8xf32>
    %318 = arith.mulf %313, %317 : vector<32x8xf32>
    %319 = arith.subf %316, %318 : vector<32x8xf32>
    %cst_118 = arith.constant 1.000000e+00 : f32
    %320 = vector.broadcast %cst_118 : f32 to vector<32x8xf32>
    %321 = arith.cmpf ogt, %319, %320 : vector<32x8xf32>
    %322 = arith.extui %321 : vector<32x8xi1> to vector<32x8xi32>
    %323 = arith.sitofp %322 : vector<32x8xi32> to vector<32x8xf32>
    %cst_119 = arith.constant 9.900000e-01 : f32
    %324 = vector.broadcast %cst_119 : f32 to vector<32x8xf32>
    %325 = arith.mulf %324, %319 : vector<32x8xf32>
    %326 = arith.addf %325, %303 : vector<32x8xf32>
    %cst_120 = arith.constant 1.000000e+00 : f32
    %327 = vector.broadcast %cst_120 : f32 to vector<32x8xf32>
    %328 = arith.mulf %323, %327 : vector<32x8xf32>
    %329 = arith.subf %326, %328 : vector<32x8xf32>
    %cst_121 = arith.constant 1.000000e+00 : f32
    %330 = vector.broadcast %cst_121 : f32 to vector<32x8xf32>
    %331 = arith.cmpf ogt, %329, %330 : vector<32x8xf32>
    %332 = arith.extui %331 : vector<32x8xi1> to vector<32x8xi32>
    %333 = arith.sitofp %332 : vector<32x8xi32> to vector<32x8xf32>
    %cst_122 = arith.constant 9.900000e-01 : f32
    %334 = vector.broadcast %cst_122 : f32 to vector<32x8xf32>
    %335 = arith.mulf %334, %329 : vector<32x8xf32>
    %336 = arith.addf %335, %303 : vector<32x8xf32>
    %cst_123 = arith.constant 1.000000e+00 : f32
    %337 = vector.broadcast %cst_123 : f32 to vector<32x8xf32>
    %338 = arith.mulf %333, %337 : vector<32x8xf32>
    %339 = arith.subf %336, %338 : vector<32x8xf32>
    %cst_124 = arith.constant 1.000000e+00 : f32
    %340 = vector.broadcast %cst_124 : f32 to vector<32x8xf32>
    %341 = arith.cmpf ogt, %339, %340 : vector<32x8xf32>
    %342 = arith.extui %341 : vector<32x8xi1> to vector<32x8xi32>
    %343 = arith.sitofp %342 : vector<32x8xi32> to vector<32x8xf32>
    %344 = vector.extract_strided_slice %13 {offsets = [160, 0], sizes = [32, 8], strides = [1, 1]} : vector<256x8xbf16> to vector<32x8xbf16>
    %c0_125 = arith.constant 0 : index
    %c0_126 = arith.constant 0 : index
    %345 = vector.load %arg4[%c0_125, %c0_126] : memref<96x32xbf16, #tpu.memory_space<vmem>>, vector<96x32xbf16>
    %cst_127 = arith.constant dense<0.000000e+00> : vector<96x8xf32>
    %346 = tpu.matmul %345, %344, %cst_127 {dimension_numbers = #tpu.dot_dimension_numbers<[1], [0], [0], [1], [0, 0, 1, 1], [], []>} : vector<96x32xbf16>, vector<32x8xbf16>, vector<96x8xf32> -> vector<96x8xf32>
    %c0_128 = arith.constant 0 : index
    %c0_129 = arith.constant 0 : index
    %347 = vector.load %arg5[%c0_128, %c0_129] : memref<96x8xf32, #tpu.memory_space<vmem>>, vector<96x8xf32>
    %348 = arith.addf %346, %347 : vector<96x8xf32>
    %349 = vector.extract_strided_slice %348 {offsets = [0, 0], sizes = [32, 8], strides = [1, 1]} : vector<96x8xf32> to vector<32x8xf32>
    %cst_130 = arith.constant 0.000000e+00 : f32
    %350 = vector.broadcast %cst_130 : f32 to vector<32x8xf32>
    %351 = arith.cmpf oge, %349, %350 : vector<32x8xf32>
    %352 = arith.extui %351 : vector<32x8xi1> to vector<32x8xi32>
    %353 = arith.sitofp %352 : vector<32x8xi32> to vector<32x8xf32>
    %354 = vector.extract_strided_slice %348 {offsets = [32, 0], sizes = [32, 8], strides = [1, 1]} : vector<96x8xf32> to vector<32x8xf32>
    %cst_131 = arith.constant 0.000000e+00 : f32
    %355 = vector.broadcast %cst_131 : f32 to vector<32x8xf32>
    %356 = arith.cmpf oge, %354, %355 : vector<32x8xf32>
    %357 = arith.extui %356 : vector<32x8xi1> to vector<32x8xi32>
    %358 = arith.sitofp %357 : vector<32x8xi32> to vector<32x8xf32>
    %359 = vector.extract_strided_slice %348 {offsets = [64, 0], sizes = [32, 8], strides = [1, 1]} : vector<96x8xf32> to vector<32x8xf32>
    %c0_132 = arith.constant 0 : index
    %c0_133 = arith.constant 0 : index
    %360 = vector.load %arg6[%c0_132, %c0_133] : memref<32x8xf32, #tpu.memory_space<vmem>>, vector<32x8xf32>
    %361 = arith.mulf %353, %360 : vector<32x8xf32>
    %362 = arith.addf %359, %361 : vector<32x8xf32>
    %cst_134 = arith.constant 0.000000e+00 : f32
    %363 = vector.broadcast %cst_134 : f32 to vector<32x8xf32>
    %364 = arith.cmpf oge, %362, %363 : vector<32x8xf32>
    %365 = arith.extui %364 : vector<32x8xi1> to vector<32x8xi32>
    %366 = arith.sitofp %365 : vector<32x8xi32> to vector<32x8xf32>
    %cst_135 = arith.constant 1.000000e+00 : f32
    %367 = vector.broadcast %cst_135 : f32 to vector<32x8xf32>
    %368 = arith.subf %367, %358 : vector<32x8xf32>
    %369 = arith.mulf %368, %366 : vector<32x8xf32>
    %cst_136 = arith.constant 9.900000e-01 : f32
    %370 = vector.broadcast %cst_136 : f32 to vector<32x8xf32>
    %371 = arith.mulf %370, %339 : vector<32x8xf32>
    %372 = arith.addf %371, %369 : vector<32x8xf32>
    %cst_137 = arith.constant 1.000000e+00 : f32
    %373 = vector.broadcast %cst_137 : f32 to vector<32x8xf32>
    %374 = arith.mulf %343, %373 : vector<32x8xf32>
    %375 = arith.subf %372, %374 : vector<32x8xf32>
    %cst_138 = arith.constant 1.000000e+00 : f32
    %376 = vector.broadcast %cst_138 : f32 to vector<32x8xf32>
    %377 = arith.cmpf ogt, %375, %376 : vector<32x8xf32>
    %378 = arith.extui %377 : vector<32x8xi1> to vector<32x8xi32>
    %379 = arith.sitofp %378 : vector<32x8xi32> to vector<32x8xf32>
    %cst_139 = arith.constant 9.900000e-01 : f32
    %380 = vector.broadcast %cst_139 : f32 to vector<32x8xf32>
    %381 = arith.mulf %380, %375 : vector<32x8xf32>
    %382 = arith.addf %381, %369 : vector<32x8xf32>
    %cst_140 = arith.constant 1.000000e+00 : f32
    %383 = vector.broadcast %cst_140 : f32 to vector<32x8xf32>
    %384 = arith.mulf %379, %383 : vector<32x8xf32>
    %385 = arith.subf %382, %384 : vector<32x8xf32>
    %cst_141 = arith.constant 1.000000e+00 : f32
    %386 = vector.broadcast %cst_141 : f32 to vector<32x8xf32>
    %387 = arith.cmpf ogt, %385, %386 : vector<32x8xf32>
    %388 = arith.extui %387 : vector<32x8xi1> to vector<32x8xi32>
    %389 = arith.sitofp %388 : vector<32x8xi32> to vector<32x8xf32>
    %cst_142 = arith.constant 9.900000e-01 : f32
    %390 = vector.broadcast %cst_142 : f32 to vector<32x8xf32>
    %391 = arith.mulf %390, %385 : vector<32x8xf32>
    %392 = arith.addf %391, %369 : vector<32x8xf32>
    %cst_143 = arith.constant 1.000000e+00 : f32
    %393 = vector.broadcast %cst_143 : f32 to vector<32x8xf32>
    %394 = arith.mulf %389, %393 : vector<32x8xf32>
    %395 = arith.subf %392, %394 : vector<32x8xf32>
    %cst_144 = arith.constant 1.000000e+00 : f32
    %396 = vector.broadcast %cst_144 : f32 to vector<32x8xf32>
    %397 = arith.cmpf ogt, %395, %396 : vector<32x8xf32>
    %398 = arith.extui %397 : vector<32x8xi1> to vector<32x8xi32>
    %399 = arith.sitofp %398 : vector<32x8xi32> to vector<32x8xf32>
    %cst_145 = arith.constant 9.900000e-01 : f32
    %400 = vector.broadcast %cst_145 : f32 to vector<32x8xf32>
    %401 = arith.mulf %400, %395 : vector<32x8xf32>
    %402 = arith.addf %401, %369 : vector<32x8xf32>
    %cst_146 = arith.constant 1.000000e+00 : f32
    %403 = vector.broadcast %cst_146 : f32 to vector<32x8xf32>
    %404 = arith.mulf %399, %403 : vector<32x8xf32>
    %405 = arith.subf %402, %404 : vector<32x8xf32>
    %cst_147 = arith.constant 1.000000e+00 : f32
    %406 = vector.broadcast %cst_147 : f32 to vector<32x8xf32>
    %407 = arith.cmpf ogt, %405, %406 : vector<32x8xf32>
    %408 = arith.extui %407 : vector<32x8xi1> to vector<32x8xi32>
    %409 = arith.sitofp %408 : vector<32x8xi32> to vector<32x8xf32>
    %410 = vector.extract_strided_slice %13 {offsets = [192, 0], sizes = [32, 8], strides = [1, 1]} : vector<256x8xbf16> to vector<32x8xbf16>
    %c0_148 = arith.constant 0 : index
    %c0_149 = arith.constant 0 : index
    %411 = vector.load %arg4[%c0_148, %c0_149] : memref<96x32xbf16, #tpu.memory_space<vmem>>, vector<96x32xbf16>
    %cst_150 = arith.constant dense<0.000000e+00> : vector<96x8xf32>
    %412 = tpu.matmul %411, %410, %cst_150 {dimension_numbers = #tpu.dot_dimension_numbers<[1], [0], [0], [1], [0, 0, 1, 1], [], []>} : vector<96x32xbf16>, vector<32x8xbf16>, vector<96x8xf32> -> vector<96x8xf32>
    %c0_151 = arith.constant 0 : index
    %c0_152 = arith.constant 0 : index
    %413 = vector.load %arg5[%c0_151, %c0_152] : memref<96x8xf32, #tpu.memory_space<vmem>>, vector<96x8xf32>
    %414 = arith.addf %412, %413 : vector<96x8xf32>
    %415 = vector.extract_strided_slice %414 {offsets = [0, 0], sizes = [32, 8], strides = [1, 1]} : vector<96x8xf32> to vector<32x8xf32>
    %cst_153 = arith.constant 0.000000e+00 : f32
    %416 = vector.broadcast %cst_153 : f32 to vector<32x8xf32>
    %417 = arith.cmpf oge, %415, %416 : vector<32x8xf32>
    %418 = arith.extui %417 : vector<32x8xi1> to vector<32x8xi32>
    %419 = arith.sitofp %418 : vector<32x8xi32> to vector<32x8xf32>
    %420 = vector.extract_strided_slice %414 {offsets = [32, 0], sizes = [32, 8], strides = [1, 1]} : vector<96x8xf32> to vector<32x8xf32>
    %cst_154 = arith.constant 0.000000e+00 : f32
    %421 = vector.broadcast %cst_154 : f32 to vector<32x8xf32>
    %422 = arith.cmpf oge, %420, %421 : vector<32x8xf32>
    %423 = arith.extui %422 : vector<32x8xi1> to vector<32x8xi32>
    %424 = arith.sitofp %423 : vector<32x8xi32> to vector<32x8xf32>
    %425 = vector.extract_strided_slice %414 {offsets = [64, 0], sizes = [32, 8], strides = [1, 1]} : vector<96x8xf32> to vector<32x8xf32>
    %c0_155 = arith.constant 0 : index
    %c0_156 = arith.constant 0 : index
    %426 = vector.load %arg6[%c0_155, %c0_156] : memref<32x8xf32, #tpu.memory_space<vmem>>, vector<32x8xf32>
    %427 = arith.mulf %419, %426 : vector<32x8xf32>
    %428 = arith.addf %425, %427 : vector<32x8xf32>
    %cst_157 = arith.constant 0.000000e+00 : f32
    %429 = vector.broadcast %cst_157 : f32 to vector<32x8xf32>
    %430 = arith.cmpf oge, %428, %429 : vector<32x8xf32>
    %431 = arith.extui %430 : vector<32x8xi1> to vector<32x8xi32>
    %432 = arith.sitofp %431 : vector<32x8xi32> to vector<32x8xf32>
    %cst_158 = arith.constant 1.000000e+00 : f32
    %433 = vector.broadcast %cst_158 : f32 to vector<32x8xf32>
    %434 = arith.subf %433, %424 : vector<32x8xf32>
    %435 = arith.mulf %434, %432 : vector<32x8xf32>
    %cst_159 = arith.constant 9.900000e-01 : f32
    %436 = vector.broadcast %cst_159 : f32 to vector<32x8xf32>
    %437 = arith.mulf %436, %405 : vector<32x8xf32>
    %438 = arith.addf %437, %435 : vector<32x8xf32>
    %cst_160 = arith.constant 1.000000e+00 : f32
    %439 = vector.broadcast %cst_160 : f32 to vector<32x8xf32>
    %440 = arith.mulf %409, %439 : vector<32x8xf32>
    %441 = arith.subf %438, %440 : vector<32x8xf32>
    %cst_161 = arith.constant 1.000000e+00 : f32
    %442 = vector.broadcast %cst_161 : f32 to vector<32x8xf32>
    %443 = arith.cmpf ogt, %441, %442 : vector<32x8xf32>
    %444 = arith.extui %443 : vector<32x8xi1> to vector<32x8xi32>
    %445 = arith.sitofp %444 : vector<32x8xi32> to vector<32x8xf32>
    %cst_162 = arith.constant 9.900000e-01 : f32
    %446 = vector.broadcast %cst_162 : f32 to vector<32x8xf32>
    %447 = arith.mulf %446, %441 : vector<32x8xf32>
    %448 = arith.addf %447, %435 : vector<32x8xf32>
    %cst_163 = arith.constant 1.000000e+00 : f32
    %449 = vector.broadcast %cst_163 : f32 to vector<32x8xf32>
    %450 = arith.mulf %445, %449 : vector<32x8xf32>
    %451 = arith.subf %448, %450 : vector<32x8xf32>
    %cst_164 = arith.constant 1.000000e+00 : f32
    %452 = vector.broadcast %cst_164 : f32 to vector<32x8xf32>
    %453 = arith.cmpf ogt, %451, %452 : vector<32x8xf32>
    %454 = arith.extui %453 : vector<32x8xi1> to vector<32x8xi32>
    %455 = arith.sitofp %454 : vector<32x8xi32> to vector<32x8xf32>
    %cst_165 = arith.constant 9.900000e-01 : f32
    %456 = vector.broadcast %cst_165 : f32 to vector<32x8xf32>
    %457 = arith.mulf %456, %451 : vector<32x8xf32>
    %458 = arith.addf %457, %435 : vector<32x8xf32>
    %cst_166 = arith.constant 1.000000e+00 : f32
    %459 = vector.broadcast %cst_166 : f32 to vector<32x8xf32>
    %460 = arith.mulf %455, %459 : vector<32x8xf32>
    %461 = arith.subf %458, %460 : vector<32x8xf32>
    %cst_167 = arith.constant 1.000000e+00 : f32
    %462 = vector.broadcast %cst_167 : f32 to vector<32x8xf32>
    %463 = arith.cmpf ogt, %461, %462 : vector<32x8xf32>
    %464 = arith.extui %463 : vector<32x8xi1> to vector<32x8xi32>
    %465 = arith.sitofp %464 : vector<32x8xi32> to vector<32x8xf32>
    %cst_168 = arith.constant 9.900000e-01 : f32
    %466 = vector.broadcast %cst_168 : f32 to vector<32x8xf32>
    %467 = arith.mulf %466, %461 : vector<32x8xf32>
    %468 = arith.addf %467, %435 : vector<32x8xf32>
    %cst_169 = arith.constant 1.000000e+00 : f32
    %469 = vector.broadcast %cst_169 : f32 to vector<32x8xf32>
    %470 = arith.mulf %465, %469 : vector<32x8xf32>
    %471 = arith.subf %468, %470 : vector<32x8xf32>
    %cst_170 = arith.constant 1.000000e+00 : f32
    %472 = vector.broadcast %cst_170 : f32 to vector<32x8xf32>
    %473 = arith.cmpf ogt, %471, %472 : vector<32x8xf32>
    %474 = arith.extui %473 : vector<32x8xi1> to vector<32x8xi32>
    %475 = arith.sitofp %474 : vector<32x8xi32> to vector<32x8xf32>
    %476 = vector.extract_strided_slice %13 {offsets = [224, 0], sizes = [32, 8], strides = [1, 1]} : vector<256x8xbf16> to vector<32x8xbf16>
    %c0_171 = arith.constant 0 : index
    %c0_172 = arith.constant 0 : index
    %477 = vector.load %arg4[%c0_171, %c0_172] : memref<96x32xbf16, #tpu.memory_space<vmem>>, vector<96x32xbf16>
    %cst_173 = arith.constant dense<0.000000e+00> : vector<96x8xf32>
    %478 = tpu.matmul %477, %476, %cst_173 {dimension_numbers = #tpu.dot_dimension_numbers<[1], [0], [0], [1], [0, 0, 1, 1], [], []>} : vector<96x32xbf16>, vector<32x8xbf16>, vector<96x8xf32> -> vector<96x8xf32>
    %c0_174 = arith.constant 0 : index
    %c0_175 = arith.constant 0 : index
    %479 = vector.load %arg5[%c0_174, %c0_175] : memref<96x8xf32, #tpu.memory_space<vmem>>, vector<96x8xf32>
    %480 = arith.addf %478, %479 : vector<96x8xf32>
    %481 = vector.extract_strided_slice %480 {offsets = [0, 0], sizes = [32, 8], strides = [1, 1]} : vector<96x8xf32> to vector<32x8xf32>
    %cst_176 = arith.constant 0.000000e+00 : f32
    %482 = vector.broadcast %cst_176 : f32 to vector<32x8xf32>
    %483 = arith.cmpf oge, %481, %482 : vector<32x8xf32>
    %484 = arith.extui %483 : vector<32x8xi1> to vector<32x8xi32>
    %485 = arith.sitofp %484 : vector<32x8xi32> to vector<32x8xf32>
    %486 = vector.extract_strided_slice %480 {offsets = [32, 0], sizes = [32, 8], strides = [1, 1]} : vector<96x8xf32> to vector<32x8xf32>
    %cst_177 = arith.constant 0.000000e+00 : f32
    %487 = vector.broadcast %cst_177 : f32 to vector<32x8xf32>
    %488 = arith.cmpf oge, %486, %487 : vector<32x8xf32>
    %489 = arith.extui %488 : vector<32x8xi1> to vector<32x8xi32>
    %490 = arith.sitofp %489 : vector<32x8xi32> to vector<32x8xf32>
    %491 = vector.extract_strided_slice %480 {offsets = [64, 0], sizes = [32, 8], strides = [1, 1]} : vector<96x8xf32> to vector<32x8xf32>
    %c0_178 = arith.constant 0 : index
    %c0_179 = arith.constant 0 : index
    %492 = vector.load %arg6[%c0_178, %c0_179] : memref<32x8xf32, #tpu.memory_space<vmem>>, vector<32x8xf32>
    %493 = arith.mulf %485, %492 : vector<32x8xf32>
    %494 = arith.addf %491, %493 : vector<32x8xf32>
    %cst_180 = arith.constant 0.000000e+00 : f32
    %495 = vector.broadcast %cst_180 : f32 to vector<32x8xf32>
    %496 = arith.cmpf oge, %494, %495 : vector<32x8xf32>
    %497 = arith.extui %496 : vector<32x8xi1> to vector<32x8xi32>
    %498 = arith.sitofp %497 : vector<32x8xi32> to vector<32x8xf32>
    %cst_181 = arith.constant 1.000000e+00 : f32
    %499 = vector.broadcast %cst_181 : f32 to vector<32x8xf32>
    %500 = arith.subf %499, %490 : vector<32x8xf32>
    %501 = arith.mulf %500, %498 : vector<32x8xf32>
    %cst_182 = arith.constant 9.900000e-01 : f32
    %502 = vector.broadcast %cst_182 : f32 to vector<32x8xf32>
    %503 = arith.mulf %502, %471 : vector<32x8xf32>
    %504 = arith.addf %503, %501 : vector<32x8xf32>
    %cst_183 = arith.constant 1.000000e+00 : f32
    %505 = vector.broadcast %cst_183 : f32 to vector<32x8xf32>
    %506 = arith.mulf %475, %505 : vector<32x8xf32>
    %507 = arith.subf %504, %506 : vector<32x8xf32>
    %cst_184 = arith.constant 1.000000e+00 : f32
    %508 = vector.broadcast %cst_184 : f32 to vector<32x8xf32>
    %509 = arith.cmpf ogt, %507, %508 : vector<32x8xf32>
    %510 = arith.extui %509 : vector<32x8xi1> to vector<32x8xi32>
    %511 = arith.sitofp %510 : vector<32x8xi32> to vector<32x8xf32>
    %c0_185 = arith.constant 0 : index
    %c0_186 = arith.constant 0 : index
    %c0_187 = arith.constant 0 : index
    %512 = vector.load %arg7[%c0_185, %c0_186, %c0_187] : memref<4x32x8xf32, #tpu.memory_space<vmem>>, vector<1x32x8xf32>
    %513 = vector.shape_cast %512 : vector<1x32x8xf32> to vector<32x8xf32>
    %514 = vector.shape_cast %511 : vector<32x8xf32> to vector<1x32x8xf32>
    tpu.vector_store %arg7[%c0_185, %c0_186, %c0_187], %514 {strides = array<i32>} : memref<4x32x8xf32, #tpu.memory_space<vmem>>, vector<1x32x8xf32>,
    %cst_188 = arith.constant 9.900000e-01 : f32
    %515 = vector.broadcast %cst_188 : f32 to vector<32x8xf32>
    %516 = arith.mulf %515, %507 : vector<32x8xf32>
    %517 = arith.addf %516, %501 : vector<32x8xf32>
    %cst_189 = arith.constant 1.000000e+00 : f32
    %518 = vector.broadcast %cst_189 : f32 to vector<32x8xf32>
    %519 = arith.mulf %511, %518 : vector<32x8xf32>
    %520 = arith.subf %517, %519 : vector<32x8xf32>
    %cst_190 = arith.constant 1.000000e+00 : f32
    %521 = vector.broadcast %cst_190 : f32 to vector<32x8xf32>
    %522 = arith.cmpf ogt, %520, %521 : vector<32x8xf32>
    %523 = arith.extui %522 : vector<32x8xi1> to vector<32x8xi32>
    %524 = arith.sitofp %523 : vector<32x8xi32> to vector<32x8xf32>
    %c1 = arith.constant 1 : index
    %c0_191 = arith.constant 0 : index
    %c0_192 = arith.constant 0 : index
    %525 = vector.load %arg7[%c1, %c0_191, %c0_192] : memref<4x32x8xf32, #tpu.memory_space<vmem>>, vector<1x32x8xf32>
    %526 = vector.shape_cast %525 : vector<1x32x8xf32> to vector<32x8xf32>
    %527 = vector.shape_cast %524 : vector<32x8xf32> to vector<1x32x8xf32>
    tpu.vector_store %arg7[%c1, %c0_191, %c0_192], %527 {strides = array<i32>} : memref<4x32x8xf32, #tpu.memory_space<vmem>>, vector<1x32x8xf32>,
    %cst_193 = arith.constant 9.900000e-01 : f32
    %528 = vector.broadcast %cst_193 : f32 to vector<32x8xf32>
    %529 = arith.mulf %528, %520 : vector<32x8xf32>
    %530 = arith.addf %529, %501 : vector<32x8xf32>
    %cst_194 = arith.constant 1.000000e+00 : f32
    %531 = vector.broadcast %cst_194 : f32 to vector<32x8xf32>
    %532 = arith.mulf %524, %531 : vector<32x8xf32>
    %533 = arith.subf %530, %532 : vector<32x8xf32>
    %cst_195 = arith.constant 1.000000e+00 : f32
    %534 = vector.broadcast %cst_195 : f32 to vector<32x8xf32>
    %535 = arith.cmpf ogt, %533, %534 : vector<32x8xf32>
    %536 = arith.extui %535 : vector<32x8xi1> to vector<32x8xi32>
    %537 = arith.sitofp %536 : vector<32x8xi32> to vector<32x8xf32>
    %c2 = arith.constant 2 : index
    %c0_196 = arith.constant 0 : index
    %c0_197 = arith.constant 0 : index
    %538 = vector.load %arg7[%c2, %c0_196, %c0_197] : memref<4x32x8xf32, #tpu.memory_space<vmem>>, vector<1x32x8xf32>
    %539 = vector.shape_cast %538 : vector<1x32x8xf32> to vector<32x8xf32>
    %540 = vector.shape_cast %537 : vector<32x8xf32> to vector<1x32x8xf32>
    tpu.vector_store %arg7[%c2, %c0_196, %c0_197], %540 {strides = array<i32>} : memref<4x32x8xf32, #tpu.memory_space<vmem>>, vector<1x32x8xf32>,
    %cst_198 = arith.constant 9.900000e-01 : f32
    %541 = vector.broadcast %cst_198 : f32 to vector<32x8xf32>
    %542 = arith.mulf %541, %533 : vector<32x8xf32>
    %543 = arith.addf %542, %501 : vector<32x8xf32>
    %cst_199 = arith.constant 1.000000e+00 : f32
    %544 = vector.broadcast %cst_199 : f32 to vector<32x8xf32>
    %545 = arith.mulf %537, %544 : vector<32x8xf32>
    %546 = arith.subf %543, %545 : vector<32x8xf32>
    %cst_200 = arith.constant 1.000000e+00 : f32
    %547 = vector.broadcast %cst_200 : f32 to vector<32x8xf32>
    %548 = arith.cmpf ogt, %546, %547 : vector<32x8xf32>
    %549 = arith.extui %548 : vector<32x8xi1> to vector<32x8xi32>
    %550 = arith.sitofp %549 : vector<32x8xi32> to vector<32x8xf32>
    %c3 = arith.constant 3 : index
    %c0_201 = arith.constant 0 : index
    %c0_202 = arith.constant 0 : index
    %551 = vector.load %arg7[%c3, %c0_201, %c0_202] : memref<4x32x8xf32, #tpu.memory_space<vmem>>, vector<1x32x8xf32>
    %552 = vector.shape_cast %551 : vector<1x32x8xf32> to vector<32x8xf32>
    %553 = vector.shape_cast %550 : vector<32x8xf32> to vector<1x32x8xf32>
    tpu.vector_store %arg7[%c3, %c0_201, %c0_202], %553 {strides = array<i32>} : memref<4x32x8xf32, #tpu.memory_space<vmem>>, vector<1x32x8xf32>,
    return
  }
  func.func @transform_0(%arg0: i32) -> (i32, i32) {
    %c0_i32 = arith.constant 0 : i32
    %c0_i32_0 = arith.constant 0 : i32
    return %c0_i32, %arg0 : i32, i32
  }
  func.func @transform_1(%arg0: i32) -> (i32, i32) {
    %c0_i32 = arith.constant 0 : i32
    %c0_i32_0 = arith.constant 0 : i32
    %c0_i32_1 = arith.constant 0 : i32
    return %c0_i32, %c0_i32_0 : i32, i32
  }
  func.func @transform_2(%arg0: i32) -> (i32, i32) {
    %c0_i32 = arith.constant 0 : i32
    %c0_i32_0 = arith.constant 0 : i32
    %c0_i32_1 = arith.constant 0 : i32
    return %c0_i32, %c0_i32_0 : i32, i32
  }
  func.func @transform_3(%arg0: i32) -> (i32, i32) {
    %c0_i32 = arith.constant 0 : i32
    %c0_i32_0 = arith.constant 0 : i32
    %c0_i32_1 = arith.constant 0 : i32
    return %c0_i32, %c0_i32_0 : i32, i32
  }
  func.func @transform_4(%arg0: i32) -> (i32, i32) {
    %c0_i32 = arith.constant 0 : i32
    %c0_i32_0 = arith.constant 0 : i32
    %c0_i32_1 = arith.constant 0 : i32
    return %c0_i32, %c0_i32_0 : i32, i32
  }
  func.func @transform_5(%arg0: i32) -> (i32, i32) {
    %c0_i32 = arith.constant 0 : i32
    %c0_i32_0 = arith.constant 0 : i32
    %c0_i32_1 = arith.constant 0 : i32
    return %c0_i32, %c0_i32_0 : i32, i32
  }
  func.func @transform_6(%arg0: i32) -> (i32, i32, i32) {
    %c0_i32 = arith.constant 0 : i32
    %c0_i32_0 = arith.constant 0 : i32
    %c0_i32_1 = arith.constant 0 : i32
    return %c0_i32, %c0_i32_0, %arg0 : i32, i32, i32
  }
}

</mosaic_0001>

<llo_original>
// kernel: itssnngru2d_forward.2
$region0: #{itssnngru2d_forward.2}
  #allocation0 [shape = 'u32[]', space=smem, size = 0x4, offset = 0x4, fixed_abs, tag = 'smem constant byte address 0x4 - core index']
  #allocation1 [shape = 'u32[144,128]{1,0:T(1,128)}', space=vmem, size = 0x12000, scoped, tag = 'internal scratch']
  %s0 = inlined_call_operand.vmem [shape: f32[10,8], index: 0, kind: input, shape index: {}]
  %s1 = inlined_call_operand.vmem [shape: f32[9,8], index: 1, kind: output, shape index: {}]
  %s2 = sld [smem:[#allocation0]]
  $region18: #{itssnngru2d_forward.2} parent=0
    _
  %s4 = ssub.s32 1, %s2
  %s5 = scalar_select 0, %s4, %s2
  // Predicated region
  $region2: #{itssnngru2d_forward.2} parent=0 // pred_check
    _
  $region3: #{itssnngru2d_forward.2} parent=0 // pred_check_branch
    %7 = sbr.rel (0) target = $region5
  $region4: #{itssnngru2d_forward.2} parent=0 // pred_region
    _
  $region5: #{itssnngru2d_forward.2} parent=0 // pred_fallthru
    _
  %p8 = scmp.eq.s32.totalorder 0, 0
  // Predicated region
  $region6: #{itssnngru2d_forward.2} parent=0 // pred_check
    %p9 = pneg %p8
  $region7: #{itssnngru2d_forward.2} parent=0 // pred_check_branch
    %11 = sbr.rel (%p9) target = $region9
  $region8: #{itssnngru2d_forward.2} parent=0 // pred_region
    %vm12 = vcmask 64512
    %13 = vst.msk [vmem:[%s1] sm:$0xff] %vm12, 0.0
    %vm14 = vcmask 57344
    %15 = vst.msk [vmem:[%s1 + $0x8] sm:$0x1] %vm14, 0.0
  $region9: #{itssnngru2d_forward.2} parent=0 // pred_fallthru
    _
  %v16 = vld [vmem:[%s0] sm:$0xff]
  %v17 = vld [vmem:[%s0 + $0x1] sm:$0xff]
  %v18 = vld [vmem:[%s0 + $0x2] sm:$0xff]
  %vm19 = vcmask 64512
  %v20 = vsel %vm19, %v16, 0.0
  %v21 = vrot.slane %v20, 4
  %v22 = vadd.f32 %v20, %v21
  %v23 = vrot.slane %v22, 2
  %v24 = vadd.f32 %v22, %v23
  %v25 = vrot.slane %v24, 1
  %v26 = vadd.f32 %v24, %v25
  %v27 = vadd.f32 %v26, 0.0
  %v28 = vsel %vm19, %v17, 0.0
  %v29 = vrot.slane %v28, 4
  %v30 = vadd.f32 %v28, %v29
  %v31 = vrot.slane %v30, 2
  %v32 = vadd.f32 %v30, %v31
  %v33 = vrot.slane %v32, 1
  %v34 = vadd.f32 %v32, %v33
  %v35 = vadd.f32 %v34, 0.0
  %v36 = vsel %vm19, %v18, 0.0
  %v37 = vrot.slane %v36, 4
  %v38 = vadd.f32 %v36, %v37
  %v39 = vrot.slane %v38, 2
  %v40 = vadd.f32 %v38, %v39
  %v41 = vrot.slane %v40, 1
  %v42 = vadd.f32 %v40, %v41
  %v43 = vadd.f32 %v42, 0.0
  %v44 = vmul.f32 %v16, %v16
  %v45 = vsel %vm19, %v44, 0.0
  %v46 = vrot.slane %v45, 4
  %v47 = vadd.f32 %v45, %v46
  %v48 = vrot.slane %v47, 2
  %v49 = vadd.f32 %v47, %v48
  %v50 = vrot.slane %v49, 1
  %v51 = vadd.f32 %v49, %v50
  %v52 = vadd.f32 %v51, 0.0
  %v53 = vmul.f32 %v16, %v17
  %v54 = vsel %vm19, %v53, 0.0
  %v55 = vrot.slane %v54, 4
  %v56 = vadd.f32 %v54, %v55
  %v57 = vrot.slane %v56, 2
  %v58 = vadd.f32 %v56, %v57
  %v59 = vrot.slane %v58, 1
  %v60 = vadd.f32 %v58, %v59
  %v61 = vadd.f32 %v60, 0.0
  %v62 = vmul.f32 %v16, %v18
  %v63 = vsel %vm19, %v62, 0.0
  %v64 = vrot.slane %v63, 4
  %v65 = vadd.f32 %v63, %v64
  %v66 = vrot.slane %v65, 2
  %v67 = vadd.f32 %v65, %v66
  %v68 = vrot.slane %v67, 1
  %v69 = vadd.f32 %v67, %v68
  %v70 = vadd.f32 %v69, 0.0
  %v71 = vmul.f32 %v17, %v17
  %v72 = vsel %vm19, %v71, 0.0
  %v73 = vrot.slane %v72, 4
  %v74 = vadd.f32 %v72, %v73
  %v75 = vrot.slane %v74, 2
  %v76 = vadd.f32 %v74, %v75
  %v77 = vrot.slane %v76, 1
  %v78 = vadd.f32 %v76, %v77
  %v79 = vadd.f32 %v78, 0.0
  %v80 = vmul.f32 %v17, %v18
  %v81 = vsel %vm19, %v80, 0.0
  %v82 = vrot.slane %v81, 4
  %v83 = vadd.f32 %v81, %v82
  %v84 = vrot.slane %v83, 2
  %v85 = vadd.f32 %v83, %v84
  %v86 = vrot.slane %v85, 1
  %v87 = vadd.f32 %v85, %v86
  %v88 = vadd.f32 %v87, 0.0
  %v89 = vmul.f32 %v18, %v18
  %v90 = vsel %vm19, %v89, 0.0
  %v91 = vrot.slane %v90, 4
  %v92 = vadd.f32 %v90, %v91
  %v93 = vrot.slane %v92, 2
  %v94 = vadd.f32 %v92, %v93
  %v95 = vrot.slane %v94, 1
  %v96 = vadd.f32 %v94, %v95
  %v97 = vadd.f32 %v96, 0.0
  %v98 = vld [vmem:[%s1] sm:$0x1]
  %v99 = vadd.f32 %v98, %v27
  %vm100 = vcmask 57344
  %101 = vst.msk [vmem:[%s1] sm:$0x1] %vm100, %v99
  %v102 = vld [vmem:[%s1 + $0x1] sm:$0x1]
  %v103 = vadd.f32 %v102, %v35
  %104 = vst.msk [vmem:[%s1 + $0x1] sm:$0x1] %vm100, %v103
  %v105 = vld [vmem:[%s1 + $0x2] sm:$0x1]
  %v106 = vadd.f32 %v105, %v43
  %107 = vst.msk [vmem:[%s1 + $0x2] sm:$0x1] %vm100, %v106
  %v108 = vld [vmem:[%s1 + $0x3] sm:$0x1]
  %v109 = vadd.f32 %v108, %v52
  %110 = vst.msk [vmem:[%s1 + $0x3] sm:$0x1] %vm100, %v109
  %v111 = vld [vmem:[%s1 + $0x4] sm:$0x1]
  %v112 = vadd.f32 %v111, %v61
  %113 = vst.msk [vmem:[%s1 + $0x4] sm:$0x1] %vm100, %v112
  %v114 = vld [vmem:[%s1 + $0x5] sm:$0x1]
  %v115 = vadd.f32 %v114, %v70
  %116 = vst.msk [vmem:[%s1 + $0x5] sm:$0x1] %vm100, %v115
  %v117 = vld [vmem:[%s1 + $0x6] sm:$0x1]
  %v118 = vadd.f32 %v117, %v79
  %119 = vst.msk [vmem:[%s1 + $0x6] sm:$0x1] %vm100, %v118
  %v120 = vld [vmem:[%s1 + $0x7] sm:$0x1]
  %v121 = vadd.f32 %v120, %v88
  %122 = vst.msk [vmem:[%s1 + $0x7] sm:$0x1] %vm100, %v121
  %v123 = vld [vmem:[%s1 + $0x8] sm:$0x1]
  %v124 = vadd.f32 %v123, %v97
  %125 = vst.msk [vmem:[%s1 + $0x8] sm:$0x1] %vm100, %v124
  // Predicated region
  $region10: #{itssnngru2d_forward.2} parent=0 // pred_check
    _
  $region11: #{itssnngru2d_forward.2} parent=0 // pred_check_branch
    %127 = sbr.rel (0) target = $region13
  $region12: #{itssnngru2d_forward.2} parent=0 // pred_region
    _
  $region13: #{itssnngru2d_forward.2} parent=0 // pred_fallthru
    _
  // Predicated region
  $region14: #{itssnngru2d_forward.2} parent=0 // pred_check
    _
  $region15: #{itssnngru2d_forward.2} parent=0 // pred_check_branch
    %129 = sbr.rel (0) target = $region17
  $region16: #{itssnngru2d_forward.2} parent=0 // pred_region
    _
  $region17: #{itssnngru2d_forward.2} parent=0 // pred_fallthru
    _

// kernel: tile.8
$region0: #{tile.8}
  #allocation0 [shape = 's32[1]{0}', space=sflag, size = 0x4, scoped, tag = 'scoped memory for tile.8']
  %s0 = inlined_call_operand.vmem [shape: f32[32], index: 0, kind: input, shape index: {}]
  %s1 = inlined_call_operand.vmem [shape: f32[8,32], index: 1, kind: output, shape index: {}]
  // Predicated region
  $region2: #{tile.8} parent=0 // pred_check
    _
  $region3: #{tile.8} parent=0 // pred_check_branch
    %3 = sbr.rel (0) target = $region5
  $region4: #{tile.8} parent=0 // pred_region
    _
  $region5: #{tile.8} parent=0 // pred_fallthru
    _
  %v4 = vld [vmem:[%s0] ss:$0 sm:$0xff]
  %5 = vst [vmem:[%s1] sm:$0xff] %v4

// kernel: itssnngru2d_forward.3
$region0: #{itssnngru2d_forward.3}
  #allocation0 [shape = 'u32[]', space=smem, size = 0x4, offset = 0x4, fixed_abs, tag = 'smem constant byte address 0x4 - core index']
  #allocation1 [shape = 'u32[144,128]{1,0:T(1,128)}', space=vmem, size = 0x12000, scoped, tag = 'internal scratch']
  %s0 = inlined_call_operand.vmem [shape: f32[10,8], index: 0, kind: input, shape index: {}]
  %s1 = inlined_call_operand.vmem [shape: f32[256,10], index: 1, kind: input, shape index: {}]
  %s2 = inlined_call_operand.vmem [shape: f32[256,8], index: 2, kind: input, shape index: {}]
  %s3 = inlined_call_operand.vmem [shape: bf16[96,32], index: 3, kind: input, shape index: {}]
  %s4 = inlined_call_operand.vmem [shape: f32[96,8], index: 4, kind: input, shape index: {}]
  %s5 = inlined_call_operand.vmem [shape: f32[32,8], index: 5, kind: input, shape index: {}]
  %s6 = inlined_call_operand.vmem [shape: f32[4,32,8], index: 6, kind: output, shape index: {}]
  %s7 = sld [smem:[#allocation0]]
  $region34: #{itssnngru2d_forward.3} parent=0
    _
  %s9 = ssub.s32 1, %s7
  %s10 = scalar_select 0, %s9, %s7
  // Predicated region
  $region2: #{itssnngru2d_forward.3} parent=0 // pred_check
    _
  $region3: #{itssnngru2d_forward.3} parent=0 // pred_check_branch
    %12 = sbr.rel (0) target = $region5
  $region4: #{itssnngru2d_forward.3} parent=0 // pred_region
    _
  $region5: #{itssnngru2d_forward.3} parent=0 // pred_fallthru
    _
  // Predicated region
  $region6: #{itssnngru2d_forward.3} parent=0 // pred_check
    _
  $region7: #{itssnngru2d_forward.3} parent=0 // pred_check_branch
    %14 = sbr.rel (0) target = $region9
  $region8: #{itssnngru2d_forward.3} parent=0 // pred_region
    _
  $region9: #{itssnngru2d_forward.3} parent=0 // pred_fallthru
    _
  // Predicated region
  $region10: #{itssnngru2d_forward.3} parent=0 // pred_check
    _
  $region11: #{itssnngru2d_forward.3} parent=0 // pred_check_branch
    %16 = sbr.rel (0) target = $region13
  $region12: #{itssnngru2d_forward.3} parent=0 // pred_region
    _
  $region13: #{itssnngru2d_forward.3} parent=0 // pred_fallthru
    _
  // Predicated region
  $region14: #{itssnngru2d_forward.3} parent=0 // pred_check
    _
  $region15: #{itssnngru2d_forward.3} parent=0 // pred_check_branch
    %18 = sbr.rel (0) target = $region17
  $region16: #{itssnngru2d_forward.3} parent=0 // pred_region
    _
  $region17: #{itssnngru2d_forward.3} parent=0 // pred_fallthru
    _
  // Predicated region
  $region18: #{itssnngru2d_forward.3} parent=0 // pred_check
    _
  $region19: #{itssnngru2d_forward.3} parent=0 // pred_check_branch
    %20 = sbr.rel (0) target = $region21
  $region20: #{itssnngru2d_forward.3} parent=0 // pred_region
    _
  $region21: #{itssnngru2d_forward.3} parent=0 // pred_fallthru
    _
  // Predicated region
  $region22: #{itssnngru2d_forward.3} parent=0 // pred_check
    _
  $region23: #{itssnngru2d_forward.3} parent=0 // pred_check_branch
    %22 = sbr.rel (0) target = $region25
  $region24: #{itssnngru2d_forward.3} parent=0 // pred_region
    _
  $region25: #{itssnngru2d_forward.3} parent=0 // pred_fallthru
    _
  %v24 = vld [vmem:[%s0] sm:$0xff]
  %v25 = vld [vmem:[%s0 + $0x8] sm:$0x3]
  %v26 = vld [vmem:[%s1] sm:$0xff]
  %v27 = vld [vmem:[%s1 + $0x8] sm:$0xff]
  %v28 = vld [vmem:[%s1 + $0x10] sm:$0xff]
  %v29 = vld [vmem:[%s1 + $0x18] sm:$0xff]
  %v30 = vld [vmem:[%s1 + $0x20] sm:$0xff]
  %v31 = vld [vmem:[%s1 + $0x28] sm:$0xff]
  %v32 = vld [vmem:[%s1 + $0x30] sm:$0xff]
  %v33 = vld [vmem:[%s1 + $0x38] sm:$0xff]
  %v34 = vld [vmem:[%s1 + $0x40] sm:$0xff]
  %v35 = vld [vmem:[%s1 + $0x48] sm:$0xff]
  %v36 = vld [vmem:[%s1 + $0x50] sm:$0xff]
  %v37 = vld [vmem:[%s1 + $0x58] sm:$0xff]
  %v38 = vld [vmem:[%s1 + $0x60] sm:$0xff]
  %v39 = vld [vmem:[%s1 + $0x68] sm:$0xff]
  %v40 = vld [vmem:[%s1 + $0x70] sm:$0xff]
  %v41 = vld [vmem:[%s1 + $0x78] sm:$0xff]
  %v42 = vld [vmem:[%s1 + $0x80] sm:$0xff]
  %v43 = vld [vmem:[%s1 + $0x88] sm:$0xff]
  %v44 = vld [vmem:[%s1 + $0x90] sm:$0xff]
  %v45 = vld [vmem:[%s1 + $0x98] sm:$0xff]
  %v46 = vld [vmem:[%s1 + $0xa0] sm:$0xff]
  %v47 = vld [vmem:[%s1 + $0xa8] sm:$0xff]
  %v48 = vld [vmem:[%s1 + $0xb0] sm:$0xff]
  %v49 = vld [vmem:[%s1 + $0xb8] sm:$0xff]
  %v50 = vld [vmem:[%s1 + $0xc0] sm:$0xff]
  %v51 = vld [vmem:[%s1 + $0xc8] sm:$0xff]
  %v52 = vld [vmem:[%s1 + $0xd0] sm:$0xff]
  %v53 = vld [vmem:[%s1 + $0xd8] sm:$0xff]
  %v54 = vld [vmem:[%s1 + $0xe0] sm:$0xff]
  %v55 = vld [vmem:[%s1 + $0xe8] sm:$0xff]
  %v56 = vld [vmem:[%s1 + $0xf0] sm:$0xff]
  %v57 = vld [vmem:[%s1 + $0xf8] sm:$0xff]
  %v58 = vld [vmem:[%s2] sm:$0xff]
  %v59 = vld [vmem:[%s2 + $0x8] sm:$0xff]
  %v60 = vld [vmem:[%s2 + $0x10] sm:$0xff]
  %v61 = vld [vmem:[%s2 + $0x18] sm:$0xff]
  %v62 = vld [vmem:[%s2 + $0x20] sm:$0xff]
  %v63 = vld [vmem:[%s2 + $0x28] sm:$0xff]
  %v64 = vld [vmem:[%s2 + $0x30] sm:$0xff]
  %v65 = vld [vmem:[%s2 + $0x38] sm:$0xff]
  %v66 = vld [vmem:[%s2 + $0x40] sm:$0xff]
  %v67 = vld [vmem:[%s2 + $0x48] sm:$0xff]
  %v68 = vld [vmem:[%s2 + $0x50] sm:$0xff]
  %v69 = vld [vmem:[%s2 + $0x58] sm:$0xff]
  %v70 = vld [vmem:[%s2 + $0x60] sm:$0xff]
  %v71 = vld [vmem:[%s2 + $0x68] sm:$0xff]
  %v72 = vld [vmem:[%s2 + $0x70] sm:$0xff]
  %v73 = vld [vmem:[%s2 + $0x78] sm:$0xff]
  %v74 = vld [vmem:[%s2 + $0x80] sm:$0xff]
  %v75 = vld [vmem:[%s2 + $0x88] sm:$0xff]
  %v76 = vld [vmem:[%s2 + $0x90] sm:$0xff]
  %v77 = vld [vmem:[%s2 + $0x98] sm:$0xff]
  %v78 = vld [vmem:[%s2 + $0xa0] sm:$0xff]
  %v79 = vld [vmem:[%s2 + $0xa8] sm:$0xff]
  %v80 = vld [vmem:[%s2 + $0xb0] sm:$0xff]
  %v81 = vld [vmem:[%s2 + $0xb8] sm:$0xff]
  %v82 = vld [vmem:[%s2 + $0xc0] sm:$0xff]
  %v83 = vld [vmem:[%s2 + $0xc8] sm:$0xff]
  %v84 = vld [vmem:[%s2 + $0xd0] sm:$0xff]
  %v85 = vld [vmem:[%s2 + $0xd8] sm:$0xff]
  %v86 = vld [vmem:[%s2 + $0xe0] sm:$0xff]
  %v87 = vld [vmem:[%s2 + $0xe8] sm:$0xff]
  %v88 = vld [vmem:[%s2 + $0xf0] sm:$0xff]
  %v89 = vld [vmem:[%s2 + $0xf8] sm:$0xff]
  %vm90 = vcmask 80896
  %v92 = vsel %vm90, %v26, 0
  %v95 = vsel %vm90, %v27, 0
  %v98 = vsel %vm90, %v28, 0
  %v101 = vsel %vm90, %v29, 0
  %v104 = vsel %vm90, %v30, 0
  %v107 = vsel %vm90, %v31, 0
  %v110 = vsel %vm90, %v32, 0
  %v113 = vsel %vm90, %v33, 0
  %v116 = vsel %vm90, %v34, 0
  %v119 = vsel %vm90, %v35, 0
  %v122 = vsel %vm90, %v36, 0
  %v125 = vsel %vm90, %v37, 0
  %v128 = vsel %vm90, %v38, 0
  %v131 = vsel %vm90, %v39, 0
  %v134 = vsel %vm90, %v40, 0
  %v137 = vsel %vm90, %v41, 0
  %v140 = vsel %vm90, %v42, 0
  %v143 = vsel %vm90, %v43, 0
  %v146 = vsel %vm90, %v44, 0
  %v149 = vsel %vm90, %v45, 0
  %v152 = vsel %vm90, %v46, 0
  %v155 = vsel %vm90, %v47, 0
  %v158 = vsel %vm90, %v48, 0
  %v161 = vsel %vm90, %v49, 0
  %v164 = vsel %vm90, %v50, 0
  %v167 = vsel %vm90, %v51, 0
  %v170 = vsel %vm90, %v52, 0
  %v173 = vsel %vm90, %v53, 0
  %v176 = vsel %vm90, %v54, 0
  %v179 = vsel %vm90, %v55, 0
  %v182 = vsel %vm90, %v56, 0
  %v185 = vsel %vm90, %v57, 0
  %vm187 = vcmask 1041408
  %v189 = vsel %vm187, %v25, 0
  %191 = vmatprep.subr.mxu0 0.0
  %192 = vmatpush1.msra.mxu0 %v24
  %193 = vmatprep.subr.mxu0 0.0
  %194 = vmatpush1.msra.mxu0 %v189
  %195 = vmatprep.subr.mxu0 0.0
  %196 = vmatpush1.msra.mxu0 0.0
  %197 = vmatprep.subr.mxu0 0.0
  %198 = vmatpush1.msra.mxu0 0.0
  %199 = vmatprep.subr.mxu0 0.0
  %200 = vmatpush1.msra.mxu0 0.0
  %201 = vmatprep.subr.mxu0 0.0
  %202 = vmatpush1.msra.mxu0 0.0
  %203 = vmatprep.subr.mxu0 0.0
  %204 = vmatpush1.msra.mxu0 0.0
  %205 = vmatprep.subr.mxu0 0.0
  %206 = vmatpush1.msra.mxu0 0.0
  %207 = vmatprep.subr.mxu0 0.0
  %208 = vmatpush1.msra.mxu0 0.0
  %209 = vmatprep.subr.mxu0 0.0
  %210 = vmatpush1.msra.mxu0 0.0
  %211 = vmatprep.subr.mxu0 0.0
  %212 = vmatpush1.msra.mxu0 0.0
  %213 = vmatprep.subr.mxu0 0.0
  %214 = vmatpush1.msra.mxu0 0.0
  %215 = vmatprep.subr.mxu0 0.0
  %216 = vmatpush1.msra.mxu0 0.0
  %217 = vmatprep.subr.mxu0 0.0
  %218 = vmatpush1.msra.mxu0 0.0
  %219 = vmatprep.subr.mxu0 0.0
  %220 = vmatpush1.msra.mxu0 0.0
  %221 = vmatprep.subr.mxu0 0.0
  %222 = vmatpush1.msra.mxu0 0.0
  %223 = vmatprep.subr.mxu0 0.0
  %224 = vmatpush1.msra.mxu0 0.0
  %225 = vmatprep.subr.mxu0 0.0
  %226 = vmatpush1.msra.mxu0 0.0
  %227 = vmatprep.subr.mxu0 0.0
  %228 = vmatpush1.msra.mxu0 0.0
  %229 = vmatprep.subr.mxu0 0.0
  %230 = vmatpush1.msra.mxu0 0.0
  %231 = vmatprep.subr.mxu0 0.0
  %232 = vmatpush1.msra.mxu0 0.0
  %233 = vmatprep.subr.mxu0 0.0
  %234 = vmatpush1.msra.mxu0 0.0
  %235 = vmatprep.subr.mxu0 0.0
  %236 = vmatpush1.msra.mxu0 0.0
  %237 = vmatprep.subr.mxu0 0.0
  %238 = vmatpush1.msra.mxu0 0.0
  %239 = vmatprep.subr.mxu0 0.0
  %240 = vmatpush1.msra.mxu0 0.0
  %241 = vmatprep.subr.mxu0 0.0
  %242 = vmatpush1.msra.mxu0 0.0
  %243 = vmatprep.subr.mxu0 0.0
  %244 = vmatpush1.msra.mxu0 0.0
  %245 = vmatprep.subr.mxu0 0.0
  %246 = vmatpush1.msra.mxu0 0.0
  %247 = vmatprep.subr.mxu0 0.0
  %248 = vmatpush1.msra.mxu0 0.0
  %249 = vmatprep.subr.mxu0 0.0
  %250 = vmatpush1.msra.mxu0 0.0
  %251 = vmatprep.subr.mxu0 0.0
  %252 = vmatpush1.msra.mxu0 0.0
  %253 = vmatprep.subr.mxu0 0.0
  %254 = vmatpush1.msra.mxu0 0.0
  %255 = vmatprep.mubr.f32.mxu0 0.0
  %256 = vmatmul.mubr.f32.gmra.mrb[0].mxu0 %v92
  %v257 = vpop.f32.mrb[0].mxu0
  %v258 = vadd.f32 %v58, %v257
  %v259 = vpop.f32.mrb[0].mxu0
  %260 = vmatprep.mubr.f32.mxu0 0.0
  %261 = vmatmul.mubr.f32.gmra.mrb[0].mxu0 %v95
  %v262 = vpop.f32.mrb[0].mxu0
  %v263 = vadd.f32 %v59, %v262
  %v264 = vpop.f32.mrb[0].mxu0
  %265 = vmatprep.mubr.f32.mxu0 0.0
  %266 = vmatmul.mubr.f32.gmra.mrb[0].mxu0 %v98
  %v267 = vpop.f32.mrb[0].mxu0
  %v268 = vadd.f32 %v60, %v267
  %v269 = vpop.f32.mrb[0].mxu0
  %270 = vmatprep.mubr.f32.mxu0 0.0
  %271 = vmatmul.mubr.f32.gmra.mrb[0].mxu0 %v101
  %v272 = vpop.f32.mrb[0].mxu0
  %v273 = vadd.f32 %v61, %v272
  %v274 = vpop.f32.mrb[0].mxu0
  %275 = vmatprep.mubr.f32.mxu0 0.0
  %276 = vmatmul.mubr.f32.gmra.mrb[0].mxu0 %v104
  %v277 = vpop.f32.mrb[0].mxu0
  %v278 = vadd.f32 %v62, %v277
  %v279 = vpop.f32.mrb[0].mxu0
  %280 = vmatprep.mubr.f32.mxu0 0.0
  %281 = vmatmul.mubr.f32.gmra.mrb[0].mxu0 %v107
  %v282 = vpop.f32.mrb[0].mxu0
  %v283 = vadd.f32 %v63, %v282
  %v284 = vpop.f32.mrb[0].mxu0
  %285 = vmatprep.mubr.f32.mxu0 0.0
  %286 = vmatmul.mubr.f32.gmra.mrb[0].mxu0 %v110
  %v287 = vpop.f32.mrb[0].mxu0
  %v288 = vadd.f32 %v64, %v287
  %v289 = vpop.f32.mrb[0].mxu0
  %290 = vmatprep.mubr.f32.mxu0 0.0
  %291 = vmatmul.mubr.f32.gmra.mrb[0].mxu0 %v113
  %v292 = vpop.f32.mrb[0].mxu0
  %v293 = vadd.f32 %v65, %v292
  %v294 = vpop.f32.mrb[0].mxu0
  %295 = vmatprep.mubr.f32.mxu0 0.0
  %296 = vmatmul.mubr.f32.gmra.mrb[0].mxu0 %v116
  %v297 = vpop.f32.mrb[0].mxu0
  %v298 = vadd.f32 %v66, %v297
  %v299 = vpop.f32.mrb[0].mxu0
  %300 = vmatprep.mubr.f32.mxu0 0.0
  %301 = vmatmul.mubr.f32.gmra.mrb[0].mxu0 %v119
  %v302 = vpop.f32.mrb[0].mxu0
  %v303 = vadd.f32 %v67, %v302
  %v304 = vpop.f32.mrb[0].mxu0
  %305 = vmatprep.mubr.f32.mxu0 0.0
  %306 = vmatmul.mubr.f32.gmra.mrb[0].mxu0 %v122
  %v307 = vpop.f32.mrb[0].mxu0
  %v308 = vadd.f32 %v68, %v307
  %v309 = vpop.f32.mrb[0].mxu0
  %310 = vmatprep.mubr.f32.mxu0 0.0
  %311 = vmatmul.mubr.f32.gmra.mrb[0].mxu0 %v125
  %v312 = vpop.f32.mrb[0].mxu0
  %v313 = vadd.f32 %v69, %v312
  %v314 = vpop.f32.mrb[0].mxu0
  %315 = vmatprep.mubr.f32.mxu0 0.0
  %316 = vmatmul.mubr.f32.gmra.mrb[0].mxu0 %v128
  %v317 = vpop.f32.mrb[0].mxu0
  %v318 = vadd.f32 %v70, %v317
  %v319 = vpop.f32.mrb[0].mxu0
  %320 = vmatprep.mubr.f32.mxu0 0.0
  %321 = vmatmul.mubr.f32.gmra.mrb[0].mxu0 %v131
  %v322 = vpop.f32.mrb[0].mxu0
  %v323 = vadd.f32 %v71, %v322
  %v324 = vpop.f32.mrb[0].mxu0
  %325 = vmatprep.mubr.f32.mxu0 0.0
  %326 = vmatmul.mubr.f32.gmra.mrb[0].mxu0 %v134
  %v327 = vpop.f32.mrb[0].mxu0
  %v328 = vadd.f32 %v72, %v327
  %v329 = vpop.f32.mrb[0].mxu0
  %330 = vmatprep.mubr.f32.mxu0 0.0
  %331 = vmatmul.mubr.f32.gmra.mrb[0].mxu0 %v137
  %v332 = vpop.f32.mrb[0].mxu0
  %v333 = vadd.f32 %v73, %v332
  %v334 = vpop.f32.mrb[0].mxu0
  %335 = vmatprep.mubr.f32.mxu0 0.0
  %336 = vmatmul.mubr.f32.gmra.mrb[0].mxu0 %v140
  %v337 = vpop.f32.mrb[0].mxu0
  %v338 = vadd.f32 %v74, %v337
  %v339 = vpop.f32.mrb[0].mxu0
  %340 = vmatprep.mubr.f32.mxu0 0.0
  %341 = vmatmul.mubr.f32.gmra.mrb[0].mxu0 %v143
  %v342 = vpop.f32.mrb[0].mxu0
  %v343 = vadd.f32 %v75, %v342
  %v344 = vpop.f32.mrb[0].mxu0
  %345 = vmatprep.mubr.f32.mxu0 0.0
  %346 = vmatmul.mubr.f32.gmra.mrb[0].mxu0 %v146
  %v347 = vpop.f32.mrb[0].mxu0
  %v348 = vadd.f32 %v76, %v347
  %v349 = vpop.f32.mrb[0].mxu0
  %350 = vmatprep.mubr.f32.mxu0 0.0
  %351 = vmatmul.mubr.f32.gmra.mrb[0].mxu0 %v149
  %v352 = vpop.f32.mrb[0].mxu0
  %v353 = vadd.f32 %v77, %v352
  %v354 = vpop.f32.mrb[0].mxu0
  %355 = vmatprep.mubr.f32.mxu0 0.0
  %356 = vmatmul.mubr.f32.gmra.mrb[0].mxu0 %v152
  %v357 = vpop.f32.mrb[0].mxu0
  %v358 = vadd.f32 %v78, %v357
  %v359 = vpop.f32.mrb[0].mxu0
  %360 = vmatprep.mubr.f32.mxu0 0.0
  %361 = vmatmul.mubr.f32.gmra.mrb[0].mxu0 %v155
  %v362 = vpop.f32.mrb[0].mxu0
  %v363 = vadd.f32 %v79, %v362
  %v364 = vpop.f32.mrb[0].mxu0
  %365 = vmatprep.mubr.f32.mxu0 0.0
  %366 = vmatmul.mubr.f32.gmra.mrb[0].mxu0 %v158
  %v367 = vpop.f32.mrb[0].mxu0
  %v368 = vadd.f32 %v80, %v367
  %v369 = vpop.f32.mrb[0].mxu0
  %370 = vmatprep.mubr.f32.mxu0 0.0
  %371 = vmatmul.mubr.f32.gmra.mrb[0].mxu0 %v161
  %v372 = vpop.f32.mrb[0].mxu0
  %v373 = vadd.f32 %v81, %v372
  %v374 = vpop.f32.mrb[0].mxu0
  %375 = vmatprep.mubr.f32.mxu0 0.0
  %376 = vmatmul.mubr.f32.gmra.mrb[0].mxu0 %v164
  %v377 = vpop.f32.mrb[0].mxu0
  %v378 = vadd.f32 %v82, %v377
  %v379 = vpop.f32.mrb[0].mxu0
  %380 = vmatprep.mubr.f32.mxu0 0.0
  %381 = vmatmul.mubr.f32.gmra.mrb[0].mxu0 %v167
  %v382 = vpop.f32.mrb[0].mxu0
  %v383 = vadd.f32 %v83, %v382
  %v384 = vpop.f32.mrb[0].mxu0
  %385 = vmatprep.mubr.f32.mxu0 0.0
  %386 = vmatmul.mubr.f32.gmra.mrb[0].mxu0 %v170
  %v387 = vpop.f32.mrb[0].mxu0
  %v388 = vadd.f32 %v84, %v387
  %v389 = vpop.f32.mrb[0].mxu0
  %390 = vmatprep.mubr.f32.mxu0 0.0
  %391 = vmatmul.mubr.f32.gmra.mrb[0].mxu0 %v173
  %v392 = vpop.f32.mrb[0].mxu0
  %v393 = vadd.f32 %v85, %v392
  %v394 = vpop.f32.mrb[0].mxu0
  %395 = vmatprep.mubr.f32.mxu0 0.0
  %396 = vmatmul.mubr.f32.gmra.mrb[0].mxu0 %v176
  %v397 = vpop.f32.mrb[0].mxu0
  %v398 = vadd.f32 %v86, %v397
  %v399 = vpop.f32.mrb[0].mxu0
  %400 = vmatprep.mubr.f32.mxu0 0.0
  %401 = vmatmul.mubr.f32.gmra.mrb[0].mxu0 %v179
  %v402 = vpop.f32.mrb[0].mxu0
  %v403 = vadd.f32 %v87, %v402
  %v404 = vpop.f32.mrb[0].mxu0
  %405 = vmatprep.mubr.f32.mxu0 0.0
  %406 = vmatmul.mubr.f32.gmra.mrb[0].mxu0 %v182
  %v407 = vpop.f32.mrb[0].mxu0
  %v408 = vadd.f32 %v88, %v407
  %v409 = vpop.f32.mrb[0].mxu0
  %410 = vmatprep.mubr.f32.mxu0 0.0
  %411 = vmatmul.mubr.f32.gmra.mrb[0].mxu0 %v185
  %v412 = vpop.f32.mrb[0].mxu0
  %v413 = vadd.f32 %v89, %v412
  %v414 = vpop.f32.mrb[0].mxu0
  %415 = vdwg.mxu0
  %vm416 = vcmp.gt.f32.partialorder %v258, 1.0
  %vm417 = vcmp.gt.f32.partialorder %v263, 1.0
  %vm418 = vcmp.gt.f32.partialorder %v268, 1.0
  %vm419 = vcmp.gt.f32.partialorder %v273, 1.0
  %vm420 = vcmp.gt.f32.partialorder %v278, 1.0
  %vm421 = vcmp.gt.f32.partialorder %v283, 1.0
  %vm422 = vcmp.gt.f32.partialorder %v288, 1.0
  %vm423 = vcmp.gt.f32.partialorder %v293, 1.0
  %vm424 = vcmp.gt.f32.partialorder %v298, 1.0
  %vm425 = vcmp.gt.f32.partialorder %v303, 1.0
  %vm426 = vcmp.gt.f32.partialorder %v308, 1.0
  %vm427 = vcmp.gt.f32.partialorder %v313, 1.0
  %vm428 = vcmp.gt.f32.partialorder %v318, 1.0
  %vm429 = vcmp.gt.f32.partialorder %v323, 1.0
  %vm430 = vcmp.gt.f32.partialorder %v328, 1.0
  %vm431 = vcmp.gt.f32.partialorder %v333, 1.0
  %vm432 = vcmp.gt.f32.partialorder %v338, 1.0
  %vm433 = vcmp.gt.f32.partialorder %v343, 1.0
  %vm434 = vcmp.gt.f32.partialorder %v348, 1.0
  %vm435 = vcmp.gt.f32.partialorder %v353, 1.0
  %vm436 = vcmp.gt.f32.partialorder %v358, 1.0
  %vm437 = vcmp.gt.f32.partialorder %v363, 1.0
  %vm438 = vcmp.gt.f32.partialorder %v368, 1.0
  %vm439 = vcmp.gt.f32.partialorder %v373, 1.0
  %vm440 = vcmp.gt.f32.partialorder %v378, 1.0
  %vm441 = vcmp.gt.f32.partialorder %v383, 1.0
  %vm442 = vcmp.gt.f32.partialorder %v388, 1.0
  %vm443 = vcmp.gt.f32.partialorder %v393, 1.0
  %vm444 = vcmp.gt.f32.partialorder %v398, 1.0
  %vm445 = vcmp.gt.f32.partialorder %v403, 1.0
  %vm446 = vcmp.gt.f32.partialorder %v408, 1.0
  %vm447 = vcmp.gt.f32.partialorder %v413, 1.0
  %v448 = vsel %vm416, 1, 0
  %v449 = vsel %vm417, 1, 0
  %v450 = vsel %vm418, 1, 0
  %v451 = vsel %vm419, 1, 0
  %v452 = vsel %vm420, 1, 0
  %v453 = vsel %vm421, 1, 0
  %v454 = vsel %vm422, 1, 0
  %v455 = vsel %vm423, 1, 0
  %v456 = vsel %vm424, 1, 0
  %v457 = vsel %vm425, 1, 0
  %v458 = vsel %vm426, 1, 0
  %v459 = vsel %vm427, 1, 0
  %v460 = vsel %vm428, 1, 0
  %v461 = vsel %vm429, 1, 0
  %v462 = vsel %vm430, 1, 0
  %v463 = vsel %vm431, 1, 0
  %v464 = vsel %vm432, 1, 0
  %v465 = vsel %vm433, 1, 0
  %v466 = vsel %vm434, 1, 0
  %v467 = vsel %vm435, 1, 0
  %v468 = vsel %vm436, 1, 0
  %v469 = vsel %vm437, 1, 0
  %v470 = vsel %vm438, 1, 0
  %v471 = vsel %vm439, 1, 0
  %v472 = vsel %vm440, 1, 0
  %v473 = vsel %vm441, 1, 0
  %v474 = vsel %vm442, 1, 0
  %v475 = vsel %vm443, 1, 0
  %v476 = vsel %vm444, 1, 0
  %v477 = vsel %vm445, 1, 0
  %v478 = vsel %vm446, 1, 0
  %v479 = vsel %vm447, 1, 0
  %v480 = vcvt.s32.f32 %v448
  %v481 = vcvt.s32.f32 %v449
  %v482 = vcvt.s32.f32 %v450
  %v483 = vcvt.s32.f32 %v451
  %v484 = vcvt.s32.f32 %v452
  %v485 = vcvt.s32.f32 %v453
  %v486 = vcvt.s32.f32 %v454
  %v487 = vcvt.s32.f32 %v455
  %v488 = vcvt.s32.f32 %v456
  %v489 = vcvt.s32.f32 %v457
  %v490 = vcvt.s32.f32 %v458
  %v491 = vcvt.s32.f32 %v459
  %v492 = vcvt.s32.f32 %v460
  %v493 = vcvt.s32.f32 %v461
  %v494 = vcvt.s32.f32 %v462
  %v495 = vcvt.s32.f32 %v463
  %v496 = vcvt.s32.f32 %v464
  %v497 = vcvt.s32.f32 %v465
  %v498 = vcvt.s32.f32 %v466
  %v499 = vcvt.s32.f32 %v467
  %v500 = vcvt.s32.f32 %v468
  %v501 = vcvt.s32.f32 %v469
  %v502 = vcvt.s32.f32 %v470
  %v503 = vcvt.s32.f32 %v471
  %v504 = vcvt.s32.f32 %v472
  %v505 = vcvt.s32.f32 %v473
  %v506 = vcvt.s32.f32 %v474
  %v507 = vcvt.s32.f32 %v475
  %v508 = vcvt.s32.f32 %v476
  %v509 = vcvt.s32.f32 %v477
  %v510 = vcvt.s32.f32 %v478
  %v511 = vcvt.s32.f32 %v479
  %v512 = vpack.c.bf16 %v481, %v480
  %v513 = vpack.c.bf16 %v483, %v482
  %v514 = vpack.c.bf16 %v485, %v484
  %v515 = vpack.c.bf16 %v487, %v486
  %v516 = vpack.c.bf16 %v489, %v488
  %v517 = vpack.c.bf16 %v491, %v490
  %v518 = vpack.c.bf16 %v493, %v492
  %v519 = vpack.c.bf16 %v495, %v494
  %v520 = vpack.c.bf16 %v497, %v496
  %v521 = vpack.c.bf16 %v499, %v498
  %v522 = vpack.c.bf16 %v501, %v500
  %v523 = vpack.c.bf16 %v503, %v502
  %v524 = vpack.c.bf16 %v505, %v504
  %v525 = vpack.c.bf16 %v507, %v506
  %v526 = vpack.c.bf16 %v509, %v508
  %v527 = vpack.c.bf16 %v511, %v510
  %v528 = vld [vmem:[%s3] sm:$0xf]
  %v529 = vld [vmem:[%s3 + $0x4] sm:$0xf]
  %v530 = vld [vmem:[%s3 + $0x8] sm:$0xf]
  %v531 = vld [vmem:[%s3 + $0xc] sm:$0xf]
  %v532 = vld [vmem:[%s3 + $0x10] sm:$0xf]
  %v533 = vld [vmem:[%s3 + $0x14] sm:$0xf]
  %v534 = vld [vmem:[%s3 + $0x18] sm:$0xf]
  %v535 = vld [vmem:[%s3 + $0x1c] sm:$0xf]
  %v536 = vld [vmem:[%s3 + $0x20] sm:$0xf]
  %v537 = vld [vmem:[%s3 + $0x24] sm:$0xf]
  %v538 = vld [vmem:[%s3 + $0x28] sm:$0xf]
  %v539 = vld [vmem:[%s3 + $0x2c] sm:$0xf]
  %v540 = vld [vmem:[%s4] sm:$0xff]
  %v541 = vld [vmem:[%s4 + $0x8] sm:$0xff]
  %v542 = vld [vmem:[%s4 + $0x10] sm:$0xff]
  %v543 = vld [vmem:[%s4 + $0x18] sm:$0xff]
  %v544 = vld [vmem:[%s4 + $0x20] sm:$0xff]
  %v545 = vld [vmem:[%s4 + $0x28] sm:$0xff]
  %v546 = vld [vmem:[%s4 + $0x30] sm:$0xff]
  %v547 = vld [vmem:[%s4 + $0x38] sm:$0xff]
  %v548 = vld [vmem:[%s4 + $0x40] sm:$0xff]
  %v549 = vld [vmem:[%s4 + $0x48] sm:$0xff]
  %v550 = vld [vmem:[%s4 + $0x50] sm:$0xff]
  %v551 = vld [vmem:[%s4 + $0x58] sm:$0xff]
  %v564 = vunpack.c.l.b16 %v528
  %v565 = vunpack.c.l.b16 %v529
  %v566 = vunpack.c.l.b16 %v530
  %v567 = vunpack.c.l.b16 %v531
  %v568 = vunpack.c.l.b16 %v532
  %v569 = vunpack.c.l.b16 %v533
  %v570 = vunpack.c.l.b16 %v534
  %v571 = vunpack.c.l.b16 %v535
  %v572 = vunpack.c.l.b16 %v536
  %v573 = vunpack.c.l.b16 %v537
  %v574 = vunpack.c.l.b16 %v538
  %v575 = vunpack.c.l.b16 %v539
  %v576 = vpack.c.b16 %v565, %v564
  %v577 = vpack.c.b16 %v567, %v566
  %v578 = vpack.c.b16 %v569, %v568
  %v579 = vpack.c.b16 %v571, %v570
  %v580 = vpack.c.b16 %v573, %v572
  %v581 = vpack.c.b16 %v575, %v574
  %vm582 = vcmask 261120
  %v584 = vsel %vm582, %v576, 0
  %v587 = vsel %vm582, %v577, 0
  %v590 = vsel %vm582, %v578, 0
  %v593 = vsel %vm582, %v579, 0
  %v596 = vsel %vm582, %v580, 0
  %v599 = vsel %vm582, %v581, 0
  %601 = vmatprep.subr.bf16.mxu0 0
  %602 = vmatpush1.bf16.msra.mxu0 %v512
  %603 = vmatprep.subr.bf16.mxu0 0
  %604 = vmatpush1.bf16.msra.mxu0 %v513
  %605 = vmatprep.subr.bf16.mxu0 0
  %606 = vmatpush1.bf16.msra.mxu0 0
  %607 = vmatprep.subr.bf16.mxu0 0
  %608 = vmatpush1.bf16.msra.mxu0 0
  %609 = vmatprep.subr.bf16.mxu0 0
  %610 = vmatpush1.bf16.msra.mxu0 0
  %611 = vmatprep.subr.bf16.mxu0 0
  %612 = vmatpush1.bf16.msra.mxu0 0
  %613 = vmatprep.subr.bf16.mxu0 0
  %614 = vmatpush1.bf16.msra.mxu0 0
  %615 = vmatprep.subr.bf16.mxu0 0
  %616 = vmatpush1.bf16.msra.mxu0 0
  %617 = vmatprep.subr.bf16.mxu0 0
  %618 = vmatpush1.bf16.msra.mxu0 0
  %619 = vmatprep.subr.bf16.mxu0 0
  %620 = vmatpush1.bf16.msra.mxu0 0
  %621 = vmatprep.subr.bf16.mxu0 0
  %622 = vmatpush1.bf16.msra.mxu0 0
  %623 = vmatprep.subr.bf16.mxu0 0
  %624 = vmatpush1.bf16.msra.mxu0 0
  %625 = vmatprep.subr.bf16.mxu0 0
  %626 = vmatpush1.bf16.msra.mxu0 0
  %627 = vmatprep.subr.bf16.mxu0 0
  %628 = vmatpush1.bf16.msra.mxu0 0
  %629 = vmatprep.subr.bf16.mxu0 0
  %630 = vmatpush1.bf16.msra.mxu0 0
  %631 = vmatprep.subr.bf16.mxu0 0
  %632 = vmatpush1.bf16.msra.mxu0 0
  %633 = vmatprep.mubr.bf16.mxu0 0
  %634 = vmatmul.mubr.bf16.gmra.mrb[0].mxu0 %v584
  %v635 = vpop.f32.mrb[0].mxu0
  %v636 = vadd.f32 %v540, %v635
  %v637 = vpop.f32.mrb[0].mxu0
  %v638 = vpop.f32.mrb[0].mxu0
  %v639 = vadd.f32 %v541, %v638
  %v640 = vpop.f32.mrb[0].mxu0
  %641 = vmatprep.mubr.bf16.mxu0 0
  %642 = vmatmul.mubr.bf16.gmra.mrb[0].mxu0 %v587
  %v643 = vpop.f32.mrb[0].mxu0
  %v644 = vadd.f32 %v542, %v643
  %v645 = vpop.f32.mrb[0].mxu0
  %v646 = vpop.f32.mrb[0].mxu0
  %v647 = vadd.f32 %v543, %v646
  %v648 = vpop.f32.mrb[0].mxu0
  %649 = vmatprep.mubr.bf16.mxu0 0
  %650 = vmatmul.mubr.bf16.gmra.mrb[0].mxu0 %v590
  %v651 = vpop.f32.mrb[0].mxu0
  %v652 = vadd.f32 %v544, %v651
  %v653 = vpop.f32.mrb[0].mxu0
  %v654 = vpop.f32.mrb[0].mxu0
  %v655 = vadd.f32 %v545, %v654
  %v656 = vpop.f32.mrb[0].mxu0
  %657 = vmatprep.mubr.bf16.mxu0 0
  %658 = vmatmul.mubr.bf16.gmra.mrb[0].mxu0 %v593
  %v659 = vpop.f32.mrb[0].mxu0
  %v660 = vadd.f32 %v546, %v659
  %v661 = vpop.f32.mrb[0].mxu0
  %v662 = vpop.f32.mrb[0].mxu0
  %v663 = vadd.f32 %v547, %v662
  %v664 = vpop.f32.mrb[0].mxu0
  %665 = vmatprep.mubr.bf16.mxu0 0
  %666 = vmatmul.mubr.bf16.gmra.mrb[0].mxu0 %v596
  %v667 = vpop.f32.mrb[0].mxu0
  %v668 = vadd.f32 %v548, %v667
  %v669 = vpop.f32.mrb[0].mxu0
  %v670 = vpop.f32.mrb[0].mxu0
  %v671 = vadd.f32 %v549, %v670
  %v672 = vpop.f32.mrb[0].mxu0
  %673 = vmatprep.mubr.bf16.mxu0 0
  %674 = vmatmul.mubr.bf16.gmra.mrb[0].mxu0 %v599
  %v675 = vpop.f32.mrb[0].mxu0
  %v676 = vadd.f32 %v550, %v675
  %v677 = vpop.f32.mrb[0].mxu0
  %v678 = vpop.f32.mrb[0].mxu0
  %v679 = vadd.f32 %v551, %v678
  %v680 = vpop.f32.mrb[0].mxu0
  %681 = vdwg.mxu0
  %vm682 = vcmp.ge.f32.partialorder %v636, 0.0
  %vm683 = vcmp.ge.f32.partialorder %v639, 0.0
  %vm684 = vcmp.ge.f32.partialorder %v644, 0.0
  %vm685 = vcmp.ge.f32.partialorder %v647, 0.0
  %v686 = vsel %vm682, 1, 0
  %v687 = vsel %vm683, 1, 0
  %v688 = vsel %vm684, 1, 0
  %v689 = vsel %vm685, 1, 0
  %v690 = vcvt.s32.f32 %v686
  %v691 = vcvt.s32.f32 %v687
  %v692 = vcvt.s32.f32 %v688
  %v693 = vcvt.s32.f32 %v689
  %vm694 = vcmp.ge.f32.partialorder %v652, 0.0
  %vm695 = vcmp.ge.f32.partialorder %v655, 0.0
  %vm696 = vcmp.ge.f32.partialorder %v660, 0.0
  %vm697 = vcmp.ge.f32.partialorder %v663, 0.0
  %v698 = vsel %vm694, 1, 0
  %v699 = vsel %vm695, 1, 0
  %v700 = vsel %vm696, 1, 0
  %v701 = vsel %vm697, 1, 0
  %v702 = vcvt.s32.f32 %v698
  %v703 = vcvt.s32.f32 %v699
  %v704 = vcvt.s32.f32 %v700
  %v705 = vcvt.s32.f32 %v701
  %v706 = vld [vmem:[%s5] sm:$0xff]
  %v707 = vld [vmem:[%s5 + $0x8] sm:$0xff]
  %v708 = vld [vmem:[%s5 + $0x10] sm:$0xff]
  %v709 = vld [vmem:[%s5 + $0x18] sm:$0xff]
  %v710 = vmul.f32 %v690, %v706
  %v711 = vmul.f32 %v691, %v707
  %v712 = vmul.f32 %v692, %v708
  %v713 = vmul.f32 %v693, %v709
  %v714 = vadd.f32 %v668, %v710
  %v715 = vadd.f32 %v671, %v711
  %v716 = vadd.f32 %v676, %v712
  %v717 = vadd.f32 %v679, %v713
  %vm718 = vcmp.ge.f32.partialorder %v714, 0.0
  %vm719 = vcmp.ge.f32.partialorder %v715, 0.0
  %vm720 = vcmp.ge.f32.partialorder %v716, 0.0
  %vm721 = vcmp.ge.f32.partialorder %v717, 0.0
  %v722 = vsel %vm718, 1, 0
  %v723 = vsel %vm719, 1, 0
  %v724 = vsel %vm720, 1, 0
  %v725 = vsel %vm721, 1, 0
  %v726 = vcvt.s32.f32 %v722
  %v727 = vcvt.s32.f32 %v723
  %v728 = vcvt.s32.f32 %v724
  %v729 = vcvt.s32.f32 %v725
  %v730 = vsub.f32 1.0, %v702
  %v731 = vsub.f32 1.0, %v703
  %v732 = vsub.f32 1.0, %v704
  %v733 = vsub.f32 1.0, %v705
  %v734 = vmul.f32 %v730, %v726
  %v735 = vmul.f32 %v731, %v727
  %v736 = vmul.f32 %v732, %v728
  %v737 = vmul.f32 %v733, %v729
  %v738 = vadd.f32 %v734, 0.0
  %v739 = vadd.f32 %v735, 0.0
  %v740 = vadd.f32 %v736, 0.0
  %v741 = vadd.f32 %v737, 0.0
  %vm742 = vcmp.gt.f32.partialorder %v738, 1.0
  %vm743 = vcmp.gt.f32.partialorder %v739, 1.0
  %vm744 = vcmp.gt.f32.partialorder %v740, 1.0
  %vm745 = vcmp.gt.f32.partialorder %v741, 1.0
  %v746 = vsel %vm742, 1, 0
  %v747 = vsel %vm743, 1, 0
  %v748 = vsel %vm744, 1, 0
  %v749 = vsel %vm745, 1, 0
  %v750 = vcvt.s32.f32 %v746
  %v751 = vcvt.s32.f32 %v747
  %v752 = vcvt.s32.f32 %v748
  %v753 = vcvt.s32.f32 %v749
  %v754 = vmul.f32 %v738, 0.99
  %v755 = vmul.f32 %v739, 0.99
  %v756 = vmul.f32 %v740, 0.99
  %v757 = vmul.f32 %v741, 0.99
  %v758 = vadd.f32 %v754, %v734
  %v759 = vadd.f32 %v755, %v735
  %v760 = vadd.f32 %v756, %v736
  %v761 = vadd.f32 %v757, %v737
  %v762 = vsub.f32 %v758, %v750
  %v763 = vsub.f32 %v759, %v751
  %v764 = vsub.f32 %v760, %v752
  %v765 = vsub.f32 %v761, %v753
  %vm766 = vcmp.gt.f32.partialorder %v762, 1.0
  %vm767 = vcmp.gt.f32.partialorder %v763, 1.0
  %vm768 = vcmp.gt.f32.partialorder %v764, 1.0
  %vm769 = vcmp.gt.f32.partialorder %v765, 1.0
  %v770 = vsel %vm766, 1, 0
  %v771 = vsel %vm767, 1, 0
  %v772 = vsel %vm768, 1, 0
  %v773 = vsel %vm769, 1, 0
  %v774 = vcvt.s32.f32 %v770
  %v775 = vcvt.s32.f32 %v771
  %v776 = vcvt.s32.f32 %v772
  %v777 = vcvt.s32.f32 %v773
  %v778 = vmul.f32 %v762, 0.99
  %v779 = vmul.f32 %v763, 0.99
  %v780 = vmul.f32 %v764, 0.99
  %v781 = vmul.f32 %v765, 0.99
  %v782 = vadd.f32 %v778, %v734
  %v783 = vadd.f32 %v779, %v735
  %v784 = vadd.f32 %v780, %v736
  %v785 = vadd.f32 %v781, %v737
  %v786 = vsub.f32 %v782, %v774
  %v787 = vsub.f32 %v783, %v775
  %v788 = vsub.f32 %v784, %v776
  %v789 = vsub.f32 %v785, %v777
  %vm790 = vcmp.gt.f32.partialorder %v786, 1.0
  %vm791 = vcmp.gt.f32.partialorder %v787, 1.0
  %vm792 = vcmp.gt.f32.partialorder %v788, 1.0
  %vm793 = vcmp.gt.f32.partialorder %v789, 1.0
  %v794 = vsel %vm790, 1, 0
  %v795 = vsel %vm791, 1, 0
  %v796 = vsel %vm792, 1, 0
  %v797 = vsel %vm793, 1, 0
  %v798 = vcvt.s32.f32 %v794
  %v799 = vcvt.s32.f32 %v795
  %v800 = vcvt.s32.f32 %v796
  %v801 = vcvt.s32.f32 %v797
  %v802 = vmul.f32 %v786, 0.99
  %v803 = vmul.f32 %v787, 0.99
  %v804 = vmul.f32 %v788, 0.99
  %v805 = vmul.f32 %v789, 0.99
  %v806 = vadd.f32 %v802, %v734
  %v807 = vadd.f32 %v803, %v735
  %v808 = vadd.f32 %v804, %v736
  %v809 = vadd.f32 %v805, %v737
  %v810 = vsub.f32 %v806, %v798
  %v811 = vsub.f32 %v807, %v799
  %v812 = vsub.f32 %v808, %v800
  %v813 = vsub.f32 %v809, %v801
  %vm814 = vcmp.gt.f32.partialorder %v810, 1.0
  %vm815 = vcmp.gt.f32.partialorder %v811, 1.0
  %vm816 = vcmp.gt.f32.partialorder %v812, 1.0
  %vm817 = vcmp.gt.f32.partialorder %v813, 1.0
  %v818 = vsel %vm814, 1, 0
  %v819 = vsel %vm815, 1, 0
  %v820 = vsel %vm816, 1, 0
  %v821 = vsel %vm817, 1, 0
  %v822 = vcvt.s32.f32 %v818
  %v823 = vcvt.s32.f32 %v819
  %v824 = vcvt.s32.f32 %v820
  %v825 = vcvt.s32.f32 %v821
  %826 = vmatprep.subr.bf16.mxu0 0
  %827 = vmatpush1.bf16.msra.mxu0 %v514
  %828 = vmatprep.subr.bf16.mxu0 0
  %829 = vmatpush1.bf16.msra.mxu0 %v515
  %830 = vmatprep.subr.bf16.mxu0 0
  %831 = vmatpush1.bf16.msra.mxu0 0
  %832 = vmatprep.subr.bf16.mxu0 0
  %833 = vmatpush1.bf16.msra.mxu0 0
  %834 = vmatprep.subr.bf16.mxu0 0
  %835 = vmatpush1.bf16.msra.mxu0 0
  %836 = vmatprep.subr.bf16.mxu0 0
  %837 = vmatpush1.bf16.msra.mxu0 0
  %838 = vmatprep.subr.bf16.mxu0 0
  %839 = vmatpush1.bf16.msra.mxu0 0
  %840 = vmatprep.subr.bf16.mxu0 0
  %841 = vmatpush1.bf16.msra.mxu0 0
  %842 = vmatprep.subr.bf16.mxu0 0
  %843 = vmatpush1.bf16.msra.mxu0 0
  %844 = vmatprep.subr.bf16.mxu0 0
  %845 = vmatpush1.bf16.msra.mxu0 0
  %846 = vmatprep.subr.bf16.mxu0 0
  %847 = vmatpush1.bf16.msra.mxu0 0
  %848 = vmatprep.subr.bf16.mxu0 0
  %849 = vmatpush1.bf16.msra.mxu0 0
  %850 = vmatprep.subr.bf16.mxu0 0
  %851 = vmatpush1.bf16.msra.mxu0 0
  %852 = vmatprep.subr.bf16.mxu0 0
  %853 = vmatpush1.bf16.msra.mxu0 0
  %854 = vmatprep.subr.bf16.mxu0 0
  %855 = vmatpush1.bf16.msra.mxu0 0
  %856 = vmatprep.subr.bf16.mxu0 0
  %857 = vmatpush1.bf16.msra.mxu0 0
  %858 = vmatprep.mubr.bf16.mxu0 0
  %859 = vmatmul.mubr.bf16.gmra.mrb[0].mxu0 %v584
  %v860 = vpop.f32.mrb[0].mxu0
  %v861 = vadd.f32 %v540, %v860
  %v862 = vpop.f32.mrb[0].mxu0
  %v863 = vpop.f32.mrb[0].mxu0
  %v864 = vadd.f32 %v541, %v863
  %v865 = vpop.f32.mrb[0].mxu0
  %866 = vmatprep.mubr.bf16.mxu0 0
  %867 = vmatmul.mubr.bf16.gmra.mrb[0].mxu0 %v587
  %v868 = vpop.f32.mrb[0].mxu0
  %v869 = vadd.f32 %v542, %v868
  %v870 = vpop.f32.mrb[0].mxu0
  %v871 = vpop.f32.mrb[0].mxu0
  %v872 = vadd.f32 %v543, %v871
  %v873 = vpop.f32.mrb[0].mxu0
  %874 = vmatprep.mubr.bf16.mxu0 0
  %875 = vmatmul.mubr.bf16.gmra.mrb[0].mxu0 %v590
  %v876 = vpop.f32.mrb[0].mxu0
  %v877 = vadd.f32 %v544, %v876
  %v878 = vpop.f32.mrb[0].mxu0
  %v879 = vpop.f32.mrb[0].mxu0
  %v880 = vadd.f32 %v545, %v879
  %v881 = vpop.f32.mrb[0].mxu0
  %882 = vmatprep.mubr.bf16.mxu0 0
  %883 = vmatmul.mubr.bf16.gmra.mrb[0].mxu0 %v593
  %v884 = vpop.f32.mrb[0].mxu0
  %v885 = vadd.f32 %v546, %v884
  %v886 = vpop.f32.mrb[0].mxu0
  %v887 = vpop.f32.mrb[0].mxu0
  %v888 = vadd.f32 %v547, %v887
  %v889 = vpop.f32.mrb[0].mxu0
  %890 = vmatprep.mubr.bf16.mxu0 0
  %891 = vmatmul.mubr.bf16.gmra.mrb[0].mxu0 %v596
  %v892 = vpop.f32.mrb[0].mxu0
  %v893 = vadd.f32 %v548, %v892
  %v894 = vpop.f32.mrb[0].mxu0
  %v895 = vpop.f32.mrb[0].mxu0
  %v896 = vadd.f32 %v549, %v895
  %v897 = vpop.f32.mrb[0].mxu0
  %898 = vmatprep.mubr.bf16.mxu0 0
  %899 = vmatmul.mubr.bf16.gmra.mrb[0].mxu0 %v599
  %v900 = vpop.f32.mrb[0].mxu0
  %v901 = vadd.f32 %v550, %v900
  %v902 = vpop.f32.mrb[0].mxu0
  %v903 = vpop.f32.mrb[0].mxu0
  %v904 = vadd.f32 %v551, %v903
  %v905 = vpop.f32.mrb[0].mxu0
  %906 = vdwg.mxu0
  %vm907 = vcmp.ge.f32.partialorder %v861, 0.0
  %vm908 = vcmp.ge.f32.partialorder %v864, 0.0
  %vm909 = vcmp.ge.f32.partialorder %v869, 0.0
  %vm910 = vcmp.ge.f32.partialorder %v872, 0.0
  %v911 = vsel %vm907, 1, 0
  %v912 = vsel %vm908, 1, 0
  %v913 = vsel %vm909, 1, 0
  %v914 = vsel %vm910, 1, 0
  %v915 = vcvt.s32.f32 %v911
  %v916 = vcvt.s32.f32 %v912
  %v917 = vcvt.s32.f32 %v913
  %v918 = vcvt.s32.f32 %v914
  %vm919 = vcmp.ge.f32.partialorder %v877, 0.0
  %vm920 = vcmp.ge.f32.partialorder %v880, 0.0
  %vm921 = vcmp.ge.f32.partialorder %v885, 0.0
  %vm922 = vcmp.ge.f32.partialorder %v888, 0.0
  %v923 = vsel %vm919, 1, 0
  %v924 = vsel %vm920, 1, 0
  %v925 = vsel %vm921, 1, 0
  %v926 = vsel %vm922, 1, 0
  %v927 = vcvt.s32.f32 %v923
  %v928 = vcvt.s32.f32 %v924
  %v929 = vcvt.s32.f32 %v925
  %v930 = vcvt.s32.f32 %v926
  %v931 = vmul.f32 %v915, %v706
  %v932 = vmul.f32 %v916, %v707
  %v933 = vmul.f32 %v917, %v708
  %v934 = vmul.f32 %v918, %v709
  %v935 = vadd.f32 %v893, %v931
  %v936 = vadd.f32 %v896, %v932
  %v937 = vadd.f32 %v901, %v933
  %v938 = vadd.f32 %v904, %v934
  %vm939 = vcmp.ge.f32.partialorder %v935, 0.0
  %vm940 = vcmp.ge.f32.partialorder %v936, 0.0
  %vm941 = vcmp.ge.f32.partialorder %v937, 0.0
  %vm942 = vcmp.ge.f32.partialorder %v938, 0.0
  %v943 = vsel %vm939, 1, 0
  %v944 = vsel %vm940, 1, 0
  %v945 = vsel %vm941, 1, 0
  %v946 = vsel %vm942, 1, 0
  %v947 = vcvt.s32.f32 %v943
  %v948 = vcvt.s32.f32 %v944
  %v949 = vcvt.s32.f32 %v945
  %v950 = vcvt.s32.f32 %v946
  %v951 = vsub.f32 1.0, %v927
  %v952 = vsub.f32 1.0, %v928
  %v953 = vsub.f32 1.0, %v929
  %v954 = vsub.f32 1.0, %v930
  %v955 = vmul.f32 %v951, %v947
  %v956 = vmul.f32 %v952, %v948
  %v957 = vmul.f32 %v953, %v949
  %v958 = vmul.f32 %v954, %v950
  %v959 = vmul.f32 %v810, 0.99
  %v960 = vmul.f32 %v811, 0.99
  %v961 = vmul.f32 %v812, 0.99
  %v962 = vmul.f32 %v813, 0.99
  %v963 = vadd.f32 %v959, %v955
  %v964 = vadd.f32 %v960, %v956
  %v965 = vadd.f32 %v961, %v957
  %v966 = vadd.f32 %v962, %v958
  %v967 = vsub.f32 %v963, %v822
  %v968 = vsub.f32 %v964, %v823
  %v969 = vsub.f32 %v965, %v824
  %v970 = vsub.f32 %v966, %v825
  %vm971 = vcmp.gt.f32.partialorder %v967, 1.0
  %vm972 = vcmp.gt.f32.partialorder %v968, 1.0
  %vm973 = vcmp.gt.f32.partialorder %v969, 1.0
  %vm974 = vcmp.gt.f32.partialorder %v970, 1.0
  %v975 = vsel %vm971, 1, 0
  %v976 = vsel %vm972, 1, 0
  %v977 = vsel %vm973, 1, 0
  %v978 = vsel %vm974, 1, 0
  %v979 = vcvt.s32.f32 %v975
  %v980 = vcvt.s32.f32 %v976
  %v981 = vcvt.s32.f32 %v977
  %v982 = vcvt.s32.f32 %v978
  %v983 = vmul.f32 %v967, 0.99
  %v984 = vmul.f32 %v968, 0.99
  %v985 = vmul.f32 %v969, 0.99
  %v986 = vmul.f32 %v970, 0.99
  %v987 = vadd.f32 %v983, %v955
  %v988 = vadd.f32 %v984, %v956
  %v989 = vadd.f32 %v985, %v957
  %v990 = vadd.f32 %v986, %v958
  %v991 = vsub.f32 %v987, %v979
  %v992 = vsub.f32 %v988, %v980
  %v993 = vsub.f32 %v989, %v981
  %v994 = vsub.f32 %v990, %v982
  %vm995 = vcmp.gt.f32.partialorder %v991, 1.0
  %vm996 = vcmp.gt.f32.partialorder %v992, 1.0
  %vm997 = vcmp.gt.f32.partialorder %v993, 1.0
  %vm998 = vcmp.gt.f32.partialorder %v994, 1.0
  %v999 = vsel %vm995, 1, 0
  %v1000 = vsel %vm996, 1, 0
  %v1001 = vsel %vm997, 1, 0
  %v1002 = vsel %vm998, 1, 0
  %v1003 = vcvt.s32.f32 %v999
  %v1004 = vcvt.s32.f32 %v1000
  %v1005 = vcvt.s32.f32 %v1001
  %v1006 = vcvt.s32.f32 %v1002
  %v1007 = vmul.f32 %v991, 0.99
  %v1008 = vmul.f32 %v992, 0.99
  %v1009 = vmul.f32 %v993, 0.99
  %v1010 = vmul.f32 %v994, 0.99
  %v1011 = vadd.f32 %v1007, %v955
  %v1012 = vadd.f32 %v1008, %v956
  %v1013 = vadd.f32 %v1009, %v957
  %v1014 = vadd.f32 %v1010, %v958
  %v1015 = vsub.f32 %v1011, %v1003
  %v1016 = vsub.f32 %v1012, %v1004
  %v1017 = vsub.f32 %v1013, %v1005
  %v1018 = vsub.f32 %v1014, %v1006
  %vm1019 = vcmp.gt.f32.partialorder %v1015, 1.0
  %vm1020 = vcmp.gt.f32.partialorder %v1016, 1.0
  %vm1021 = vcmp.gt.f32.partialorder %v1017, 1.0
  %vm1022 = vcmp.gt.f32.partialorder %v1018, 1.0
  %v1023 = vsel %vm1019, 1, 0
  %v1024 = vsel %vm1020, 1, 0
  %v1025 = vsel %vm1021, 1, 0
  %v1026 = vsel %vm1022, 1, 0
  %v1027 = vcvt.s32.f32 %v1023
  %v1028 = vcvt.s32.f32 %v1024
  %v1029 = vcvt.s32.f32 %v1025
  %v1030 = vcvt.s32.f32 %v1026
  %v1031 = vmul.f32 %v1015, 0.99
  %v1032 = vmul.f32 %v1016, 0.99
  %v1033 = vmul.f32 %v1017, 0.99
  %v1034 = vmul.f32 %v1018, 0.99
  %v1035 = vadd.f32 %v1031, %v955
  %v1036 = vadd.f32 %v1032, %v956
  %v1037 = vadd.f32 %v1033, %v957
  %v1038 = vadd.f32 %v1034, %v958
  %v1039 = vsub.f32 %v1035, %v1027
  %v1040 = vsub.f32 %v1036, %v1028
  %v1041 = vsub.f32 %v1037, %v1029
  %v1042 = vsub.f32 %v1038, %v1030
  %vm1043 = vcmp.gt.f32.partialorder %v1039, 1.0
  %vm1044 = vcmp.gt.f32.partialorder %v1040, 1.0
  %vm1045 = vcmp.gt.f32.partialorder %v1041, 1.0
  %vm1046 = vcmp.gt.f32.partialorder %v1042, 1.0
  %v1047 = vsel %vm1043, 1, 0
  %v1048 = vsel %vm1044, 1, 0
  %v1049 = vsel %vm1045, 1, 0
  %v1050 = vsel %vm1046, 1, 0
  %v1051 = vcvt.s32.f32 %v1047
  %v1052 = vcvt.s32.f32 %v1048
  %v1053 = vcvt.s32.f32 %v1049
  %v1054 = vcvt.s32.f32 %v1050
  %1055 = vmatprep.subr.bf16.mxu0 0
  %1056 = vmatpush1.bf16.msra.mxu0 %v516
  %1057 = vmatprep.subr.bf16.mxu0 0
  %1058 = vmatpush1.bf16.msra.mxu0 %v517
  %1059 = vmatprep.subr.bf16.mxu0 0
  %1060 = vmatpush1.bf16.msra.mxu0 0
  %1061 = vmatprep.subr.bf16.mxu0 0
  %1062 = vmatpush1.bf16.msra.mxu0 0
  %1063 = vmatprep.subr.bf16.mxu0 0
  %1064 = vmatpush1.bf16.msra.mxu0 0
  %1065 = vmatprep.subr.bf16.mxu0 0
  %1066 = vmatpush1.bf16.msra.mxu0 0
  %1067 = vmatprep.subr.bf16.mxu0 0
  %1068 = vmatpush1.bf16.msra.mxu0 0
  %1069 = vmatprep.subr.bf16.mxu0 0
  %1070 = vmatpush1.bf16.msra.mxu0 0
  %1071 = vmatprep.subr.bf16.mxu0 0
  %1072 = vmatpush1.bf16.msra.mxu0 0
  %1073 = vmatprep.subr.bf16.mxu0 0
  %1074 = vmatpush1.bf16.msra.mxu0 0
  %1075 = vmatprep.subr.bf16.mxu0 0
  %1076 = vmatpush1.bf16.msra.mxu0 0
  %1077 = vmatprep.subr.bf16.mxu0 0
  %1078 = vmatpush1.bf16.msra.mxu0 0
  %1079 = vmatprep.subr.bf16.mxu0 0
  %1080 = vmatpush1.bf16.msra.mxu0 0
  %1081 = vmatprep.subr.bf16.mxu0 0
  %1082 = vmatpush1.bf16.msra.mxu0 0
  %1083 = vmatprep.subr.bf16.mxu0 0
  %1084 = vmatpush1.bf16.msra.mxu0 0
  %1085 = vmatprep.subr.bf16.mxu0 0
  %1086 = vmatpush1.bf16.msra.mxu0 0
  %1087 = vmatprep.mubr.bf16.mxu0 0
  %1088 = vmatmul.mubr.bf16.gmra.mrb[0].mxu0 %v584
  %v1089 = vpop.f32.mrb[0].mxu0
  %v1090 = vadd.f32 %v540, %v1089
  %v1091 = vpop.f32.mrb[0].mxu0
  %v1092 = vpop.f32.mrb[0].mxu0
  %v1093 = vadd.f32 %v541, %v1092
  %v1094 = vpop.f32.mrb[0].mxu0
  %1095 = vmatprep.mubr.bf16.mxu0 0
  %1096 = vmatmul.mubr.bf16.gmra.mrb[0].mxu0 %v587
  %v1097 = vpop.f32.mrb[0].mxu0
  %v1098 = vadd.f32 %v542, %v1097
  %v1099 = vpop.f32.mrb[0].mxu0
  %v1100 = vpop.f32.mrb[0].mxu0
  %v1101 = vadd.f32 %v543, %v1100
  %v1102 = vpop.f32.mrb[0].mxu0
  %1103 = vmatprep.mubr.bf16.mxu0 0
  %1104 = vmatmul.mubr.bf16.gmra.mrb[0].mxu0 %v590
  %v1105 = vpop.f32.mrb[0].mxu0
  %v1106 = vadd.f32 %v544, %v1105
  %v1107 = vpop.f32.mrb[0].mxu0
  %v1108 = vpop.f32.mrb[0].mxu0
  %v1109 = vadd.f32 %v545, %v1108
  %v1110 = vpop.f32.mrb[0].mxu0
  %1111 = vmatprep.mubr.bf16.mxu0 0
  %1112 = vmatmul.mubr.bf16.gmra.mrb[0].mxu0 %v593
  %v1113 = vpop.f32.mrb[0].mxu0
  %v1114 = vadd.f32 %v546, %v1113
  %v1115 = vpop.f32.mrb[0].mxu0
  %v1116 = vpop.f32.mrb[0].mxu0
  %v1117 = vadd.f32 %v547, %v1116
  %v1118 = vpop.f32.mrb[0].mxu0
  %1119 = vmatprep.mubr.bf16.mxu0 0
  %1120 = vmatmul.mubr.bf16.gmra.mrb[0].mxu0 %v596
  %v1121 = vpop.f32.mrb[0].mxu0
  %v1122 = vadd.f32 %v548, %v1121
  %v1123 = vpop.f32.mrb[0].mxu0
  %v1124 = vpop.f32.mrb[0].mxu0
  %v1125 = vadd.f32 %v549, %v1124
  %v1126 = vpop.f32.mrb[0].mxu0
  %1127 = vmatprep.mubr.bf16.mxu0 0
  %1128 = vmatmul.mubr.bf16.gmra.mrb[0].mxu0 %v599
  %v1129 = vpop.f32.mrb[0].mxu0
  %v1130 = vadd.f32 %v550, %v1129
  %v1131 = vpop.f32.mrb[0].mxu0
  %v1132 = vpop.f32.mrb[0].mxu0
  %v1133 = vadd.f32 %v551, %v1132
  %v1134 = vpop.f32.mrb[0].mxu0
  %1135 = vdwg.mxu0
  %vm1136 = vcmp.ge.f32.partialorder %v1090, 0.0
  %vm1137 = vcmp.ge.f32.partialorder %v1093, 0.0
  %vm1138 = vcmp.ge.f32.partialorder %v1098, 0.0
  %vm1139 = vcmp.ge.f32.partialorder %v1101, 0.0
  %v1140 = vsel %vm1136, 1, 0
  %v1141 = vsel %vm1137, 1, 0
  %v1142 = vsel %vm1138, 1, 0
  %v1143 = vsel %vm1139, 1, 0
  %v1144 = vcvt.s32.f32 %v1140
  %v1145 = vcvt.s32.f32 %v1141
  %v1146 = vcvt.s32.f32 %v1142
  %v1147 = vcvt.s32.f32 %v1143
  %vm1148 = vcmp.ge.f32.partialorder %v1106, 0.0
  %vm1149 = vcmp.ge.f32.partialorder %v1109, 0.0
  %vm1150 = vcmp.ge.f32.partialorder %v1114, 0.0
  %vm1151 = vcmp.ge.f32.partialorder %v1117, 0.0
  %v1152 = vsel %vm1148, 1, 0
  %v1153 = vsel %vm1149, 1, 0
  %v1154 = vsel %vm1150, 1, 0
  %v1155 = vsel %vm1151, 1, 0
  %v1156 = vcvt.s32.f32 %v1152
  %v1157 = vcvt.s32.f32 %v1153
  %v1158 = vcvt.s32.f32 %v1154
  %v1159 = vcvt.s32.f32 %v1155
  %v1160 = vmul.f32 %v1144, %v706
  %v1161 = vmul.f32 %v1145, %v707
  %v1162 = vmul.f32 %v1146, %v708
  %v1163 = vmul.f32 %v1147, %v709
  %v1164 = vadd.f32 %v1122, %v1160
  %v1165 = vadd.f32 %v1125, %v1161
  %v1166 = vadd.f32 %v1130, %v1162
  %v1167 = vadd.f32 %v1133, %v1163
  %vm1168 = vcmp.ge.f32.partialorder %v1164, 0.0
  %vm1169 = vcmp.ge.f32.partialorder %v1165, 0.0
  %vm1170 = vcmp.ge.f32.partialorder %v1166, 0.0
  %vm1171 = vcmp.ge.f32.partialorder %v1167, 0.0
  %v1172 = vsel %vm1168, 1, 0
  %v1173 = vsel %vm1169, 1, 0
  %v1174 = vsel %vm1170, 1, 0
  %v1175 = vsel %vm1171, 1, 0
  %v1176 = vcvt.s32.f32 %v1172
  %v1177 = vcvt.s32.f32 %v1173
  %v1178 = vcvt.s32.f32 %v1174
  %v1179 = vcvt.s32.f32 %v1175
  %v1180 = vsub.f32 1.0, %v1156
  %v1181 = vsub.f32 1.0, %v1157
  %v1182 = vsub.f32 1.0, %v1158
  %v1183 = vsub.f32 1.0, %v1159
  %v1184 = vmul.f32 %v1180, %v1176
  %v1185 = vmul.f32 %v1181, %v1177
  %v1186 = vmul.f32 %v1182, %v1178
  %v1187 = vmul.f32 %v1183, %v1179
  %v1188 = vmul.f32 %v1039, 0.99
  %v1189 = vmul.f32 %v1040, 0.99
  %v1190 = vmul.f32 %v1041, 0.99
  %v1191 = vmul.f32 %v1042, 0.99
  %v1192 = vadd.f32 %v1188, %v1184
  %v1193 = vadd.f32 %v1189, %v1185
  %v1194 = vadd.f32 %v1190, %v1186
  %v1195 = vadd.f32 %v1191, %v1187
  %v1196 = vsub.f32 %v1192, %v1051
  %v1197 = vsub.f32 %v1193, %v1052
  %v1198 = vsub.f32 %v1194, %v1053
  %v1199 = vsub.f32 %v1195, %v1054
  %vm1200 = vcmp.gt.f32.partialorder %v1196, 1.0
  %vm1201 = vcmp.gt.f32.partialorder %v1197, 1.0
  %vm1202 = vcmp.gt.f32.partialorder %v1198, 1.0
  %vm1203 = vcmp.gt.f32.partialorder %v1199, 1.0
  %v1204 = vsel %vm1200, 1, 0
  %v1205 = vsel %vm1201, 1, 0
  %v1206 = vsel %vm1202, 1, 0
  %v1207 = vsel %vm1203, 1, 0
  %v1208 = vcvt.s32.f32 %v1204
  %v1209 = vcvt.s32.f32 %v1205
  %v1210 = vcvt.s32.f32 %v1206
  %v1211 = vcvt.s32.f32 %v1207
  %v1212 = vmul.f32 %v1196, 0.99
  %v1213 = vmul.f32 %v1197, 0.99
  %v1214 = vmul.f32 %v1198, 0.99
  %v1215 = vmul.f32 %v1199, 0.99
  %v1216 = vadd.f32 %v1212, %v1184
  %v1217 = vadd.f32 %v1213, %v1185
  %v1218 = vadd.f32 %v1214, %v1186
  %v1219 = vadd.f32 %v1215, %v1187
  %v1220 = vsub.f32 %v1216, %v1208
  %v1221 = vsub.f32 %v1217, %v1209
  %v1222 = vsub.f32 %v1218, %v1210
  %v1223 = vsub.f32 %v1219, %v1211
  %vm1224 = vcmp.gt.f32.partialorder %v1220, 1.0
  %vm1225 = vcmp.gt.f32.partialorder %v1221, 1.0
  %vm1226 = vcmp.gt.f32.partialorder %v1222, 1.0
  %vm1227 = vcmp.gt.f32.partialorder %v1223, 1.0
  %v1228 = vsel %vm1224, 1, 0
  %v1229 = vsel %vm1225, 1, 0
  %v1230 = vsel %vm1226, 1, 0
  %v1231 = vsel %vm1227, 1, 0
  %v1232 = vcvt.s32.f32 %v1228
  %v1233 = vcvt.s32.f32 %v1229
  %v1234 = vcvt.s32.f32 %v1230
  %v1235 = vcvt.s32.f32 %v1231
  %v1236 = vmul.f32 %v1220, 0.99
  %v1237 = vmul.f32 %v1221, 0.99
  %v1238 = vmul.f32 %v1222, 0.99
  %v1239 = vmul.f32 %v1223, 0.99
  %v1240 = vadd.f32 %v1236, %v1184
  %v1241 = vadd.f32 %v1237, %v1185
  %v1242 = vadd.f32 %v1238, %v1186
  %v1243 = vadd.f32 %v1239, %v1187
  %v1244 = vsub.f32 %v1240, %v1232
  %v1245 = vsub.f32 %v1241, %v1233
  %v1246 = vsub.f32 %v1242, %v1234
  %v1247 = vsub.f32 %v1243, %v1235
  %vm1248 = vcmp.gt.f32.partialorder %v1244, 1.0
  %vm1249 = vcmp.gt.f32.partialorder %v1245, 1.0
  %vm1250 = vcmp.gt.f32.partialorder %v1246, 1.0
  %vm1251 = vcmp.gt.f32.partialorder %v1247, 1.0
  %v1252 = vsel %vm1248, 1, 0
  %v1253 = vsel %vm1249, 1, 0
  %v1254 = vsel %vm1250, 1, 0
  %v1255 = vsel %vm1251, 1, 0
  %v1256 = vcvt.s32.f32 %v1252
  %v1257 = vcvt.s32.f32 %v1253
  %v1258 = vcvt.s32.f32 %v1254
  %v1259 = vcvt.s32.f32 %v1255
  %v1260 = vmul.f32 %v1244, 0.99
  %v1261 = vmul.f32 %v1245, 0.99
  %v1262 = vmul.f32 %v1246, 0.99
  %v1263 = vmul.f32 %v1247, 0.99
  %v1264 = vadd.f32 %v1260, %v1184
  %v1265 = vadd.f32 %v1261, %v1185
  %v1266 = vadd.f32 %v1262, %v1186
  %v1267 = vadd.f32 %v1263, %v1187
  %v1268 = vsub.f32 %v1264, %v1256
  %v1269 = vsub.f32 %v1265, %v1257
  %v1270 = vsub.f32 %v1266, %v1258
  %v1271 = vsub.f32 %v1267, %v1259
  %vm1272 = vcmp.gt.f32.partialorder %v1268, 1.0
  %vm1273 = vcmp.gt.f32.partialorder %v1269, 1.0
  %vm1274 = vcmp.gt.f32.partialorder %v1270, 1.0
  %vm1275 = vcmp.gt.f32.partialorder %v1271, 1.0
  %v1276 = vsel %vm1272, 1, 0
  %v1277 = vsel %vm1273, 1, 0
  %v1278 = vsel %vm1274, 1, 0
  %v1279 = vsel %vm1275, 1, 0
  %v1280 = vcvt.s32.f32 %v1276
  %v1281 = vcvt.s32.f32 %v1277
  %v1282 = vcvt.s32.f32 %v1278
  %v1283 = vcvt.s32.f32 %v1279
  %1284 = vmatprep.subr.bf16.mxu0 0
  %1285 = vmatpush1.bf16.msra.mxu0 %v518
  %1286 = vmatprep.subr.bf16.mxu0 0
  %1287 = vmatpush1.bf16.msra.mxu0 %v519
  %1288 = vmatprep.subr.bf16.mxu0 0
  %1289 = vmatpush1.bf16.msra.mxu0 0
  %1290 = vmatprep.subr.bf16.mxu0 0
  %1291 = vmatpush1.bf16.msra.mxu0 0
  %1292 = vmatprep.subr.bf16.mxu0 0
  %1293 = vmatpush1.bf16.msra.mxu0 0
  %1294 = vmatprep.subr.bf16.mxu0 0
  %1295 = vmatpush1.bf16.msra.mxu0 0
  %1296 = vmatprep.subr.bf16.mxu0 0
  %1297 = vmatpush1.bf16.msra.mxu0 0
  %1298 = vmatprep.subr.bf16.mxu0 0
  %1299 = vmatpush1.bf16.msra.mxu0 0
  %1300 = vmatprep.subr.bf16.mxu0 0
  %1301 = vmatpush1.bf16.msra.mxu0 0
  %1302 = vmatprep.subr.bf16.mxu0 0
  %1303 = vmatpush1.bf16.msra.mxu0 0
  %1304 = vmatprep.subr.bf16.mxu0 0
  %1305 = vmatpush1.bf16.msra.mxu0 0
  %1306 = vmatprep.subr.bf16.mxu0 0
  %1307 = vmatpush1.bf16.msra.mxu0 0
  %1308 = vmatprep.subr.bf16.mxu0 0
  %1309 = vmatpush1.bf16.msra.mxu0 0
  %1310 = vmatprep.subr.bf16.mxu0 0
  %1311 = vmatpush1.bf16.msra.mxu0 0
  %1312 = vmatprep.subr.bf16.mxu0 0
  %1313 = vmatpush1.bf16.msra.mxu0 0
  %1314 = vmatprep.subr.bf16.mxu0 0
  %1315 = vmatpush1.bf16.msra.mxu0 0
  %1316 = vmatprep.mubr.bf16.mxu0 0
  %1317 = vmatmul.mubr.bf16.gmra.mrb[0].mxu0 %v584
  %v1318 = vpop.f32.mrb[0].mxu0
  %v1319 = vadd.f32 %v540, %v1318
  %v1320 = vpop.f32.mrb[0].mxu0
  %v1321 = vpop.f32.mrb[0].mxu0
  %v1322 = vadd.f32 %v541, %v1321
  %v1323 = vpop.f32.mrb[0].mxu0
  %1324 = vmatprep.mubr.bf16.mxu0 0
  %1325 = vmatmul.mubr.bf16.gmra.mrb[0].mxu0 %v587
  %v1326 = vpop.f32.mrb[0].mxu0
  %v1327 = vadd.f32 %v542, %v1326
  %v1328 = vpop.f32.mrb[0].mxu0
  %v1329 = vpop.f32.mrb[0].mxu0
  %v1330 = vadd.f32 %v543, %v1329
  %v1331 = vpop.f32.mrb[0].mxu0
  %1332 = vmatprep.mubr.bf16.mxu0 0
  %1333 = vmatmul.mubr.bf16.gmra.mrb[0].mxu0 %v590
  %v1334 = vpop.f32.mrb[0].mxu0
  %v1335 = vadd.f32 %v544, %v1334
  %v1336 = vpop.f32.mrb[0].mxu0
  %v1337 = vpop.f32.mrb[0].mxu0
  %v1338 = vadd.f32 %v545, %v1337
  %v1339 = vpop.f32.mrb[0].mxu0
  %1340 = vmatprep.mubr.bf16.mxu0 0
  %1341 = vmatmul.mubr.bf16.gmra.mrb[0].mxu0 %v593
  %v1342 = vpop.f32.mrb[0].mxu0
  %v1343 = vadd.f32 %v546, %v1342
  %v1344 = vpop.f32.mrb[0].mxu0
  %v1345 = vpop.f32.mrb[0].mxu0
  %v1346 = vadd.f32 %v547, %v1345
  %v1347 = vpop.f32.mrb[0].mxu0
  %1348 = vmatprep.mubr.bf16.mxu0 0
  %1349 = vmatmul.mubr.bf16.gmra.mrb[0].mxu0 %v596
  %v1350 = vpop.f32.mrb[0].mxu0
  %v1351 = vadd.f32 %v548, %v1350
  %v1352 = vpop.f32.mrb[0].mxu0
  %v1353 = vpop.f32.mrb[0].mxu0
  %v1354 = vadd.f32 %v549, %v1353
  %v1355 = vpop.f32.mrb[0].mxu0
  %1356 = vmatprep.mubr.bf16.mxu0 0
  %1357 = vmatmul.mubr.bf16.gmra.mrb[0].mxu0 %v599
  %v1358 = vpop.f32.mrb[0].mxu0
  %v1359 = vadd.f32 %v550, %v1358
  %v1360 = vpop.f32.mrb[0].mxu0
  %v1361 = vpop.f32.mrb[0].mxu0
  %v1362 = vadd.f32 %v551, %v1361
  %v1363 = vpop.f32.mrb[0].mxu0
  %1364 = vdwg.mxu0
  %vm1365 = vcmp.ge.f32.partialorder %v1319, 0.0
  %vm1366 = vcmp.ge.f32.partialorder %v1322, 0.0
  %vm1367 = vcmp.ge.f32.partialorder %v1327, 0.0
  %vm1368 = vcmp.ge.f32.partialorder %v1330, 0.0
  %v1369 = vsel %vm1365, 1, 0
  %v1370 = vsel %vm1366, 1, 0
  %v1371 = vsel %vm1367, 1, 0
  %v1372 = vsel %vm1368, 1, 0
  %v1373 = vcvt.s32.f32 %v1369
  %v1374 = vcvt.s32.f32 %v1370
  %v1375 = vcvt.s32.f32 %v1371
  %v1376 = vcvt.s32.f32 %v1372
  %vm1377 = vcmp.ge.f32.partialorder %v1335, 0.0
  %vm1378 = vcmp.ge.f32.partialorder %v1338, 0.0
  %vm1379 = vcmp.ge.f32.partialorder %v1343, 0.0
  %vm1380 = vcmp.ge.f32.partialorder %v1346, 0.0
  %v1381 = vsel %vm1377, 1, 0
  %v1382 = vsel %vm1378, 1, 0
  %v1383 = vsel %vm1379, 1, 0
  %v1384 = vsel %vm1380, 1, 0
  %v1385 = vcvt.s32.f32 %v1381
  %v1386 = vcvt.s32.f32 %v1382
  %v1387 = vcvt.s32.f32 %v1383
  %v1388 = vcvt.s32.f32 %v1384
  %v1389 = vmul.f32 %v1373, %v706
  %v1390 = vmul.f32 %v1374, %v707
  %v1391 = vmul.f32 %v1375, %v708
  %v1392 = vmul.f32 %v1376, %v709
  %v1393 = vadd.f32 %v1351, %v1389
  %v1394 = vadd.f32 %v1354, %v1390
  %v1395 = vadd.f32 %v1359, %v1391
  %v1396 = vadd.f32 %v1362, %v1392
  %vm1397 = vcmp.ge.f32.partialorder %v1393, 0.0
  %vm1398 = vcmp.ge.f32.partialorder %v1394, 0.0
  %vm1399 = vcmp.ge.f32.partialorder %v1395, 0.0
  %vm1400 = vcmp.ge.f32.partialorder %v1396, 0.0
  %v1401 = vsel %vm1397, 1, 0
  %v1402 = vsel %vm1398, 1, 0
  %v1403 = vsel %vm1399, 1, 0
  %v1404 = vsel %vm1400, 1, 0
  %v1405 = vcvt.s32.f32 %v1401
  %v1406 = vcvt.s32.f32 %v1402
  %v1407 = vcvt.s32.f32 %v1403
  %v1408 = vcvt.s32.f32 %v1404
  %v1409 = vsub.f32 1.0, %v1385
  %v1410 = vsub.f32 1.0, %v1386
  %v1411 = vsub.f32 1.0, %v1387
  %v1412 = vsub.f32 1.0, %v1388
  %v1413 = vmul.f32 %v1409, %v1405
  %v1414 = vmul.f32 %v1410, %v1406
  %v1415 = vmul.f32 %v1411, %v1407
  %v1416 = vmul.f32 %v1412, %v1408
  %v1417 = vmul.f32 %v1268, 0.99
  %v1418 = vmul.f32 %v1269, 0.99
  %v1419 = vmul.f32 %v1270, 0.99
  %v1420 = vmul.f32 %v1271, 0.99
  %v1421 = vadd.f32 %v1417, %v1413
  %v1422 = vadd.f32 %v1418, %v1414
  %v1423 = vadd.f32 %v1419, %v1415
  %v1424 = vadd.f32 %v1420, %v1416
  %v1425 = vsub.f32 %v1421, %v1280
  %v1426 = vsub.f32 %v1422, %v1281
  %v1427 = vsub.f32 %v1423, %v1282
  %v1428 = vsub.f32 %v1424, %v1283
  %vm1429 = vcmp.gt.f32.partialorder %v1425, 1.0
  %vm1430 = vcmp.gt.f32.partialorder %v1426, 1.0
  %vm1431 = vcmp.gt.f32.partialorder %v1427, 1.0
  %vm1432 = vcmp.gt.f32.partialorder %v1428, 1.0
  %v1433 = vsel %vm1429, 1, 0
  %v1434 = vsel %vm1430, 1, 0
  %v1435 = vsel %vm1431, 1, 0
  %v1436 = vsel %vm1432, 1, 0
  %v1437 = vcvt.s32.f32 %v1433
  %v1438 = vcvt.s32.f32 %v1434
  %v1439 = vcvt.s32.f32 %v1435
  %v1440 = vcvt.s32.f32 %v1436
  %v1441 = vmul.f32 %v1425, 0.99
  %v1442 = vmul.f32 %v1426, 0.99
  %v1443 = vmul.f32 %v1427, 0.99
  %v1444 = vmul.f32 %v1428, 0.99
  %v1445 = vadd.f32 %v1441, %v1413
  %v1446 = vadd.f32 %v1442, %v1414
  %v1447 = vadd.f32 %v1443, %v1415
  %v1448 = vadd.f32 %v1444, %v1416
  %v1449 = vsub.f32 %v1445, %v1437
  %v1450 = vsub.f32 %v1446, %v1438
  %v1451 = vsub.f32 %v1447, %v1439
  %v1452 = vsub.f32 %v1448, %v1440
  %vm1453 = vcmp.gt.f32.partialorder %v1449, 1.0
  %vm1454 = vcmp.gt.f32.partialorder %v1450, 1.0
  %vm1455 = vcmp.gt.f32.partialorder %v1451, 1.0
  %vm1456 = vcmp.gt.f32.partialorder %v1452, 1.0
  %v1457 = vsel %vm1453, 1, 0
  %v1458 = vsel %vm1454, 1, 0
  %v1459 = vsel %vm1455, 1, 0
  %v1460 = vsel %vm1456, 1, 0
  %v1461 = vcvt.s32.f32 %v1457
  %v1462 = vcvt.s32.f32 %v1458
  %v1463 = vcvt.s32.f32 %v1459
  %v1464 = vcvt.s32.f32 %v1460
  %v1465 = vmul.f32 %v1449, 0.99
  %v1466 = vmul.f32 %v1450, 0.99
  %v1467 = vmul.f32 %v1451, 0.99
  %v1468 = vmul.f32 %v1452, 0.99
  %v1469 = vadd.f32 %v1465, %v1413
  %v1470 = vadd.f32 %v1466, %v1414
  %v1471 = vadd.f32 %v1467, %v1415
  %v1472 = vadd.f32 %v1468, %v1416
  %v1473 = vsub.f32 %v1469, %v1461
  %v1474 = vsub.f32 %v1470, %v1462
  %v1475 = vsub.f32 %v1471, %v1463
  %v1476 = vsub.f32 %v1472, %v1464
  %vm1477 = vcmp.gt.f32.partialorder %v1473, 1.0
  %vm1478 = vcmp.gt.f32.partialorder %v1474, 1.0
  %vm1479 = vcmp.gt.f32.partialorder %v1475, 1.0
  %vm1480 = vcmp.gt.f32.partialorder %v1476, 1.0
  %v1481 = vsel %vm1477, 1, 0
  %v1482 = vsel %vm1478, 1, 0
  %v1483 = vsel %vm1479, 1, 0
  %v1484 = vsel %vm1480, 1, 0
  %v1485 = vcvt.s32.f32 %v1481
  %v1486 = vcvt.s32.f32 %v1482
  %v1487 = vcvt.s32.f32 %v1483
  %v1488 = vcvt.s32.f32 %v1484
  %v1489 = vmul.f32 %v1473, 0.99
  %v1490 = vmul.f32 %v1474, 0.99
  %v1491 = vmul.f32 %v1475, 0.99
  %v1492 = vmul.f32 %v1476, 0.99
  %v1493 = vadd.f32 %v1489, %v1413
  %v1494 = vadd.f32 %v1490, %v1414
  %v1495 = vadd.f32 %v1491, %v1415
  %v1496 = vadd.f32 %v1492, %v1416
  %v1497 = vsub.f32 %v1493, %v1485
  %v1498 = vsub.f32 %v1494, %v1486
  %v1499 = vsub.f32 %v1495, %v1487
  %v1500 = vsub.f32 %v1496, %v1488
  %vm1501 = vcmp.gt.f32.partialorder %v1497, 1.0
  %vm1502 = vcmp.gt.f32.partialorder %v1498, 1.0
  %vm1503 = vcmp.gt.f32.partialorder %v1499, 1.0
  %vm1504 = vcmp.gt.f32.partialorder %v1500, 1.0
  %v1505 = vsel %vm1501, 1, 0
  %v1506 = vsel %vm1502, 1, 0
  %v1507 = vsel %vm1503, 1, 0
  %v1508 = vsel %vm1504, 1, 0
  %v1509 = vcvt.s32.f32 %v1505
  %v1510 = vcvt.s32.f32 %v1506
  %v1511 = vcvt.s32.f32 %v1507
  %v1512 = vcvt.s32.f32 %v1508
  %1513 = vmatprep.subr.bf16.mxu0 0
  %1514 = vmatpush1.bf16.msra.mxu0 %v520
  %1515 = vmatprep.subr.bf16.mxu0 0
  %1516 = vmatpush1.bf16.msra.mxu0 %v521
  %1517 = vmatprep.subr.bf16.mxu0 0
  %1518 = vmatpush1.bf16.msra.mxu0 0
  %1519 = vmatprep.subr.bf16.mxu0 0
  %1520 = vmatpush1.bf16.msra.mxu0 0
  %1521 = vmatprep.subr.bf16.mxu0 0
  %1522 = vmatpush1.bf16.msra.mxu0 0
  %1523 = vmatprep.subr.bf16.mxu0 0
  %1524 = vmatpush1.bf16.msra.mxu0 0
  %1525 = vmatprep.subr.bf16.mxu0 0
  %1526 = vmatpush1.bf16.msra.mxu0 0
  %1527 = vmatprep.subr.bf16.mxu0 0
  %1528 = vmatpush1.bf16.msra.mxu0 0
  %1529 = vmatprep.subr.bf16.mxu0 0
  %1530 = vmatpush1.bf16.msra.mxu0 0
  %1531 = vmatprep.subr.bf16.mxu0 0
  %1532 = vmatpush1.bf16.msra.mxu0 0
  %1533 = vmatprep.subr.bf16.mxu0 0
  %1534 = vmatpush1.bf16.msra.mxu0 0
  %1535 = vmatprep.subr.bf16.mxu0 0
  %1536 = vmatpush1.bf16.msra.mxu0 0
  %1537 = vmatprep.subr.bf16.mxu0 0
  %1538 = vmatpush1.bf16.msra.mxu0 0
  %1539 = vmatprep.subr.bf16.mxu0 0
  %1540 = vmatpush1.bf16.msra.mxu0 0
  %1541 = vmatprep.subr.bf16.mxu0 0
  %1542 = vmatpush1.bf16.msra.mxu0 0
  %1543 = vmatprep.subr.bf16.mxu0 0
  %1544 = vmatpush1.bf16.msra.mxu0 0
  %1545 = vmatprep.mubr.bf16.mxu0 0
  %1546 = vmatmul.mubr.bf16.gmra.mrb[0].mxu0 %v584
  %v1547 = vpop.f32.mrb[0].mxu0
  %v1548 = vadd.f32 %v540, %v1547
  %v1549 = vpop.f32.mrb[0].mxu0
  %v1550 = vpop.f32.mrb[0].mxu0
  %v1551 = vadd.f32 %v541, %v1550
  %v1552 = vpop.f32.mrb[0].mxu0
  %1553 = vmatprep.mubr.bf16.mxu0 0
  %1554 = vmatmul.mubr.bf16.gmra.mrb[0].mxu0 %v587
  %v1555 = vpop.f32.mrb[0].mxu0
  %v1556 = vadd.f32 %v542, %v1555
  %v1557 = vpop.f32.mrb[0].mxu0
  %v1558 = vpop.f32.mrb[0].mxu0
  %v1559 = vadd.f32 %v543, %v1558
  %v1560 = vpop.f32.mrb[0].mxu0
  %1561 = vmatprep.mubr.bf16.mxu0 0
  %1562 = vmatmul.mubr.bf16.gmra.mrb[0].mxu0 %v590
  %v1563 = vpop.f32.mrb[0].mxu0
  %v1564 = vadd.f32 %v544, %v1563
  %v1565 = vpop.f32.mrb[0].mxu0
  %v1566 = vpop.f32.mrb[0].mxu0
  %v1567 = vadd.f32 %v545, %v1566
  %v1568 = vpop.f32.mrb[0].mxu0
  %1569 = vmatprep.mubr.bf16.mxu0 0
  %1570 = vmatmul.mubr.bf16.gmra.mrb[0].mxu0 %v593
  %v1571 = vpop.f32.mrb[0].mxu0
  %v1572 = vadd.f32 %v546, %v1571
  %v1573 = vpop.f32.mrb[0].mxu0
  %v1574 = vpop.f32.mrb[0].mxu0
  %v1575 = vadd.f32 %v547, %v1574
  %v1576 = vpop.f32.mrb[0].mxu0
  %1577 = vmatprep.mubr.bf16.mxu0 0
  %1578 = vmatmul.mubr.bf16.gmra.mrb[0].mxu0 %v596
  %v1579 = vpop.f32.mrb[0].mxu0
  %v1580 = vadd.f32 %v548, %v1579
  %v1581 = vpop.f32.mrb[0].mxu0
  %v1582 = vpop.f32.mrb[0].mxu0
  %v1583 = vadd.f32 %v549, %v1582
  %v1584 = vpop.f32.mrb[0].mxu0
  %1585 = vmatprep.mubr.bf16.mxu0 0
  %1586 = vmatmul.mubr.bf16.gmra.mrb[0].mxu0 %v599
  %v1587 = vpop.f32.mrb[0].mxu0
  %v1588 = vadd.f32 %v550, %v1587
  %v1589 = vpop.f32.mrb[0].mxu0
  %v1590 = vpop.f32.mrb[0].mxu0
  %v1591 = vadd.f32 %v551, %v1590
  %v1592 = vpop.f32.mrb[0].mxu0
  %1593 = vdwg.mxu0
  %vm1594 = vcmp.ge.f32.partialorder %v1548, 0.0
  %vm1595 = vcmp.ge.f32.partialorder %v1551, 0.0
  %vm1596 = vcmp.ge.f32.partialorder %v1556, 0.0
  %vm1597 = vcmp.ge.f32.partialorder %v1559, 0.0
  %v1598 = vsel %vm1594, 1, 0
  %v1599 = vsel %vm1595, 1, 0
  %v1600 = vsel %vm1596, 1, 0
  %v1601 = vsel %vm1597, 1, 0
  %v1602 = vcvt.s32.f32 %v1598
  %v1603 = vcvt.s32.f32 %v1599
  %v1604 = vcvt.s32.f32 %v1600
  %v1605 = vcvt.s32.f32 %v1601
  %vm1606 = vcmp.ge.f32.partialorder %v1564, 0.0
  %vm1607 = vcmp.ge.f32.partialorder %v1567, 0.0
  %vm1608 = vcmp.ge.f32.partialorder %v1572, 0.0
  %vm1609 = vcmp.ge.f32.partialorder %v1575, 0.0
  %v1610 = vsel %vm1606, 1, 0
  %v1611 = vsel %vm1607, 1, 0
  %v1612 = vsel %vm1608, 1, 0
  %v1613 = vsel %vm1609, 1, 0
  %v1614 = vcvt.s32.f32 %v1610
  %v1615 = vcvt.s32.f32 %v1611
  %v1616 = vcvt.s32.f32 %v1612
  %v1617 = vcvt.s32.f32 %v1613
  %v1618 = vmul.f32 %v1602, %v706
  %v1619 = vmul.f32 %v1603, %v707
  %v1620 = vmul.f32 %v1604, %v708
  %v1621 = vmul.f32 %v1605, %v709
  %v1622 = vadd.f32 %v1580, %v1618
  %v1623 = vadd.f32 %v1583, %v1619
  %v1624 = vadd.f32 %v1588, %v1620
  %v1625 = vadd.f32 %v1591, %v1621
  %vm1626 = vcmp.ge.f32.partialorder %v1622, 0.0
  %vm1627 = vcmp.ge.f32.partialorder %v1623, 0.0
  %vm1628 = vcmp.ge.f32.partialorder %v1624, 0.0
  %vm1629 = vcmp.ge.f32.partialorder %v1625, 0.0
  %v1630 = vsel %vm1626, 1, 0
  %v1631 = vsel %vm1627, 1, 0
  %v1632 = vsel %vm1628, 1, 0
  %v1633 = vsel %vm1629, 1, 0
  %v1634 = vcvt.s32.f32 %v1630
  %v1635 = vcvt.s32.f32 %v1631
  %v1636 = vcvt.s32.f32 %v1632
  %v1637 = vcvt.s32.f32 %v1633
  %v1638 = vsub.f32 1.0, %v1614
  %v1639 = vsub.f32 1.0, %v1615
  %v1640 = vsub.f32 1.0, %v1616
  %v1641 = vsub.f32 1.0, %v1617
  %v1642 = vmul.f32 %v1638, %v1634
  %v1643 = vmul.f32 %v1639, %v1635
  %v1644 = vmul.f32 %v1640, %v1636
  %v1645 = vmul.f32 %v1641, %v1637
  %v1646 = vmul.f32 %v1497, 0.99
  %v1647 = vmul.f32 %v1498, 0.99
  %v1648 = vmul.f32 %v1499, 0.99
  %v1649 = vmul.f32 %v1500, 0.99
  %v1650 = vadd.f32 %v1646, %v1642
  %v1651 = vadd.f32 %v1647, %v1643
  %v1652 = vadd.f32 %v1648, %v1644
  %v1653 = vadd.f32 %v1649, %v1645
  %v1654 = vsub.f32 %v1650, %v1509
  %v1655 = vsub.f32 %v1651, %v1510
  %v1656 = vsub.f32 %v1652, %v1511
  %v1657 = vsub.f32 %v1653, %v1512
  %vm1658 = vcmp.gt.f32.partialorder %v1654, 1.0
  %vm1659 = vcmp.gt.f32.partialorder %v1655, 1.0
  %vm1660 = vcmp.gt.f32.partialorder %v1656, 1.0
  %vm1661 = vcmp.gt.f32.partialorder %v1657, 1.0
  %v1662 = vsel %vm1658, 1, 0
  %v1663 = vsel %vm1659, 1, 0
  %v1664 = vsel %vm1660, 1, 0
  %v1665 = vsel %vm1661, 1, 0
  %v1666 = vcvt.s32.f32 %v1662
  %v1667 = vcvt.s32.f32 %v1663
  %v1668 = vcvt.s32.f32 %v1664
  %v1669 = vcvt.s32.f32 %v1665
  %v1670 = vmul.f32 %v1654, 0.99
  %v1671 = vmul.f32 %v1655, 0.99
  %v1672 = vmul.f32 %v1656, 0.99
  %v1673 = vmul.f32 %v1657, 0.99
  %v1674 = vadd.f32 %v1670, %v1642
  %v1675 = vadd.f32 %v1671, %v1643
  %v1676 = vadd.f32 %v1672, %v1644
  %v1677 = vadd.f32 %v1673, %v1645
  %v1678 = vsub.f32 %v1674, %v1666
  %v1679 = vsub.f32 %v1675, %v1667
  %v1680 = vsub.f32 %v1676, %v1668
  %v1681 = vsub.f32 %v1677, %v1669
  %vm1682 = vcmp.gt.f32.partialorder %v1678, 1.0
  %vm1683 = vcmp.gt.f32.partialorder %v1679, 1.0
  %vm1684 = vcmp.gt.f32.partialorder %v1680, 1.0
  %vm1685 = vcmp.gt.f32.partialorder %v1681, 1.0
  %v1686 = vsel %vm1682, 1, 0
  %v1687 = vsel %vm1683, 1, 0
  %v1688 = vsel %vm1684, 1, 0
  %v1689 = vsel %vm1685, 1, 0
  %v1690 = vcvt.s32.f32 %v1686
  %v1691 = vcvt.s32.f32 %v1687
  %v1692 = vcvt.s32.f32 %v1688
  %v1693 = vcvt.s32.f32 %v1689
  %v1694 = vmul.f32 %v1678, 0.99
  %v1695 = vmul.f32 %v1679, 0.99
  %v1696 = vmul.f32 %v1680, 0.99
  %v1697 = vmul.f32 %v1681, 0.99
  %v1698 = vadd.f32 %v1694, %v1642
  %v1699 = vadd.f32 %v1695, %v1643
  %v1700 = vadd.f32 %v1696, %v1644
  %v1701 = vadd.f32 %v1697, %v1645
  %v1702 = vsub.f32 %v1698, %v1690
  %v1703 = vsub.f32 %v1699, %v1691
  %v1704 = vsub.f32 %v1700, %v1692
  %v1705 = vsub.f32 %v1701, %v1693
  %vm1706 = vcmp.gt.f32.partialorder %v1702, 1.0
  %vm1707 = vcmp.gt.f32.partialorder %v1703, 1.0
  %vm1708 = vcmp.gt.f32.partialorder %v1704, 1.0
  %vm1709 = vcmp.gt.f32.partialorder %v1705, 1.0
  %v1710 = vsel %vm1706, 1, 0
  %v1711 = vsel %vm1707, 1, 0
  %v1712 = vsel %vm1708, 1, 0
  %v1713 = vsel %vm1709, 1, 0
  %v1714 = vcvt.s32.f32 %v1710
  %v1715 = vcvt.s32.f32 %v1711
  %v1716 = vcvt.s32.f32 %v1712
  %v1717 = vcvt.s32.f32 %v1713
  %v1718 = vmul.f32 %v1702, 0.99
  %v1719 = vmul.f32 %v1703, 0.99
  %v1720 = vmul.f32 %v1704, 0.99
  %v1721 = vmul.f32 %v1705, 0.99
  %v1722 = vadd.f32 %v1718, %v1642
  %v1723 = vadd.f32 %v1719, %v1643
  %v1724 = vadd.f32 %v1720, %v1644
  %v1725 = vadd.f32 %v1721, %v1645
  %v1726 = vsub.f32 %v1722, %v1714
  %v1727 = vsub.f32 %v1723, %v1715
  %v1728 = vsub.f32 %v1724, %v1716
  %v1729 = vsub.f32 %v1725, %v1717
  %vm1730 = vcmp.gt.f32.partialorder %v1726, 1.0
  %vm1731 = vcmp.gt.f32.partialorder %v1727, 1.0
  %vm1732 = vcmp.gt.f32.partialorder %v1728, 1.0
  %vm1733 = vcmp.gt.f32.partialorder %v1729, 1.0
  %v1734 = vsel %vm1730, 1, 0
  %v1735 = vsel %vm1731, 1, 0
  %v1736 = vsel %vm1732, 1, 0
  %v1737 = vsel %vm1733, 1, 0
  %v1738 = vcvt.s32.f32 %v1734
  %v1739 = vcvt.s32.f32 %v1735
  %v1740 = vcvt.s32.f32 %v1736
  %v1741 = vcvt.s32.f32 %v1737
  %1742 = vmatprep.subr.bf16.mxu0 0
  %1743 = vmatpush1.bf16.msra.mxu0 %v522
  %1744 = vmatprep.subr.bf16.mxu0 0
  %1745 = vmatpush1.bf16.msra.mxu0 %v523
  %1746 = vmatprep.subr.bf16.mxu0 0
  %1747 = vmatpush1.bf16.msra.mxu0 0
  %1748 = vmatprep.subr.bf16.mxu0 0
  %1749 = vmatpush1.bf16.msra.mxu0 0
  %1750 = vmatprep.subr.bf16.mxu0 0
  %1751 = vmatpush1.bf16.msra.mxu0 0
  %1752 = vmatprep.subr.bf16.mxu0 0
  %1753 = vmatpush1.bf16.msra.mxu0 0
  %1754 = vmatprep.subr.bf16.mxu0 0
  %1755 = vmatpush1.bf16.msra.mxu0 0
  %1756 = vmatprep.subr.bf16.mxu0 0
  %1757 = vmatpush1.bf16.msra.mxu0 0
  %1758 = vmatprep.subr.bf16.mxu0 0
  %1759 = vmatpush1.bf16.msra.mxu0 0
  %1760 = vmatprep.subr.bf16.mxu0 0
  %1761 = vmatpush1.bf16.msra.mxu0 0
  %1762 = vmatprep.subr.bf16.mxu0 0
  %1763 = vmatpush1.bf16.msra.mxu0 0
  %1764 = vmatprep.subr.bf16.mxu0 0
  %1765 = vmatpush1.bf16.msra.mxu0 0
  %1766 = vmatprep.subr.bf16.mxu0 0
  %1767 = vmatpush1.bf16.msra.mxu0 0
  %1768 = vmatprep.subr.bf16.mxu0 0
  %1769 = vmatpush1.bf16.msra.mxu0 0
  %1770 = vmatprep.subr.bf16.mxu0 0
  %1771 = vmatpush1.bf16.msra.mxu0 0
  %1772 = vmatprep.subr.bf16.mxu0 0
  %1773 = vmatpush1.bf16.msra.mxu0 0
  %1774 = vmatprep.mubr.bf16.mxu0 0
  %1775 = vmatmul.mubr.bf16.gmra.mrb[0].mxu0 %v584
  %v1776 = vpop.f32.mrb[0].mxu0
  %v1777 = vadd.f32 %v540, %v1776
  %v1778 = vpop.f32.mrb[0].mxu0
  %v1779 = vpop.f32.mrb[0].mxu0
  %v1780 = vadd.f32 %v541, %v1779
  %v1781 = vpop.f32.mrb[0].mxu0
  %1782 = vmatprep.mubr.bf16.mxu0 0
  %1783 = vmatmul.mubr.bf16.gmra.mrb[0].mxu0 %v587
  %v1784 = vpop.f32.mrb[0].mxu0
  %v1785 = vadd.f32 %v542, %v1784
  %v1786 = vpop.f32.mrb[0].mxu0
  %v1787 = vpop.f32.mrb[0].mxu0
  %v1788 = vadd.f32 %v543, %v1787
  %v1789 = vpop.f32.mrb[0].mxu0
  %1790 = vmatprep.mubr.bf16.mxu0 0
  %1791 = vmatmul.mubr.bf16.gmra.mrb[0].mxu0 %v590
  %v1792 = vpop.f32.mrb[0].mxu0
  %v1793 = vadd.f32 %v544, %v1792
  %v1794 = vpop.f32.mrb[0].mxu0
  %v1795 = vpop.f32.mrb[0].mxu0
  %v1796 = vadd.f32 %v545, %v1795
  %v1797 = vpop.f32.mrb[0].mxu0
  %1798 = vmatprep.mubr.bf16.mxu0 0
  %1799 = vmatmul.mubr.bf16.gmra.mrb[0].mxu0 %v593
  %v1800 = vpop.f32.mrb[0].mxu0
  %v1801 = vadd.f32 %v546, %v1800
  %v1802 = vpop.f32.mrb[0].mxu0
  %v1803 = vpop.f32.mrb[0].mxu0
  %v1804 = vadd.f32 %v547, %v1803
  %v1805 = vpop.f32.mrb[0].mxu0
  %1806 = vmatprep.mubr.bf16.mxu0 0
  %1807 = vmatmul.mubr.bf16.gmra.mrb[0].mxu0 %v596
  %v1808 = vpop.f32.mrb[0].mxu0
  %v1809 = vadd.f32 %v548, %v1808
  %v1810 = vpop.f32.mrb[0].mxu0
  %v1811 = vpop.f32.mrb[0].mxu0
  %v1812 = vadd.f32 %v549, %v1811
  %v1813 = vpop.f32.mrb[0].mxu0
  %1814 = vmatprep.mubr.bf16.mxu0 0
  %1815 = vmatmul.mubr.bf16.gmra.mrb[0].mxu0 %v599
  %v1816 = vpop.f32.mrb[0].mxu0
  %v1817 = vadd.f32 %v550, %v1816
  %v1818 = vpop.f32.mrb[0].mxu0
  %v1819 = vpop.f32.mrb[0].mxu0
  %v1820 = vadd.f32 %v551, %v1819
  %v1821 = vpop.f32.mrb[0].mxu0
  %1822 = vdwg.mxu0
  %vm1823 = vcmp.ge.f32.partialorder %v1777, 0.0
  %vm1824 = vcmp.ge.f32.partialorder %v1780, 0.0
  %vm1825 = vcmp.ge.f32.partialorder %v1785, 0.0
  %vm1826 = vcmp.ge.f32.partialorder %v1788, 0.0
  %v1827 = vsel %vm1823, 1, 0
  %v1828 = vsel %vm1824, 1, 0
  %v1829 = vsel %vm1825, 1, 0
  %v1830 = vsel %vm1826, 1, 0
  %v1831 = vcvt.s32.f32 %v1827
  %v1832 = vcvt.s32.f32 %v1828
  %v1833 = vcvt.s32.f32 %v1829
  %v1834 = vcvt.s32.f32 %v1830
  %vm1835 = vcmp.ge.f32.partialorder %v1793, 0.0
  %vm1836 = vcmp.ge.f32.partialorder %v1796, 0.0
  %vm1837 = vcmp.ge.f32.partialorder %v1801, 0.0
  %vm1838 = vcmp.ge.f32.partialorder %v1804, 0.0
  %v1839 = vsel %vm1835, 1, 0
  %v1840 = vsel %vm1836, 1, 0
  %v1841 = vsel %vm1837, 1, 0
  %v1842 = vsel %vm1838, 1, 0
  %v1843 = vcvt.s32.f32 %v1839
  %v1844 = vcvt.s32.f32 %v1840
  %v1845 = vcvt.s32.f32 %v1841
  %v1846 = vcvt.s32.f32 %v1842
  %v1847 = vmul.f32 %v1831, %v706
  %v1848 = vmul.f32 %v1832, %v707
  %v1849 = vmul.f32 %v1833, %v708
  %v1850 = vmul.f32 %v1834, %v709
  %v1851 = vadd.f32 %v1809, %v1847
  %v1852 = vadd.f32 %v1812, %v1848
  %v1853 = vadd.f32 %v1817, %v1849
  %v1854 = vadd.f32 %v1820, %v1850
  %vm1855 = vcmp.ge.f32.partialorder %v1851, 0.0
  %vm1856 = vcmp.ge.f32.partialorder %v1852, 0.0
  %vm1857 = vcmp.ge.f32.partialorder %v1853, 0.0
  %vm1858 = vcmp.ge.f32.partialorder %v1854, 0.0
  %v1859 = vsel %vm1855, 1, 0
  %v1860 = vsel %vm1856, 1, 0
  %v1861 = vsel %vm1857, 1, 0
  %v1862 = vsel %vm1858, 1, 0
  %v1863 = vcvt.s32.f32 %v1859
  %v1864 = vcvt.s32.f32 %v1860
  %v1865 = vcvt.s32.f32 %v1861
  %v1866 = vcvt.s32.f32 %v1862
  %v1867 = vsub.f32 1.0, %v1843
  %v1868 = vsub.f32 1.0, %v1844
  %v1869 = vsub.f32 1.0, %v1845
  %v1870 = vsub.f32 1.0, %v1846
  %v1871 = vmul.f32 %v1867, %v1863
  %v1872 = vmul.f32 %v1868, %v1864
  %v1873 = vmul.f32 %v1869, %v1865
  %v1874 = vmul.f32 %v1870, %v1866
  %v1875 = vmul.f32 %v1726, 0.99
  %v1876 = vmul.f32 %v1727, 0.99
  %v1877 = vmul.f32 %v1728, 0.99
  %v1878 = vmul.f32 %v1729, 0.99
  %v1879 = vadd.f32 %v1875, %v1871
  %v1880 = vadd.f32 %v1876, %v1872
  %v1881 = vadd.f32 %v1877, %v1873
  %v1882 = vadd.f32 %v1878, %v1874
  %v1883 = vsub.f32 %v1879, %v1738
  %v1884 = vsub.f32 %v1880, %v1739
  %v1885 = vsub.f32 %v1881, %v1740
  %v1886 = vsub.f32 %v1882, %v1741
  %vm1887 = vcmp.gt.f32.partialorder %v1883, 1.0
  %vm1888 = vcmp.gt.f32.partialorder %v1884, 1.0
  %vm1889 = vcmp.gt.f32.partialorder %v1885, 1.0
  %vm1890 = vcmp.gt.f32.partialorder %v1886, 1.0
  %v1891 = vsel %vm1887, 1, 0
  %v1892 = vsel %vm1888, 1, 0
  %v1893 = vsel %vm1889, 1, 0
  %v1894 = vsel %vm1890, 1, 0
  %v1895 = vcvt.s32.f32 %v1891
  %v1896 = vcvt.s32.f32 %v1892
  %v1897 = vcvt.s32.f32 %v1893
  %v1898 = vcvt.s32.f32 %v1894
  %v1899 = vmul.f32 %v1883, 0.99
  %v1900 = vmul.f32 %v1884, 0.99
  %v1901 = vmul.f32 %v1885, 0.99
  %v1902 = vmul.f32 %v1886, 0.99
  %v1903 = vadd.f32 %v1899, %v1871
  %v1904 = vadd.f32 %v1900, %v1872
  %v1905 = vadd.f32 %v1901, %v1873
  %v1906 = vadd.f32 %v1902, %v1874
  %v1907 = vsub.f32 %v1903, %v1895
  %v1908 = vsub.f32 %v1904, %v1896
  %v1909 = vsub.f32 %v1905, %v1897
  %v1910 = vsub.f32 %v1906, %v1898
  %vm1911 = vcmp.gt.f32.partialorder %v1907, 1.0
  %vm1912 = vcmp.gt.f32.partialorder %v1908, 1.0
  %vm1913 = vcmp.gt.f32.partialorder %v1909, 1.0
  %vm1914 = vcmp.gt.f32.partialorder %v1910, 1.0
  %v1915 = vsel %vm1911, 1, 0
  %v1916 = vsel %vm1912, 1, 0
  %v1917 = vsel %vm1913, 1, 0
  %v1918 = vsel %vm1914, 1, 0
  %v1919 = vcvt.s32.f32 %v1915
  %v1920 = vcvt.s32.f32 %v1916
  %v1921 = vcvt.s32.f32 %v1917
  %v1922 = vcvt.s32.f32 %v1918
  %v1923 = vmul.f32 %v1907, 0.99
  %v1924 = vmul.f32 %v1908, 0.99
  %v1925 = vmul.f32 %v1909, 0.99
  %v1926 = vmul.f32 %v1910, 0.99
  %v1927 = vadd.f32 %v1923, %v1871
  %v1928 = vadd.f32 %v1924, %v1872
  %v1929 = vadd.f32 %v1925, %v1873
  %v1930 = vadd.f32 %v1926, %v1874
  %v1931 = vsub.f32 %v1927, %v1919
  %v1932 = vsub.f32 %v1928, %v1920
  %v1933 = vsub.f32 %v1929, %v1921
  %v1934 = vsub.f32 %v1930, %v1922
  %vm1935 = vcmp.gt.f32.partialorder %v1931, 1.0
  %vm1936 = vcmp.gt.f32.partialorder %v1932, 1.0
  %vm1937 = vcmp.gt.f32.partialorder %v1933, 1.0
  %vm1938 = vcmp.gt.f32.partialorder %v1934, 1.0
  %v1939 = vsel %vm1935, 1, 0
  %v1940 = vsel %vm1936, 1, 0
  %v1941 = vsel %vm1937, 1, 0
  %v1942 = vsel %vm1938, 1, 0
  %v1943 = vcvt.s32.f32 %v1939
  %v1944 = vcvt.s32.f32 %v1940
  %v1945 = vcvt.s32.f32 %v1941
  %v1946 = vcvt.s32.f32 %v1942
  %v1947 = vmul.f32 %v1931, 0.99
  %v1948 = vmul.f32 %v1932, 0.99
  %v1949 = vmul.f32 %v1933, 0.99
  %v1950 = vmul.f32 %v1934, 0.99
  %v1951 = vadd.f32 %v1947, %v1871
  %v1952 = vadd.f32 %v1948, %v1872
  %v1953 = vadd.f32 %v1949, %v1873
  %v1954 = vadd.f32 %v1950, %v1874
  %v1955 = vsub.f32 %v1951, %v1943
  %v1956 = vsub.f32 %v1952, %v1944
  %v1957 = vsub.f32 %v1953, %v1945
  %v1958 = vsub.f32 %v1954, %v1946
  %vm1959 = vcmp.gt.f32.partialorder %v1955, 1.0
  %vm1960 = vcmp.gt.f32.partialorder %v1956, 1.0
  %vm1961 = vcmp.gt.f32.partialorder %v1957, 1.0
  %vm1962 = vcmp.gt.f32.partialorder %v1958, 1.0
  %v1963 = vsel %vm1959, 1, 0
  %v1964 = vsel %vm1960, 1, 0
  %v1965 = vsel %vm1961, 1, 0
  %v1966 = vsel %vm1962, 1, 0
  %v1967 = vcvt.s32.f32 %v1963
  %v1968 = vcvt.s32.f32 %v1964
  %v1969 = vcvt.s32.f32 %v1965
  %v1970 = vcvt.s32.f32 %v1966
  %1971 = vmatprep.subr.bf16.mxu0 0
  %1972 = vmatpush1.bf16.msra.mxu0 %v524
  %1973 = vmatprep.subr.bf16.mxu0 0
  %1974 = vmatpush1.bf16.msra.mxu0 %v525
  %1975 = vmatprep.subr.bf16.mxu0 0
  %1976 = vmatpush1.bf16.msra.mxu0 0
  %1977 = vmatprep.subr.bf16.mxu0 0
  %1978 = vmatpush1.bf16.msra.mxu0 0
  %1979 = vmatprep.subr.bf16.mxu0 0
  %1980 = vmatpush1.bf16.msra.mxu0 0
  %1981 = vmatprep.subr.bf16.mxu0 0
  %1982 = vmatpush1.bf16.msra.mxu0 0
  %1983 = vmatprep.subr.bf16.mxu0 0
  %1984 = vmatpush1.bf16.msra.mxu0 0
  %1985 = vmatprep.subr.bf16.mxu0 0
  %1986 = vmatpush1.bf16.msra.mxu0 0
  %1987 = vmatprep.subr.bf16.mxu0 0
  %1988 = vmatpush1.bf16.msra.mxu0 0
  %1989 = vmatprep.subr.bf16.mxu0 0
  %1990 = vmatpush1.bf16.msra.mxu0 0
  %1991 = vmatprep.subr.bf16.mxu0 0
  %1992 = vmatpush1.bf16.msra.mxu0 0
  %1993 = vmatprep.subr.bf16.mxu0 0
  %1994 = vmatpush1.bf16.msra.mxu0 0
  %1995 = vmatprep.subr.bf16.mxu0 0
  %1996 = vmatpush1.bf16.msra.mxu0 0
  %1997 = vmatprep.subr.bf16.mxu0 0
  %1998 = vmatpush1.bf16.msra.mxu0 0
  %1999 = vmatprep.subr.bf16.mxu0 0
  %2000 = vmatpush1.bf16.msra.mxu0 0
  %2001 = vmatprep.subr.bf16.mxu0 0
  %2002 = vmatpush1.bf16.msra.mxu0 0
  %2003 = vmatprep.mubr.bf16.mxu0 0
  %2004 = vmatmul.mubr.bf16.gmra.mrb[0].mxu0 %v584
  %v2005 = vpop.f32.mrb[0].mxu0
  %v2006 = vadd.f32 %v540, %v2005
  %v2007 = vpop.f32.mrb[0].mxu0
  %v2008 = vpop.f32.mrb[0].mxu0
  %v2009 = vadd.f32 %v541, %v2008
  %v2010 = vpop.f32.mrb[0].mxu0
  %2011 = vmatprep.mubr.bf16.mxu0 0
  %2012 = vmatmul.mubr.bf16.gmra.mrb[0].mxu0 %v587
  %v2013 = vpop.f32.mrb[0].mxu0
  %v2014 = vadd.f32 %v542, %v2013
  %v2015 = vpop.f32.mrb[0].mxu0
  %v2016 = vpop.f32.mrb[0].mxu0
  %v2017 = vadd.f32 %v543, %v2016
  %v2018 = vpop.f32.mrb[0].mxu0
  %2019 = vmatprep.mubr.bf16.mxu0 0
  %2020 = vmatmul.mubr.bf16.gmra.mrb[0].mxu0 %v590
  %v2021 = vpop.f32.mrb[0].mxu0
  %v2022 = vadd.f32 %v544, %v2021
  %v2023 = vpop.f32.mrb[0].mxu0
  %v2024 = vpop.f32.mrb[0].mxu0
  %v2025 = vadd.f32 %v545, %v2024
  %v2026 = vpop.f32.mrb[0].mxu0
  %2027 = vmatprep.mubr.bf16.mxu0 0
  %2028 = vmatmul.mubr.bf16.gmra.mrb[0].mxu0 %v593
  %v2029 = vpop.f32.mrb[0].mxu0
  %v2030 = vadd.f32 %v546, %v2029
  %v2031 = vpop.f32.mrb[0].mxu0
  %v2032 = vpop.f32.mrb[0].mxu0
  %v2033 = vadd.f32 %v547, %v2032
  %v2034 = vpop.f32.mrb[0].mxu0
  %2035 = vmatprep.mubr.bf16.mxu0 0
  %2036 = vmatmul.mubr.bf16.gmra.mrb[0].mxu0 %v596
  %v2037 = vpop.f32.mrb[0].mxu0
  %v2038 = vadd.f32 %v548, %v2037
  %v2039 = vpop.f32.mrb[0].mxu0
  %v2040 = vpop.f32.mrb[0].mxu0
  %v2041 = vadd.f32 %v549, %v2040
  %v2042 = vpop.f32.mrb[0].mxu0
  %2043 = vmatprep.mubr.bf16.mxu0 0
  %2044 = vmatmul.mubr.bf16.gmra.mrb[0].mxu0 %v599
  %v2045 = vpop.f32.mrb[0].mxu0
  %v2046 = vadd.f32 %v550, %v2045
  %v2047 = vpop.f32.mrb[0].mxu0
  %v2048 = vpop.f32.mrb[0].mxu0
  %v2049 = vadd.f32 %v551, %v2048
  %v2050 = vpop.f32.mrb[0].mxu0
  %2051 = vdwg.mxu0
  %vm2052 = vcmp.ge.f32.partialorder %v2006, 0.0
  %vm2053 = vcmp.ge.f32.partialorder %v2009, 0.0
  %vm2054 = vcmp.ge.f32.partialorder %v2014, 0.0
  %vm2055 = vcmp.ge.f32.partialorder %v2017, 0.0
  %v2056 = vsel %vm2052, 1, 0
  %v2057 = vsel %vm2053, 1, 0
  %v2058 = vsel %vm2054, 1, 0
  %v2059 = vsel %vm2055, 1, 0
  %v2060 = vcvt.s32.f32 %v2056
  %v2061 = vcvt.s32.f32 %v2057
  %v2062 = vcvt.s32.f32 %v2058
  %v2063 = vcvt.s32.f32 %v2059
  %vm2064 = vcmp.ge.f32.partialorder %v2022, 0.0
  %vm2065 = vcmp.ge.f32.partialorder %v2025, 0.0
  %vm2066 = vcmp.ge.f32.partialorder %v2030, 0.0
  %vm2067 = vcmp.ge.f32.partialorder %v2033, 0.0
  %v2068 = vsel %vm2064, 1, 0
  %v2069 = vsel %vm2065, 1, 0
  %v2070 = vsel %vm2066, 1, 0
  %v2071 = vsel %vm2067, 1, 0
  %v2072 = vcvt.s32.f32 %v2068
  %v2073 = vcvt.s32.f32 %v2069
  %v2074 = vcvt.s32.f32 %v2070
  %v2075 = vcvt.s32.f32 %v2071
  %v2076 = vmul.f32 %v2060, %v706
  %v2077 = vmul.f32 %v2061, %v707
  %v2078 = vmul.f32 %v2062, %v708
  %v2079 = vmul.f32 %v2063, %v709
  %v2080 = vadd.f32 %v2038, %v2076
  %v2081 = vadd.f32 %v2041, %v2077
  %v2082 = vadd.f32 %v2046, %v2078
  %v2083 = vadd.f32 %v2049, %v2079
  %vm2084 = vcmp.ge.f32.partialorder %v2080, 0.0
  %vm2085 = vcmp.ge.f32.partialorder %v2081, 0.0
  %vm2086 = vcmp.ge.f32.partialorder %v2082, 0.0
  %vm2087 = vcmp.ge.f32.partialorder %v2083, 0.0
  %v2088 = vsel %vm2084, 1, 0
  %v2089 = vsel %vm2085, 1, 0
  %v2090 = vsel %vm2086, 1, 0
  %v2091 = vsel %vm2087, 1, 0
  %v2092 = vcvt.s32.f32 %v2088
  %v2093 = vcvt.s32.f32 %v2089
  %v2094 = vcvt.s32.f32 %v2090
  %v2095 = vcvt.s32.f32 %v2091
  %v2096 = vsub.f32 1.0, %v2072
  %v2097 = vsub.f32 1.0, %v2073
  %v2098 = vsub.f32 1.0, %v2074
  %v2099 = vsub.f32 1.0, %v2075
  %v2100 = vmul.f32 %v2096, %v2092
  %v2101 = vmul.f32 %v2097, %v2093
  %v2102 = vmul.f32 %v2098, %v2094
  %v2103 = vmul.f32 %v2099, %v2095
  %v2104 = vmul.f32 %v1955, 0.99
  %v2105 = vmul.f32 %v1956, 0.99
  %v2106 = vmul.f32 %v1957, 0.99
  %v2107 = vmul.f32 %v1958, 0.99
  %v2108 = vadd.f32 %v2104, %v2100
  %v2109 = vadd.f32 %v2105, %v2101
  %v2110 = vadd.f32 %v2106, %v2102
  %v2111 = vadd.f32 %v2107, %v2103
  %v2112 = vsub.f32 %v2108, %v1967
  %v2113 = vsub.f32 %v2109, %v1968
  %v2114 = vsub.f32 %v2110, %v1969
  %v2115 = vsub.f32 %v2111, %v1970
  %vm2116 = vcmp.gt.f32.partialorder %v2112, 1.0
  %vm2117 = vcmp.gt.f32.partialorder %v2113, 1.0
  %vm2118 = vcmp.gt.f32.partialorder %v2114, 1.0
  %vm2119 = vcmp.gt.f32.partialorder %v2115, 1.0
  %v2120 = vsel %vm2116, 1, 0
  %v2121 = vsel %vm2117, 1, 0
  %v2122 = vsel %vm2118, 1, 0
  %v2123 = vsel %vm2119, 1, 0
  %v2124 = vcvt.s32.f32 %v2120
  %v2125 = vcvt.s32.f32 %v2121
  %v2126 = vcvt.s32.f32 %v2122
  %v2127 = vcvt.s32.f32 %v2123
  %v2128 = vmul.f32 %v2112, 0.99
  %v2129 = vmul.f32 %v2113, 0.99
  %v2130 = vmul.f32 %v2114, 0.99
  %v2131 = vmul.f32 %v2115, 0.99
  %v2132 = vadd.f32 %v2128, %v2100
  %v2133 = vadd.f32 %v2129, %v2101
  %v2134 = vadd.f32 %v2130, %v2102
  %v2135 = vadd.f32 %v2131, %v2103
  %v2136 = vsub.f32 %v2132, %v2124
  %v2137 = vsub.f32 %v2133, %v2125
  %v2138 = vsub.f32 %v2134, %v2126
  %v2139 = vsub.f32 %v2135, %v2127
  %vm2140 = vcmp.gt.f32.partialorder %v2136, 1.0
  %vm2141 = vcmp.gt.f32.partialorder %v2137, 1.0
  %vm2142 = vcmp.gt.f32.partialorder %v2138, 1.0
  %vm2143 = vcmp.gt.f32.partialorder %v2139, 1.0
  %v2144 = vsel %vm2140, 1, 0
  %v2145 = vsel %vm2141, 1, 0
  %v2146 = vsel %vm2142, 1, 0
  %v2147 = vsel %vm2143, 1, 0
  %v2148 = vcvt.s32.f32 %v2144
  %v2149 = vcvt.s32.f32 %v2145
  %v2150 = vcvt.s32.f32 %v2146
  %v2151 = vcvt.s32.f32 %v2147
  %v2152 = vmul.f32 %v2136, 0.99
  %v2153 = vmul.f32 %v2137, 0.99
  %v2154 = vmul.f32 %v2138, 0.99
  %v2155 = vmul.f32 %v2139, 0.99
  %v2156 = vadd.f32 %v2152, %v2100
  %v2157 = vadd.f32 %v2153, %v2101
  %v2158 = vadd.f32 %v2154, %v2102
  %v2159 = vadd.f32 %v2155, %v2103
  %v2160 = vsub.f32 %v2156, %v2148
  %v2161 = vsub.f32 %v2157, %v2149
  %v2162 = vsub.f32 %v2158, %v2150
  %v2163 = vsub.f32 %v2159, %v2151
  %vm2164 = vcmp.gt.f32.partialorder %v2160, 1.0
  %vm2165 = vcmp.gt.f32.partialorder %v2161, 1.0
  %vm2166 = vcmp.gt.f32.partialorder %v2162, 1.0
  %vm2167 = vcmp.gt.f32.partialorder %v2163, 1.0
  %v2168 = vsel %vm2164, 1, 0
  %v2169 = vsel %vm2165, 1, 0
  %v2170 = vsel %vm2166, 1, 0
  %v2171 = vsel %vm2167, 1, 0
  %v2172 = vcvt.s32.f32 %v2168
  %v2173 = vcvt.s32.f32 %v2169
  %v2174 = vcvt.s32.f32 %v2170
  %v2175 = vcvt.s32.f32 %v2171
  %v2176 = vmul.f32 %v2160, 0.99
  %v2177 = vmul.f32 %v2161, 0.99
  %v2178 = vmul.f32 %v2162, 0.99
  %v2179 = vmul.f32 %v2163, 0.99
  %v2180 = vadd.f32 %v2176, %v2100
  %v2181 = vadd.f32 %v2177, %v2101
  %v2182 = vadd.f32 %v2178, %v2102
  %v2183 = vadd.f32 %v2179, %v2103
  %v2184 = vsub.f32 %v2180, %v2172
  %v2185 = vsub.f32 %v2181, %v2173
  %v2186 = vsub.f32 %v2182, %v2174
  %v2187 = vsub.f32 %v2183, %v2175
  %vm2188 = vcmp.gt.f32.partialorder %v2184, 1.0
  %vm2189 = vcmp.gt.f32.partialorder %v2185, 1.0
  %vm2190 = vcmp.gt.f32.partialorder %v2186, 1.0
  %vm2191 = vcmp.gt.f32.partialorder %v2187, 1.0
  %v2192 = vsel %vm2188, 1, 0
  %v2193 = vsel %vm2189, 1, 0
  %v2194 = vsel %vm2190, 1, 0
  %v2195 = vsel %vm2191, 1, 0
  %v2196 = vcvt.s32.f32 %v2192
  %v2197 = vcvt.s32.f32 %v2193
  %v2198 = vcvt.s32.f32 %v2194
  %v2199 = vcvt.s32.f32 %v2195
  %2200 = vmatprep.subr.bf16.mxu0 0
  %2201 = vmatpush1.bf16.msra.mxu0 %v526
  %2202 = vmatprep.subr.bf16.mxu0 0
  %2203 = vmatpush1.bf16.msra.mxu0 %v527
  %2204 = vmatprep.subr.bf16.mxu0 0
  %2205 = vmatpush1.bf16.msra.mxu0 0
  %2206 = vmatprep.subr.bf16.mxu0 0
  %2207 = vmatpush1.bf16.msra.mxu0 0
  %2208 = vmatprep.subr.bf16.mxu0 0
  %2209 = vmatpush1.bf16.msra.mxu0 0
  %2210 = vmatprep.subr.bf16.mxu0 0
  %2211 = vmatpush1.bf16.msra.mxu0 0
  %2212 = vmatprep.subr.bf16.mxu0 0
  %2213 = vmatpush1.bf16.msra.mxu0 0
  %2214 = vmatprep.subr.bf16.mxu0 0
  %2215 = vmatpush1.bf16.msra.mxu0 0
  %2216 = vmatprep.subr.bf16.mxu0 0
  %2217 = vmatpush1.bf16.msra.mxu0 0
  %2218 = vmatprep.subr.bf16.mxu0 0
  %2219 = vmatpush1.bf16.msra.mxu0 0
  %2220 = vmatprep.subr.bf16.mxu0 0
  %2221 = vmatpush1.bf16.msra.mxu0 0
  %2222 = vmatprep.subr.bf16.mxu0 0
  %2223 = vmatpush1.bf16.msra.mxu0 0
  %2224 = vmatprep.subr.bf16.mxu0 0
  %2225 = vmatpush1.bf16.msra.mxu0 0
  %2226 = vmatprep.subr.bf16.mxu0 0
  %2227 = vmatpush1.bf16.msra.mxu0 0
  %2228 = vmatprep.subr.bf16.mxu0 0
  %2229 = vmatpush1.bf16.msra.mxu0 0
  %2230 = vmatprep.subr.bf16.mxu0 0
  %2231 = vmatpush1.bf16.msra.mxu0 0
  %2232 = vmatprep.mubr.bf16.mxu0 0
  %2233 = vmatmul.mubr.bf16.gmra.mrb[0].mxu0 %v584
  %v2234 = vpop.f32.mrb[0].mxu0
  %v2235 = vadd.f32 %v540, %v2234
  %v2236 = vpop.f32.mrb[0].mxu0
  %v2237 = vpop.f32.mrb[0].mxu0
  %v2238 = vadd.f32 %v541, %v2237
  %v2239 = vpop.f32.mrb[0].mxu0
  %2240 = vmatprep.mubr.bf16.mxu0 0
  %2241 = vmatmul.mubr.bf16.gmra.mrb[0].mxu0 %v587
  %v2242 = vpop.f32.mrb[0].mxu0
  %v2243 = vadd.f32 %v542, %v2242
  %v2244 = vpop.f32.mrb[0].mxu0
  %v2245 = vpop.f32.mrb[0].mxu0
  %v2246 = vadd.f32 %v543, %v2245
  %v2247 = vpop.f32.mrb[0].mxu0
  %2248 = vmatprep.mubr.bf16.mxu0 0
  %2249 = vmatmul.mubr.bf16.gmra.mrb[0].mxu0 %v590
  %v2250 = vpop.f32.mrb[0].mxu0
  %v2251 = vadd.f32 %v544, %v2250
  %v2252 = vpop.f32.mrb[0].mxu0
  %v2253 = vpop.f32.mrb[0].mxu0
  %v2254 = vadd.f32 %v545, %v2253
  %v2255 = vpop.f32.mrb[0].mxu0
  %2256 = vmatprep.mubr.bf16.mxu0 0
  %2257 = vmatmul.mubr.bf16.gmra.mrb[0].mxu0 %v593
  %v2258 = vpop.f32.mrb[0].mxu0
  %v2259 = vadd.f32 %v546, %v2258
  %v2260 = vpop.f32.mrb[0].mxu0
  %v2261 = vpop.f32.mrb[0].mxu0
  %v2262 = vadd.f32 %v547, %v2261
  %v2263 = vpop.f32.mrb[0].mxu0
  %2264 = vmatprep.mubr.bf16.mxu0 0
  %2265 = vmatmul.mubr.bf16.gmra.mrb[0].mxu0 %v596
  %v2266 = vpop.f32.mrb[0].mxu0
  %v2267 = vadd.f32 %v548, %v2266
  %v2268 = vpop.f32.mrb[0].mxu0
  %v2269 = vpop.f32.mrb[0].mxu0
  %v2270 = vadd.f32 %v549, %v2269
  %v2271 = vpop.f32.mrb[0].mxu0
  %2272 = vmatprep.mubr.bf16.mxu0 0
  %2273 = vmatmul.mubr.bf16.gmra.mrb[0].mxu0 %v599
  %v2274 = vpop.f32.mrb[0].mxu0
  %v2275 = vadd.f32 %v550, %v2274
  %v2276 = vpop.f32.mrb[0].mxu0
  %v2277 = vpop.f32.mrb[0].mxu0
  %v2278 = vadd.f32 %v551, %v2277
  %v2279 = vpop.f32.mrb[0].mxu0
  %2280 = vdwg.mxu0
  %vm2281 = vcmp.ge.f32.partialorder %v2235, 0.0
  %vm2282 = vcmp.ge.f32.partialorder %v2238, 0.0
  %vm2283 = vcmp.ge.f32.partialorder %v2243, 0.0
  %vm2284 = vcmp.ge.f32.partialorder %v2246, 0.0
  %v2285 = vsel %vm2281, 1, 0
  %v2286 = vsel %vm2282, 1, 0
  %v2287 = vsel %vm2283, 1, 0
  %v2288 = vsel %vm2284, 1, 0
  %v2289 = vcvt.s32.f32 %v2285
  %v2290 = vcvt.s32.f32 %v2286
  %v2291 = vcvt.s32.f32 %v2287
  %v2292 = vcvt.s32.f32 %v2288
  %vm2293 = vcmp.ge.f32.partialorder %v2251, 0.0
  %vm2294 = vcmp.ge.f32.partialorder %v2254, 0.0
  %vm2295 = vcmp.ge.f32.partialorder %v2259, 0.0
  %vm2296 = vcmp.ge.f32.partialorder %v2262, 0.0
  %v2297 = vsel %vm2293, 1, 0
  %v2298 = vsel %vm2294, 1, 0
  %v2299 = vsel %vm2295, 1, 0
  %v2300 = vsel %vm2296, 1, 0
  %v2301 = vcvt.s32.f32 %v2297
  %v2302 = vcvt.s32.f32 %v2298
  %v2303 = vcvt.s32.f32 %v2299
  %v2304 = vcvt.s32.f32 %v2300
  %v2305 = vmul.f32 %v2289, %v706
  %v2306 = vmul.f32 %v2290, %v707
  %v2307 = vmul.f32 %v2291, %v708
  %v2308 = vmul.f32 %v2292, %v709
  %v2309 = vadd.f32 %v2267, %v2305
  %v2310 = vadd.f32 %v2270, %v2306
  %v2311 = vadd.f32 %v2275, %v2307
  %v2312 = vadd.f32 %v2278, %v2308
  %vm2313 = vcmp.ge.f32.partialorder %v2309, 0.0
  %vm2314 = vcmp.ge.f32.partialorder %v2310, 0.0
  %vm2315 = vcmp.ge.f32.partialorder %v2311, 0.0
  %vm2316 = vcmp.ge.f32.partialorder %v2312, 0.0
  %v2317 = vsel %vm2313, 1, 0
  %v2318 = vsel %vm2314, 1, 0
  %v2319 = vsel %vm2315, 1, 0
  %v2320 = vsel %vm2316, 1, 0
  %v2321 = vcvt.s32.f32 %v2317
  %v2322 = vcvt.s32.f32 %v2318
  %v2323 = vcvt.s32.f32 %v2319
  %v2324 = vcvt.s32.f32 %v2320
  %v2325 = vsub.f32 1.0, %v2301
  %v2326 = vsub.f32 1.0, %v2302
  %v2327 = vsub.f32 1.0, %v2303
  %v2328 = vsub.f32 1.0, %v2304
  %v2329 = vmul.f32 %v2325, %v2321
  %v2330 = vmul.f32 %v2326, %v2322
  %v2331 = vmul.f32 %v2327, %v2323
  %v2332 = vmul.f32 %v2328, %v2324
  %v2333 = vmul.f32 %v2184, 0.99
  %v2334 = vmul.f32 %v2185, 0.99
  %v2335 = vmul.f32 %v2186, 0.99
  %v2336 = vmul.f32 %v2187, 0.99
  %v2337 = vadd.f32 %v2333, %v2329
  %v2338 = vadd.f32 %v2334, %v2330
  %v2339 = vadd.f32 %v2335, %v2331
  %v2340 = vadd.f32 %v2336, %v2332
  %v2341 = vsub.f32 %v2337, %v2196
  %v2342 = vsub.f32 %v2338, %v2197
  %v2343 = vsub.f32 %v2339, %v2198
  %v2344 = vsub.f32 %v2340, %v2199
  %vm2345 = vcmp.gt.f32.partialorder %v2341, 1.0
  %vm2346 = vcmp.gt.f32.partialorder %v2342, 1.0
  %vm2347 = vcmp.gt.f32.partialorder %v2343, 1.0
  %vm2348 = vcmp.gt.f32.partialorder %v2344, 1.0
  %v2349 = vsel %vm2345, 1, 0
  %v2350 = vsel %vm2346, 1, 0
  %v2351 = vsel %vm2347, 1, 0
  %v2352 = vsel %vm2348, 1, 0
  %v2353 = vcvt.s32.f32 %v2349
  %v2354 = vcvt.s32.f32 %v2350
  %v2355 = vcvt.s32.f32 %v2351
  %v2356 = vcvt.s32.f32 %v2352
  %vm2357 = vcmask 64512
  %2358 = vst.msk [vmem:[%s6] sm:$0xff] %vm2357, %v2353
  %2359 = vst.msk [vmem:[%s6 + $0x8] sm:$0xff] %vm2357, %v2354
  %2360 = vst.msk [vmem:[%s6 + $0x10] sm:$0xff] %vm2357, %v2355
  %2361 = vst.msk [vmem:[%s6 + $0x18] sm:$0xff] %vm2357, %v2356
  %v2362 = vmul.f32 %v2341, 0.99
  %v2363 = vmul.f32 %v2342, 0.99
  %v2364 = vmul.f32 %v2343, 0.99
  %v2365 = vmul.f32 %v2344, 0.99
  %v2366 = vadd.f32 %v2362, %v2329
  %v2367 = vadd.f32 %v2363, %v2330
  %v2368 = vadd.f32 %v2364, %v2331
  %v2369 = vadd.f32 %v2365, %v2332
  %v2370 = vsub.f32 %v2366, %v2353
  %v2371 = vsub.f32 %v2367, %v2354
  %v2372 = vsub.f32 %v2368, %v2355
  %v2373 = vsub.f32 %v2369, %v2356
  %vm2374 = vcmp.gt.f32.partialorder %v2370, 1.0
  %vm2375 = vcmp.gt.f32.partialorder %v2371, 1.0
  %vm2376 = vcmp.gt.f32.partialorder %v2372, 1.0
  %vm2377 = vcmp.gt.f32.partialorder %v2373, 1.0
  %v2378 = vsel %vm2374, 1, 0
  %v2379 = vsel %vm2375, 1, 0
  %v2380 = vsel %vm2376, 1, 0
  %v2381 = vsel %vm2377, 1, 0
  %v2382 = vcvt.s32.f32 %v2378
  %v2383 = vcvt.s32.f32 %v2379
  %v2384 = vcvt.s32.f32 %v2380
  %v2385 = vcvt.s32.f32 %v2381
  %s2386 = scalar_lea.vmem %s6, 32
  %2387 = vst.msk [vmem:[%s2386] sm:$0xff] %vm2357, %v2382
  %2388 = vst.msk [vmem:[%s2386 + $0x8] sm:$0xff] %vm2357, %v2383
  %2389 = vst.msk [vmem:[%s2386 + $0x10] sm:$0xff] %vm2357, %v2384
  %2390 = vst.msk [vmem:[%s2386 + $0x18] sm:$0xff] %vm2357, %v2385
  %v2391 = vmul.f32 %v2370, 0.99
  %v2392 = vmul.f32 %v2371, 0.99
  %v2393 = vmul.f32 %v2372, 0.99
  %v2394 = vmul.f32 %v2373, 0.99
  %v2395 = vadd.f32 %v2391, %v2329
  %v2396 = vadd.f32 %v2392, %v2330
  %v2397 = vadd.f32 %v2393, %v2331
  %v2398 = vadd.f32 %v2394, %v2332
  %v2399 = vsub.f32 %v2395, %v2382
  %v2400 = vsub.f32 %v2396, %v2383
  %v2401 = vsub.f32 %v2397, %v2384
  %v2402 = vsub.f32 %v2398, %v2385
  %vm2403 = vcmp.gt.f32.partialorder %v2399, 1.0
  %vm2404 = vcmp.gt.f32.partialorder %v2400, 1.0
  %vm2405 = vcmp.gt.f32.partialorder %v2401, 1.0
  %vm2406 = vcmp.gt.f32.partialorder %v2402, 1.0
  %v2407 = vsel %vm2403, 1, 0
  %v2408 = vsel %vm2404, 1, 0
  %v2409 = vsel %vm2405, 1, 0
  %v2410 = vsel %vm2406, 1, 0
  %v2411 = vcvt.s32.f32 %v2407
  %v2412 = vcvt.s32.f32 %v2408
  %v2413 = vcvt.s32.f32 %v2409
  %v2414 = vcvt.s32.f32 %v2410
  %s2415 = scalar_lea.vmem %s6, 64
  %2416 = vst.msk [vmem:[%s2415] sm:$0xff] %vm2357, %v2411
  %2417 = vst.msk [vmem:[%s2415 + $0x8] sm:$0xff] %vm2357, %v2412
  %2418 = vst.msk [vmem:[%s2415 + $0x10] sm:$0xff] %vm2357, %v2413
  %2419 = vst.msk [vmem:[%s2415 + $0x18] sm:$0xff] %vm2357, %v2414
  %v2420 = vmul.f32 %v2399, 0.99
  %v2421 = vmul.f32 %v2400, 0.99
  %v2422 = vmul.f32 %v2401, 0.99
  %v2423 = vmul.f32 %v2402, 0.99
  %v2424 = vadd.f32 %v2420, %v2329
  %v2425 = vadd.f32 %v2421, %v2330
  %v2426 = vadd.f32 %v2422, %v2331
  %v2427 = vadd.f32 %v2423, %v2332
  %v2428 = vsub.f32 %v2424, %v2411
  %v2429 = vsub.f32 %v2425, %v2412
  %v2430 = vsub.f32 %v2426, %v2413
  %v2431 = vsub.f32 %v2427, %v2414
  %vm2432 = vcmp.gt.f32.partialorder %v2428, 1.0
  %vm2433 = vcmp.gt.f32.partialorder %v2429, 1.0
  %vm2434 = vcmp.gt.f32.partialorder %v2430, 1.0
  %vm2435 = vcmp.gt.f32.partialorder %v2431, 1.0
  %v2436 = vsel %vm2432, 1, 0
  %v2437 = vsel %vm2433, 1, 0
  %v2438 = vsel %vm2434, 1, 0
  %v2439 = vsel %vm2435, 1, 0
  %v2440 = vcvt.s32.f32 %v2436
  %v2441 = vcvt.s32.f32 %v2437
  %v2442 = vcvt.s32.f32 %v2438
  %v2443 = vcvt.s32.f32 %v2439
  %s2444 = scalar_lea.vmem %s6, 96
  %2445 = vst.msk [vmem:[%s2444] sm:$0xff] %vm2357, %v2440
  %2446 = vst.msk [vmem:[%s2444 + $0x8] sm:$0xff] %vm2357, %v2441
  %2447 = vst.msk [vmem:[%s2444 + $0x10] sm:$0xff] %vm2357, %v2442
  %2448 = vst.msk [vmem:[%s2444 + $0x18] sm:$0xff] %vm2357, %v2443
  // Predicated region
  $region26: #{itssnngru2d_forward.3} parent=0 // pred_check
    _
  $region27: #{itssnngru2d_forward.3} parent=0 // pred_check_branch
    %2450 = sbr.rel (0) target = $region29
  $region28: #{itssnngru2d_forward.3} parent=0 // pred_region
    _
  $region29: #{itssnngru2d_forward.3} parent=0 // pred_fallthru
    _
  // Predicated region
  $region30: #{itssnngru2d_forward.3} parent=0 // pred_check
    _
  $region31: #{itssnngru2d_forward.3} parent=0 // pred_check_branch
    %2452 = sbr.rel (0) target = $region33
  $region32: #{itssnngru2d_forward.3} parent=0 // pred_region
    _
  $region33: #{itssnngru2d_forward.3} parent=0 // pred_fallthru
    _

</llo_original>
